<compile_context>
chip_gen: v7x
topology: tpu7x:2x2x1
jax: 0.10.0
libtpu: 0.0.40
codegen_flags: <defaults>
</compile_context>

<pallas_src>
import functools
import numpy as np
import jax
import jax.numpy as jnp
from jax.experimental import pallas as pl
from jax.experimental.pallas import tpu as pltpu


# ----------------------------------------------------------------------------
# math helpers (shared by the Pallas kernel and the pure-JAX reference)
# ----------------------------------------------------------------------------
def _layernorm(x, gamma, beta, eps=1e-6):
    mu = jnp.mean(x, axis=-1, keepdims=True)
    var = jnp.mean((x - mu) ** 2, axis=-1, keepdims=True)
    return (x - mu) * jax.lax.rsqrt(var + eps) * gamma + beta


def _gru_gate_fused(x, y, wy, wx, wu, b, d_model):
    # wy = [Wr|Wz|Wg] (D, 3D) bf16, wx = [Ur|Uz] (D, 2D) bf16, wu = Ug (D, D) bf16
    # b  = [br+bur, bz+buz-bg, bwg+bug] (1, 3D) f32
    yw = jnp.dot(y.astype(jnp.bfloat16), wy, preferred_element_type=jnp.float32) + b
    xu = jnp.dot(x.astype(jnp.bfloat16), wx, preferred_element_type=jnp.float32)
    r = jax.nn.sigmoid(yw[:, :d_model] + xu[:, :d_model])
    z = jax.nn.sigmoid(yw[:, d_model:2 * d_model] + xu[:, d_model:])
    h = jnp.tanh(yw[:, 2 * d_model:] +
                 jnp.dot((r * x).astype(jnp.bfloat16), wu,
                         preferred_element_type=jnp.float32))
    return (1.0 - z) * x + z * h


# ----------------------------------------------------------------------------
# fused encoder-stack kernel: one grid-less call, static unrolled layer loop
# ----------------------------------------------------------------------------
def _encoder_stack_kernel(x_ref, pos_ref, ln_ref, wqkv_ref, wo_ref,
                          gwy_ref, gwx_ref, gwu_ref, gb_ref,
                          w1_ref, b1_ref, w2_ref, b2_ref,
                          *out_refs,
                          n_layers, n_head, d_k, d_v, save_attention):
    y_ref = out_refs[0]
    attn_ref = out_refs[1] if save_attention else None

    S, D = y_ref.shape
    HK = n_head * d_k
    HV = n_head * d_v
    bf = jnp.bfloat16

    # fused positional-encoding add
    x = x_ref[...] + pos_ref[...]                              # (S, D) f32

    for l in range(n_layers):                                  # static unroll
        ln = ln_ref[l]                                         # (4, D): g1,b1,g2,b2

        # ---- norm1 + fused QKV projection (one wide MXU matmul) --------------
        xn = _layernorm(x, ln[0:1], ln[1:2])
        qkv = jnp.dot(xn.astype(bf), wqkv_ref[l],
                      preferred_element_type=jnp.float32)      # (S, 2*HK + HV)

        # ---- per-head attention on 2-D lane slices (no 3-D relayouts) --------
        ctx_parts = []
        attn_parts = []
        for h in range(n_head):
            qh = qkv[:, h * d_k:(h + 1) * d_k].astype(bf)           # (S, d_k)
            kh = qkv[:, HK + h * d_k:HK + (h + 1) * d_k].astype(bf)  # (S, d_k)
            vh = qkv[:, 2 * HK + h * d_v:2 * HK + (h + 1) * d_v].astype(bf)
            # q @ k^T without an explicit transpose (contract last dims).
            s = jax.lax.dot_general(qh, kh, (((1,), (1,)), ((), ())),
                                    preferred_element_type=jnp.float32)  # (S, S)
            s = s - jnp.max(s, axis=-1, keepdims=True)
            e = jnp.exp(s)
            a = e * pl.reciprocal(jnp.sum(e, axis=-1, keepdims=True),
                                  approx=True)                  # EUP vrcp slot
            attn_parts.append(a)
            ctx_parts.append(jnp.dot(a.astype(bf), vh,
                                     preferred_element_type=jnp.float32))

        if save_attention:
            # lane-dense store: heads folded into the last dim -> (S, n_head*S)
            attn_ref[l] = jnp.concatenate(attn_parts, axis=-1)

        ctx = jnp.concatenate(ctx_parts, axis=-1)               # (S, HV)
        attn_out = jnp.dot(ctx.astype(bf), wo_ref[l],
                           preferred_element_type=jnp.float32)  # (S, D), depth HV

        # ---- gate1 (GRU-style residual) --------------------------------------
        enc1 = _gru_gate_fused(x, attn_out, gwy_ref[l, 0], gwx_ref[l, 0],
                               gwu_ref[l, 0], gb_ref[l, 0], D)

        # ---- norm2 + position-wise FFN ----------------------------------------
        xn2 = _layernorm(enc1, ln[2:3], ln[3:4])
        hid = jnp.maximum(
            jnp.dot(xn2.astype(bf), w1_ref[l],
                    preferred_element_type=jnp.float32) + b1_ref[l], 0.0)
        ff = jnp.dot(hid.astype(bf), w2_ref[l],
                     preferred_element_type=jnp.float32) + b2_ref[l]

        # ---- gate2 -> next-layer activation ------------------------------------
        x = _gru_gate_fused(enc1, ff, gwy_ref[l, 1], gwx_ref[l, 1],
                            gwu_ref[l, 1], gb_ref[l, 1], D)

    y_ref[...] = x                                              # single output store


def _make_encoder_fn(S, d_model, d_hidden, n_layers, n_head, d_k, d_v,
                     save_attention):
    D = d_model
    kernel = functools.partial(_encoder_stack_kernel, n_layers=n_layers,
                               n_head=n_head, d_k=d_k, d_v=d_v,
                               save_attention=save_attention)

    vspec = pl.BlockSpec(memory_space=pltpu.MemorySpace.VMEM)   # whole array in VMEM

    if save_attention:
        out_shape = (jax.ShapeDtypeStruct((S, D), jnp.float32),
                     jax.ShapeDtypeStruct((n_layers, S, n_head * S), jnp.float32))
        out_specs = (vspec, vspec)
    else:
        out_shape = jax.ShapeDtypeStruct((S, D), jnp.float32)
        out_specs = vspec

    call = pl.pallas_call(
        kernel,
        out_shape=out_shape,
        in_specs=[vspec] * 13,
        out_specs=out_specs,
        # grid-less: the whole (tiny) stacked weight set (~50 KB) is resident
        # in VMEM for the call; no per-layer grid-step / DMA overhead.
    )

    def fwd(x2d, pos, pk):
        return call(x2d, pos, pk["ln"], pk["wqkv"], pk["wo"],
                    pk["gwy"], pk["gwx"], pk["gwu"], pk["gb"],
                    pk["w1"], pk["b1"], pk["w2"], pk["b2"])

    return jax.jit(fwd)


# ----------------------------------------------------------------------------
# parameter construction (deterministic, synthetic) and wrapper-side packing
# ----------------------------------------------------------------------------
def sinusoid_table(n_position, d_hid):
    pos = np.arange(n_position)[:, None].astype(np.float64)
    hid = np.arange(d_hid)[None, :]
    angle = pos / np.power(10000.0, 2 * (hid // 2) / d_hid)
    table = np.zeros_like(angle)
    table[:, 0::2] = np.sin(angle[:, 0::2])
    table[:, 1::2] = np.cos(angle[:, 1::2])
    return jnp.asarray(table, dtype=jnp.float32)


def init_params(key, d_model, d_hidden, n_layers, n_head, d_k, d_v):
    def dense(k, shape, scale=0.05):
        return scale * jax.random.normal(k, shape, dtype=jnp.float32)

    layers = []
    for l in range(n_layers):
        ks = jax.random.split(jax.random.fold_in(key, l), 16)
        ln = jnp.stack([1.0 + dense(ks[12], (d_model,), 0.1),
                        dense(ks[13], (d_model,), 0.1),
                        1.0 + dense(ks[14], (d_model,), 0.1),
                        dense(ks[15], (d_model,), 0.1)])
        layers.append(dict(
            ln=ln,
            wq=dense(ks[0], (d_model, n_head * d_k)),
            wk=dense(ks[1], (d_model, n_head * d_k)),
            wv=dense(ks[2], (d_model, n_head * d_v)),
            wo=dense(ks[3], (n_head * d_v, d_model)),
            g1w=dense(ks[4], (6, d_model, d_model)),   # [Wr, Ur, Wz, Uz, Wg, Ug]
            g1b=jnp.concatenate([dense(ks[5], (6, d_model), 0.01),
                                 jnp.full((1, d_model), 2.0, jnp.float32)], 0),
            w1=dense(ks[6], (d_model, d_hidden)),
            b1=dense(ks[7], (1, d_hidden), 0.01),
            w2=dense(ks[8], (d_hidden, d_model)),
            b2=dense(ks[9], (1, d_model), 0.01),
            g2w=dense(ks[10], (6, d_model, d_model)),
            g2b=jnp.concatenate([dense(ks[11], (6, d_model), 0.01),
                                 jnp.full((1, d_model), 2.0, jnp.float32)], 0),
        ))
    return layers


def pack_params(layers, n_head, d_k, d_v):
    """Stack per-layer weights on a leading layer axis; fuse QKV; merge the two
    GRU gates on a gate axis; fold 1/sqrt(d_k) into Wq; cast matmul weights to
    bf16 (biases / LayerNorm params stay f32)."""
    inv_temp = 1.0 / float(d_k) ** 0.5
    bf = lambda t: t.astype(jnp.bfloat16)
    stack = lambda f: jnp.stack([f(p) for p in layers], axis=0)

    def gate_wy(p, k):   # [Wr | Wz | Wg]  (D, 3D)
        w = p[k]
        return jnp.concatenate([w[0], w[2], w[4]], axis=1)

    def gate_wx(p, k):   # [Ur | Uz]       (D, 2D)
        w = p[k]
        return jnp.concatenate([w[1], w[3]], axis=1)

    def gate_b(p, k):    # [br+bur, bz+buz-bg, bwg+bug]  (1, 3D)
        b = p[k]
        return jnp.concatenate([b[0] + b[1], b[2] + b[3] - b[6], b[4] + b[5]],
                               axis=0)[None, :]

    return dict(
        ln=stack(lambda p: p["ln"]),                                    # (L,4,D) f32
        wqkv=bf(stack(lambda p: jnp.concatenate(
            [p["wq"] * inv_temp, p["wk"], p["wv"]], axis=1))),          # (L,D,2HK+HV)
        wo=bf(stack(lambda p: p["wo"])),                                # (L,HV,D)
        gwy=bf(stack(lambda p: jnp.stack(
            [gate_wy(p, "g1w"), gate_wy(p, "g2w")], 0))),               # (L,2,D,3D)
        gwx=bf(stack(lambda p: jnp.stack(
            [gate_wx(p, "g1w"), gate_wx(p, "g2w")], 0))),               # (L,2,D,2D)
        gwu=bf(stack(lambda p: jnp.stack(
            [p["g1w"][5], p["g2w"][5]], 0))),                           # (L,2,D,D)
        gb=stack(lambda p: jnp.stack(
            [gate_b(p, "g1b"), gate_b(p, "g2b")], 0)),                  # (L,2,1,3D) f32
        w1=bf(stack(lambda p: p["w1"])), b1=stack(lambda p: p["b1"]),
        w2=bf(stack(lambda p: p["w2"])), b2=stack(lambda p: p["b2"]),
    )


# ----------------------------------------------------------------------------
# CommunicationBlock wrapper
# ----------------------------------------------------------------------------
class CommunicationBlockPallas:
    def __init__(self, d_model, d_hidden, n_layers, n_head, d_k, d_v,
                 n_position=1024, save_attention=False, key=None):
        self.cfg = (d_model, d_hidden, n_layers, n_head, d_k, d_v)
        self.save_attention = save_attention
        self.pos_table = sinusoid_table(n_position, d_model)
        self.layer_params = init_params(key, d_model, d_hidden, n_layers,
                                        n_head, d_k, d_v)
        self.packed = pack_params(self.layer_params, n_head, d_k, d_v)
        self.saved_attention = []
        self._fwd_cache = {}

    def _fwd(self, S):
        if S not in self._fwd_cache:
            d_model, d_hidden, n_layers, n_head, d_k, d_v = self.cfg
            self._fwd_cache[S] = _make_encoder_fn(
                S, d_model, d_hidden, n_layers, n_head, d_k, d_v,
                self.save_attention)
        return self._fwd_cache[S]

    def __call__(self, message):                  # message: (B, D)
        B, _ = message.shape
        fwd = self._fwd(B)
        if self.save_attention:
            # Note: the PyTorch module copies attention to host unconditionally;
            # per the perf review that blocking sync is gated on save_attention.
            y, attn = fwd(message, self.pos_table[:B], self.packed)
            n_layers, n_head = self.cfg[2], self.cfg[3]
            a = (np.asarray(attn).reshape(n_layers, B, n_head, B)
                 .transpose(0, 2, 1, 3))                     # (L, H, B, B)
            self.saved_attention = a[:, None]                # (L, 1, H, B, B)
            return y
        # fast path: no attention writeback, no host sync
        return fwd(message, self.pos_table[:B], self.packed)


# ----------------------------------------------------------------------------
# pure-JAX reference (same bf16-operand / f32-accumulate convention)
# ----------------------------------------------------------------------------
def ref_forward(message, pos_table, layer_params, n_head, d_k, d_v):
    S, D = message.shape
    bf = lambda t: t.astype(jnp.bfloat16)
    bdot = lambda a, b: jnp.dot(bf(a), bf(b), preferred_element_type=jnp.float32)
    inv_temp = 1.0 / float(d_k) ** 0.5

    def gate(x, y, w, b):
        r = jax.nn.sigmoid(bdot(y, w[0]) + b[0] + bdot(x, w[1]) + b[1])
        z = jax.nn.sigmoid(bdot(y, w[2]) + b[2] + bdot(x, w[3]) + b[3] - b[6])
        h = jnp.tanh(bdot(y, w[4]) + b[4] + bdot(r * x, w[5]) + b[5])
        return (1.0 - z) * x + z * h

    x = message + pos_table[:S]
    attns = []
    for p in layer_params:
        xn = _layernorm(x, p["ln"][0:1], p["ln"][1:2])
        q = bdot(xn, p["wq"] * inv_temp).reshape(S, n_head, d_k).transpose(1, 0, 2)
        k = bdot(xn, p["wk"]).reshape(S, n_head, d_k).transpose(1, 0, 2)
        v = bdot(xn, p["wv"]).reshape(S, n_head, d_v).transpose(1, 0, 2)
        s = jnp.einsum("hqd,hkd->hqk", bf(q), bf(k),
                       preferred_element_type=jnp.float32)
        a = jax.nn.softmax(s, axis=-1)
        o = jnp.einsum("hqk,hkd->hqd", bf(a), bf(v),
                       preferred_element_type=jnp.float32)
        o = bdot(o.transpose(1, 0, 2).reshape(S, n_head * d_v), p["wo"])
        enc1 = gate(x, o, p["g1w"], p["g1b"])
        xn2 = _layernorm(enc1, p["ln"][2:3], p["ln"][3:4])
        ff = bdot(jnp.maximum(bdot(xn2, p["w1"]) + p["b1"], 0.0),
                  p["w2"]) + p["b2"]
        x = gate(enc1, ff, p["g2w"], p["g2b"])
        attns.append(a)
    return x, jnp.stack(attns)


# ----------------------------------------------------------------------------
if __name__ == "__main__":
    # AP-style small config: message_feature_dim=32, ff_dim=64, 2 layers, 4 heads
    d_model, d_hidden = 32, 64
    n_layers, n_head, d_k, d_v = 2, 4, 8, 8
    n_position = 1024
    B = 8                                      # number of agent messages (seq len)

    msg = jax.random.normal(jax.random.PRNGKey(0), (B, d_model), dtype=jnp.float32)

    # save_attention=True path (stores lane-dense attention + mirrors the
    # PyTorch module's host-side saved_attention attribute)
    block = CommunicationBlockPallas(d_model, d_hidden, n_layers, n_head, d_k, d_v,
                                     n_position=n_position, save_attention=True,
                                     key=jax.random.PRNGKey(42))
    out = jax.block_until_ready(block(msg))

    # save_attention=False fast path: no attention writeback / host sync.
    block_fast = CommunicationBlockPallas(d_model, d_hidden, n_layers, n_head,
                                          d_k, d_v, n_position=n_position,
                                          save_attention=False,
                                          key=jax.random.PRNGKey(42))
    out_fast = jax.block_until_ready(block_fast(msg))

    ref_out, ref_attn = ref_forward(msg, block.pos_table, block.layer_params,
                                    n_head, d_k, d_v)

    # Tolerance 2e-3: bf16 MXU operands + approx (EUP) softmax reciprocal.
    np.testing.assert_allclose(np.asarray(out), np.asarray(ref_out),
                               rtol=2e-3, atol=2e-3)
    np.testing.assert_allclose(np.asarray(out_fast), np.asarray(ref_out),
                               rtol=2e-3, atol=2e-3)
    np.testing.assert_allclose(block.saved_attention[:, 0], np.asarray(ref_attn),
                               rtol=2e-3, atol=2e-3)
    assert out.shape == (B, d_model)
    assert out_fast.shape == (B, d_model)
    assert np.all(np.isfinite(np.asarray(out)))
    print("KERNEL_OK")
</pallas_src>

<mosaic_0001>
module attributes {stable_mosaic.version = 11 : i64} {
  func.func @_encoder_stack_kernel(%arg0: memref<8x32xf32, #tpu.memory_space<vmem>>, %arg1: memref<8x32xf32, #tpu.memory_space<vmem>>, %arg2: memref<2x4x32xf32, #tpu.memory_space<vmem>>, %arg3: memref<2x32x96xbf16, #tpu.memory_space<vmem>>, %arg4: memref<2x32x32xbf16, #tpu.memory_space<vmem>>, %arg5: memref<2x2x32x96xbf16, #tpu.memory_space<vmem>>, %arg6: memref<2x2x32x64xbf16, #tpu.memory_space<vmem>>, %arg7: memref<2x2x32x32xbf16, #tpu.memory_space<vmem>>, %arg8: memref<2x2x1x96xf32, #tpu.memory_space<vmem>>, %arg9: memref<2x32x64xbf16, #tpu.memory_space<vmem>>, %arg10: memref<2x1x64xf32, #tpu.memory_space<vmem>>, %arg11: memref<2x64x32xbf16, #tpu.memory_space<vmem>>, %arg12: memref<2x1x32xf32, #tpu.memory_space<vmem>>, %arg13: memref<8x32xf32, #tpu.memory_space<vmem>>, %arg14: memref<2x8x32xf32, #tpu.memory_space<vmem>>) attributes {dimension_semantics = [], scalar_prefetch = 0 : i64, scratch_operands = 0 : i64, tpu.core_type = #tpu.core_type<tc>} {
    %c0 = arith.constant 0 : index
    %c0_0 = arith.constant 0 : index
    %0 = vector.load %arg0[%c0, %c0_0] : memref<8x32xf32, #tpu.memory_space<vmem>>, vector<8x32xf32>
    %c0_1 = arith.constant 0 : index
    %c0_2 = arith.constant 0 : index
    %1 = vector.load %arg1[%c0_1, %c0_2] : memref<8x32xf32, #tpu.memory_space<vmem>>, vector<8x32xf32>
    %2 = arith.addf %0, %1 : vector<8x32xf32>
    %c0_3 = arith.constant 0 : index
    %c0_4 = arith.constant 0 : index
    %c0_5 = arith.constant 0 : index
    %3 = vector.load %arg2[%c0_3, %c0_4, %c0_5] : memref<2x4x32xf32, #tpu.memory_space<vmem>>, vector<1x4x32xf32>
    %4 = vector.shape_cast %3 : vector<1x4x32xf32> to vector<4x32xf32>
    %5 = vector.extract_strided_slice %4 {offsets = [0, 0], sizes = [1, 32], strides = [1, 1]} : vector<4x32xf32> to vector<1x32xf32>
    %6 = vector.extract_strided_slice %4 {offsets = [1, 0], sizes = [1, 32], strides = [1, 1]} : vector<4x32xf32> to vector<1x32xf32>
    %cst = arith.constant dense<0.000000e+00> : vector<8xf32>
    %7 = vector.multi_reduction <add>, %2, %cst [1] : vector<8x32xf32> to vector<8xf32>
    %8 = vector.shape_cast %7 : vector<8xf32> to vector<8x1xf32>
    %cst_6 = arith.constant 3.200000e+01 : f32
    %9 = vector.broadcast %cst_6 : f32 to vector<8x1xf32>
    %10 = arith.divf %8, %9 : vector<8x1xf32>
    %11 = vector.broadcast %10 : vector<8x1xf32> to vector<8x32xf32>
    %12 = arith.subf %2, %11 : vector<8x32xf32>
    %13 = arith.mulf %12, %12 : vector<8x32xf32>
    %cst_7 = arith.constant dense<0.000000e+00> : vector<8xf32>
    %14 = vector.multi_reduction <add>, %13, %cst_7 [1] : vector<8x32xf32> to vector<8xf32>
    %15 = vector.shape_cast %14 : vector<8xf32> to vector<8x1xf32>
    %cst_8 = arith.constant 3.200000e+01 : f32
    %16 = vector.broadcast %cst_8 : f32 to vector<8x1xf32>
    %17 = arith.divf %15, %16 : vector<8x1xf32>
    %18 = vector.broadcast %10 : vector<8x1xf32> to vector<8x32xf32>
    %19 = arith.subf %2, %18 : vector<8x32xf32>
    %cst_9 = arith.constant 9.99999997E-7 : f32
    %20 = vector.broadcast %cst_9 : f32 to vector<8x1xf32>
    %21 = arith.addf %17, %20 : vector<8x1xf32>
    %22 = math.rsqrt %21 : vector<8x1xf32>
    %23 = vector.broadcast %22 : vector<8x1xf32> to vector<8x32xf32>
    %24 = arith.mulf %19, %23 : vector<8x32xf32>
    %25 = vector.broadcast %5 : vector<1x32xf32> to vector<8x32xf32>
    %26 = arith.mulf %24, %25 : vector<8x32xf32>
    %27 = vector.broadcast %6 : vector<1x32xf32> to vector<8x32xf32>
    %28 = arith.addf %26, %27 : vector<8x32xf32>
    %29 = arith.truncf %28 : vector<8x32xf32> to vector<8x32xbf16>
    %c0_10 = arith.constant 0 : index
    %c0_11 = arith.constant 0 : index
    %c0_12 = arith.constant 0 : index
    %30 = vector.load %arg3[%c0_10, %c0_11, %c0_12] : memref<2x32x96xbf16, #tpu.memory_space<vmem>>, vector<1x32x96xbf16>
    %31 = vector.shape_cast %30 : vector<1x32x96xbf16> to vector<32x96xbf16>
    %cst_13 = arith.constant dense<0.000000e+00> : vector<8x96xf32>
    %32 = tpu.matmul %29, %31, %cst_13 {dimension_numbers = #tpu.dot_dimension_numbers<[1], [0], [0], [1], [0, 0, 1, 1], [], []>} : vector<8x32xbf16>, vector<32x96xbf16>, vector<8x96xf32> -> vector<8x96xf32>
    %33 = vector.extract_strided_slice %32 {offsets = [0, 0], sizes = [8, 8], strides = [1, 1]} : vector<8x96xf32> to vector<8x8xf32>
    %34 = arith.truncf %33 : vector<8x8xf32> to vector<8x8xbf16>
    %35 = vector.extract_strided_slice %32 {offsets = [0, 32], sizes = [8, 8], strides = [1, 1]} : vector<8x96xf32> to vector<8x8xf32>
    %36 = arith.truncf %35 : vector<8x8xf32> to vector<8x8xbf16>
    %37 = vector.extract_strided_slice %32 {offsets = [0, 64], sizes = [8, 8], strides = [1, 1]} : vector<8x96xf32> to vector<8x8xf32>
    %38 = arith.truncf %37 : vector<8x8xf32> to vector<8x8xbf16>
    %cst_14 = arith.constant dense<0.000000e+00> : vector<8x8xf32>
    %39 = tpu.matmul %34, %36, %cst_14 {dimension_numbers = #tpu.dot_dimension_numbers<[1], [1], [0], [0], [0, 0, 1, 0], [], []>} : vector<8x8xbf16>, vector<8x8xbf16>, vector<8x8xf32> -> vector<8x8xf32>
    %cst_15 = arith.constant dense<0xFF800000> : vector<8xf32>
    %40 = vector.multi_reduction <maximumf>, %39, %cst_15 [1] : vector<8x8xf32> to vector<8xf32>
    %41 = vector.shape_cast %40 : vector<8xf32> to vector<8x1xf32>
    %42 = vector.broadcast %41 : vector<8x1xf32> to vector<8x8xf32>
    %43 = arith.subf %39, %42 : vector<8x8xf32>
    %44 = math.exp %43 : vector<8x8xf32>
    %cst_16 = arith.constant dense<0.000000e+00> : vector<8xf32>
    %45 = vector.multi_reduction <add>, %44, %cst_16 [1] : vector<8x8xf32> to vector<8xf32>
    %46 = vector.shape_cast %45 : vector<8xf32> to vector<8x1xf32>
    %47 = tpu.reciprocal %46 {approx = true} : vector<8x1xf32> -> vector<8x1xf32>
    %48 = vector.broadcast %47 : vector<8x1xf32> to vector<8x8xf32>
    %49 = arith.mulf %44, %48 : vector<8x8xf32>
    %50 = arith.truncf %49 : vector<8x8xf32> to vector<8x8xbf16>
    %cst_17 = arith.constant dense<0.000000e+00> : vector<8x8xf32>
    %51 = tpu.matmul %50, %38, %cst_17 {dimension_numbers = #tpu.dot_dimension_numbers<[1], [0], [0], [1], [0, 0, 1, 1], [], []>} : vector<8x8xbf16>, vector<8x8xbf16>, vector<8x8xf32> -> vector<8x8xf32>
    %52 = vector.extract_strided_slice %32 {offsets = [0, 8], sizes = [8, 8], strides = [1, 1]} : vector<8x96xf32> to vector<8x8xf32>
    %53 = arith.truncf %52 : vector<8x8xf32> to vector<8x8xbf16>
    %54 = vector.extract_strided_slice %32 {offsets = [0, 40], sizes = [8, 8], strides = [1, 1]} : vector<8x96xf32> to vector<8x8xf32>
    %55 = arith.truncf %54 : vector<8x8xf32> to vector<8x8xbf16>
    %56 = vector.extract_strided_slice %32 {offsets = [0, 72], sizes = [8, 8], strides = [1, 1]} : vector<8x96xf32> to vector<8x8xf32>
    %57 = arith.truncf %56 : vector<8x8xf32> to vector<8x8xbf16>
    %cst_18 = arith.constant dense<0.000000e+00> : vector<8x8xf32>
    %58 = tpu.matmul %53, %55, %cst_18 {dimension_numbers = #tpu.dot_dimension_numbers<[1], [1], [0], [0], [0, 0, 1, 0], [], []>} : vector<8x8xbf16>, vector<8x8xbf16>, vector<8x8xf32> -> vector<8x8xf32>
    %cst_19 = arith.constant dense<0xFF800000> : vector<8xf32>
    %59 = vector.multi_reduction <maximumf>, %58, %cst_19 [1] : vector<8x8xf32> to vector<8xf32>
    %60 = vector.shape_cast %59 : vector<8xf32> to vector<8x1xf32>
    %61 = vector.broadcast %60 : vector<8x1xf32> to vector<8x8xf32>
    %62 = arith.subf %58, %61 : vector<8x8xf32>
    %63 = math.exp %62 : vector<8x8xf32>
    %cst_20 = arith.constant dense<0.000000e+00> : vector<8xf32>
    %64 = vector.multi_reduction <add>, %63, %cst_20 [1] : vector<8x8xf32> to vector<8xf32>
    %65 = vector.shape_cast %64 : vector<8xf32> to vector<8x1xf32>
    %66 = tpu.reciprocal %65 {approx = true} : vector<8x1xf32> -> vector<8x1xf32>
    %67 = vector.broadcast %66 : vector<8x1xf32> to vector<8x8xf32>
    %68 = arith.mulf %63, %67 : vector<8x8xf32>
    %69 = arith.truncf %68 : vector<8x8xf32> to vector<8x8xbf16>
    %cst_21 = arith.constant dense<0.000000e+00> : vector<8x8xf32>
    %70 = tpu.matmul %69, %57, %cst_21 {dimension_numbers = #tpu.dot_dimension_numbers<[1], [0], [0], [1], [0, 0, 1, 1], [], []>} : vector<8x8xbf16>, vector<8x8xbf16>, vector<8x8xf32> -> vector<8x8xf32>
    %71 = vector.extract_strided_slice %32 {offsets = [0, 16], sizes = [8, 8], strides = [1, 1]} : vector<8x96xf32> to vector<8x8xf32>
    %72 = arith.truncf %71 : vector<8x8xf32> to vector<8x8xbf16>
    %73 = vector.extract_strided_slice %32 {offsets = [0, 48], sizes = [8, 8], strides = [1, 1]} : vector<8x96xf32> to vector<8x8xf32>
    %74 = arith.truncf %73 : vector<8x8xf32> to vector<8x8xbf16>
    %75 = vector.extract_strided_slice %32 {offsets = [0, 80], sizes = [8, 8], strides = [1, 1]} : vector<8x96xf32> to vector<8x8xf32>
    %76 = arith.truncf %75 : vector<8x8xf32> to vector<8x8xbf16>
    %cst_22 = arith.constant dense<0.000000e+00> : vector<8x8xf32>
    %77 = tpu.matmul %72, %74, %cst_22 {dimension_numbers = #tpu.dot_dimension_numbers<[1], [1], [0], [0], [0, 0, 1, 0], [], []>} : vector<8x8xbf16>, vector<8x8xbf16>, vector<8x8xf32> -> vector<8x8xf32>
    %cst_23 = arith.constant dense<0xFF800000> : vector<8xf32>
    %78 = vector.multi_reduction <maximumf>, %77, %cst_23 [1] : vector<8x8xf32> to vector<8xf32>
    %79 = vector.shape_cast %78 : vector<8xf32> to vector<8x1xf32>
    %80 = vector.broadcast %79 : vector<8x1xf32> to vector<8x8xf32>
    %81 = arith.subf %77, %80 : vector<8x8xf32>
    %82 = math.exp %81 : vector<8x8xf32>
    %cst_24 = arith.constant dense<0.000000e+00> : vector<8xf32>
    %83 = vector.multi_reduction <add>, %82, %cst_24 [1] : vector<8x8xf32> to vector<8xf32>
    %84 = vector.shape_cast %83 : vector<8xf32> to vector<8x1xf32>
    %85 = tpu.reciprocal %84 {approx = true} : vector<8x1xf32> -> vector<8x1xf32>
    %86 = vector.broadcast %85 : vector<8x1xf32> to vector<8x8xf32>
    %87 = arith.mulf %82, %86 : vector<8x8xf32>
    %88 = arith.truncf %87 : vector<8x8xf32> to vector<8x8xbf16>
    %cst_25 = arith.constant dense<0.000000e+00> : vector<8x8xf32>
    %89 = tpu.matmul %88, %76, %cst_25 {dimension_numbers = #tpu.dot_dimension_numbers<[1], [0], [0], [1], [0, 0, 1, 1], [], []>} : vector<8x8xbf16>, vector<8x8xbf16>, vector<8x8xf32> -> vector<8x8xf32>
    %90 = vector.extract_strided_slice %32 {offsets = [0, 24], sizes = [8, 8], strides = [1, 1]} : vector<8x96xf32> to vector<8x8xf32>
    %91 = arith.truncf %90 : vector<8x8xf32> to vector<8x8xbf16>
    %92 = vector.extract_strided_slice %32 {offsets = [0, 56], sizes = [8, 8], strides = [1, 1]} : vector<8x96xf32> to vector<8x8xf32>
    %93 = arith.truncf %92 : vector<8x8xf32> to vector<8x8xbf16>
    %94 = vector.extract_strided_slice %32 {offsets = [0, 88], sizes = [8, 8], strides = [1, 1]} : vector<8x96xf32> to vector<8x8xf32>
    %95 = arith.truncf %94 : vector<8x8xf32> to vector<8x8xbf16>
    %cst_26 = arith.constant dense<0.000000e+00> : vector<8x8xf32>
    %96 = tpu.matmul %91, %93, %cst_26 {dimension_numbers = #tpu.dot_dimension_numbers<[1], [1], [0], [0], [0, 0, 1, 0], [], []>} : vector<8x8xbf16>, vector<8x8xbf16>, vector<8x8xf32> -> vector<8x8xf32>
    %cst_27 = arith.constant dense<0xFF800000> : vector<8xf32>
    %97 = vector.multi_reduction <maximumf>, %96, %cst_27 [1] : vector<8x8xf32> to vector<8xf32>
    %98 = vector.shape_cast %97 : vector<8xf32> to vector<8x1xf32>
    %99 = vector.broadcast %98 : vector<8x1xf32> to vector<8x8xf32>
    %100 = arith.subf %96, %99 : vector<8x8xf32>
    %101 = math.exp %100 : vector<8x8xf32>
    %cst_28 = arith.constant dense<0.000000e+00> : vector<8xf32>
    %102 = vector.multi_reduction <add>, %101, %cst_28 [1] : vector<8x8xf32> to vector<8xf32>
    %103 = vector.shape_cast %102 : vector<8xf32> to vector<8x1xf32>
    %104 = tpu.reciprocal %103 {approx = true} : vector<8x1xf32> -> vector<8x1xf32>
    %105 = vector.broadcast %104 : vector<8x1xf32> to vector<8x8xf32>
    %106 = arith.mulf %101, %105 : vector<8x8xf32>
    %107 = arith.truncf %106 : vector<8x8xf32> to vector<8x8xbf16>
    %cst_29 = arith.constant dense<0.000000e+00> : vector<8x8xf32>
    %108 = tpu.matmul %107, %95, %cst_29 {dimension_numbers = #tpu.dot_dimension_numbers<[1], [0], [0], [1], [0, 0, 1, 1], [], []>} : vector<8x8xbf16>, vector<8x8xbf16>, vector<8x8xf32> -> vector<8x8xf32>
    %109 = tpu.concatenate %49, %68, %87, %106 in 1 : vector<8x8xf32>, vector<8x8xf32>, vector<8x8xf32>, vector<8x8xf32> -> vector<8x32xf32>
    %c0_30 = arith.constant 0 : index
    %c0_31 = arith.constant 0 : index
    %c0_32 = arith.constant 0 : index
    %110 = vector.load %arg14[%c0_30, %c0_31, %c0_32] : memref<2x8x32xf32, #tpu.memory_space<vmem>>, vector<1x8x32xf32>
    %111 = vector.shape_cast %110 : vector<1x8x32xf32> to vector<8x32xf32>
    %112 = vector.shape_cast %109 : vector<8x32xf32> to vector<1x8x32xf32>
    tpu.vector_store %arg14[%c0_30, %c0_31, %c0_32], %112 {strides = array<i32>} : memref<2x8x32xf32, #tpu.memory_space<vmem>>, vector<1x8x32xf32>,
    %113 = tpu.concatenate %51, %70, %89, %108 in 1 : vector<8x8xf32>, vector<8x8xf32>, vector<8x8xf32>, vector<8x8xf32> -> vector<8x32xf32>
    %114 = arith.truncf %113 : vector<8x32xf32> to vector<8x32xbf16>
    %c0_33 = arith.constant 0 : index
    %c0_34 = arith.constant 0 : index
    %c0_35 = arith.constant 0 : index
    %115 = vector.load %arg4[%c0_33, %c0_34, %c0_35] : memref<2x32x32xbf16, #tpu.memory_space<vmem>>, vector<1x32x32xbf16>
    %116 = vector.shape_cast %115 : vector<1x32x32xbf16> to vector<32x32xbf16>
    %cst_36 = arith.constant dense<0.000000e+00> : vector<8x32xf32>
    %117 = tpu.matmul %114, %116, %cst_36 {dimension_numbers = #tpu.dot_dimension_numbers<[1], [0], [0], [1], [0, 0, 1, 1], [], []>} : vector<8x32xbf16>, vector<32x32xbf16>, vector<8x32xf32> -> vector<8x32xf32>
    %c0_37 = arith.constant 0 : index
    %c0_38 = arith.constant 0 : index
    %c0_39 = arith.constant 0 : index
    %c0_40 = arith.constant 0 : index
    %118 = vector.load %arg5[%c0_37, %c0_38, %c0_39, %c0_40] : memref<2x2x32x96xbf16, #tpu.memory_space<vmem>>, vector<1x1x32x96xbf16>
    %119 = vector.shape_cast %118 : vector<1x1x32x96xbf16> to vector<32x96xbf16>
    %c0_41 = arith.constant 0 : index
    %c0_42 = arith.constant 0 : index
    %c0_43 = arith.constant 0 : index
    %c0_44 = arith.constant 0 : index
    %120 = vector.load %arg6[%c0_41, %c0_42, %c0_43, %c0_44] : memref<2x2x32x64xbf16, #tpu.memory_space<vmem>>, vector<1x1x32x64xbf16>
    %121 = vector.shape_cast %120 : vector<1x1x32x64xbf16> to vector<32x64xbf16>
    %c0_45 = arith.constant 0 : index
    %c0_46 = arith.constant 0 : index
    %c0_47 = arith.constant 0 : index
    %c0_48 = arith.constant 0 : index
    %122 = vector.load %arg7[%c0_45, %c0_46, %c0_47, %c0_48] : memref<2x2x32x32xbf16, #tpu.memory_space<vmem>>, vector<1x1x32x32xbf16>
    %123 = vector.shape_cast %122 : vector<1x1x32x32xbf16> to vector<32x32xbf16>
    %c0_49 = arith.constant 0 : index
    %c0_50 = arith.constant 0 : index
    %c0_51 = arith.constant 0 : index
    %c0_52 = arith.constant 0 : index
    %124 = vector.load %arg8[%c0_49, %c0_50, %c0_51, %c0_52] : memref<2x2x1x96xf32, #tpu.memory_space<vmem>>, vector<1x1x1x96xf32>
    %125 = vector.shape_cast %124 : vector<1x1x1x96xf32> to vector<1x96xf32>
    %126 = arith.truncf %117 : vector<8x32xf32> to vector<8x32xbf16>
    %cst_53 = arith.constant dense<0.000000e+00> : vector<8x96xf32>
    %127 = tpu.matmul %126, %119, %cst_53 {dimension_numbers = #tpu.dot_dimension_numbers<[1], [0], [0], [1], [0, 0, 1, 1], [], []>} : vector<8x32xbf16>, vector<32x96xbf16>, vector<8x96xf32> -> vector<8x96xf32>
    %128 = vector.broadcast %125 : vector<1x96xf32> to vector<8x96xf32>
    %129 = arith.addf %127, %128 : vector<8x96xf32>
    %130 = arith.truncf %2 : vector<8x32xf32> to vector<8x32xbf16>
    %cst_54 = arith.constant dense<0.000000e+00> : vector<8x64xf32>
    %131 = tpu.matmul %130, %121, %cst_54 {dimension_numbers = #tpu.dot_dimension_numbers<[1], [0], [0], [1], [0, 0, 1, 1], [], []>} : vector<8x32xbf16>, vector<32x64xbf16>, vector<8x64xf32> -> vector<8x64xf32>
    %132 = vector.extract_strided_slice %129 {offsets = [0, 0], sizes = [8, 32], strides = [1, 1]} : vector<8x96xf32> to vector<8x32xf32>
    %133 = vector.extract_strided_slice %131 {offsets = [0, 0], sizes = [8, 32], strides = [1, 1]} : vector<8x64xf32> to vector<8x32xf32>
    %134 = arith.addf %132, %133 : vector<8x32xf32>
    %135 = arith.negf %134 : vector<8x32xf32>
    %136 = math.exp %135 : vector<8x32xf32>
    %cst_55 = arith.constant 1.000000e+00 : f32
    %137 = vector.broadcast %cst_55 : f32 to vector<8x32xf32>
    %138 = arith.addf %137, %136 : vector<8x32xf32>
    %139 = arith.divf %137, %138 : vector<8x32xf32>
    %140 = vector.extract_strided_slice %129 {offsets = [0, 32], sizes = [8, 32], strides = [1, 1]} : vector<8x96xf32> to vector<8x32xf32>
    %141 = vector.extract_strided_slice %131 {offsets = [0, 32], sizes = [8, 32], strides = [1, 1]} : vector<8x64xf32> to vector<8x32xf32>
    %142 = arith.addf %140, %141 : vector<8x32xf32>
    %143 = arith.negf %142 : vector<8x32xf32>
    %144 = math.exp %143 : vector<8x32xf32>
    %cst_56 = arith.constant 1.000000e+00 : f32
    %145 = vector.broadcast %cst_56 : f32 to vector<8x32xf32>
    %146 = arith.addf %145, %144 : vector<8x32xf32>
    %147 = arith.divf %145, %146 : vector<8x32xf32>
    %148 = vector.extract_strided_slice %129 {offsets = [0, 64], sizes = [8, 32], strides = [1, 1]} : vector<8x96xf32> to vector<8x32xf32>
    %149 = arith.mulf %139, %2 : vector<8x32xf32>
    %150 = arith.truncf %149 : vector<8x32xf32> to vector<8x32xbf16>
    %cst_57 = arith.constant dense<0.000000e+00> : vector<8x32xf32>
    %151 = tpu.matmul %150, %123, %cst_57 {dimension_numbers = #tpu.dot_dimension_numbers<[1], [0], [0], [1], [0, 0, 1, 1], [], []>} : vector<8x32xbf16>, vector<32x32xbf16>, vector<8x32xf32> -> vector<8x32xf32>
    %152 = arith.addf %148, %151 : vector<8x32xf32>
    %153 = math.tanh %152 : vector<8x32xf32>
    %cst_58 = arith.constant 1.000000e+00 : f32
    %154 = vector.broadcast %cst_58 : f32 to vector<8x32xf32>
    %155 = arith.subf %154, %147 : vector<8x32xf32>
    %156 = arith.mulf %155, %2 : vector<8x32xf32>
    %157 = arith.mulf %147, %153 : vector<8x32xf32>
    %158 = arith.addf %156, %157 : vector<8x32xf32>
    %159 = vector.extract_strided_slice %4 {offsets = [2, 0], sizes = [1, 32], strides = [1, 1]} : vector<4x32xf32> to vector<1x32xf32>
    %160 = vector.extract_strided_slice %4 {offsets = [3, 0], sizes = [1, 32], strides = [1, 1]} : vector<4x32xf32> to vector<1x32xf32>
    %cst_59 = arith.constant dense<0.000000e+00> : vector<8xf32>
    %161 = vector.multi_reduction <add>, %158, %cst_59 [1] : vector<8x32xf32> to vector<8xf32>
    %162 = vector.shape_cast %161 : vector<8xf32> to vector<8x1xf32>
    %cst_60 = arith.constant 3.200000e+01 : f32
    %163 = vector.broadcast %cst_60 : f32 to vector<8x1xf32>
    %164 = arith.divf %162, %163 : vector<8x1xf32>
    %165 = vector.broadcast %164 : vector<8x1xf32> to vector<8x32xf32>
    %166 = arith.subf %158, %165 : vector<8x32xf32>
    %167 = arith.mulf %166, %166 : vector<8x32xf32>
    %cst_61 = arith.constant dense<0.000000e+00> : vector<8xf32>
    %168 = vector.multi_reduction <add>, %167, %cst_61 [1] : vector<8x32xf32> to vector<8xf32>
    %169 = vector.shape_cast %168 : vector<8xf32> to vector<8x1xf32>
    %cst_62 = arith.constant 3.200000e+01 : f32
    %170 = vector.broadcast %cst_62 : f32 to vector<8x1xf32>
    %171 = arith.divf %169, %170 : vector<8x1xf32>
    %172 = vector.broadcast %164 : vector<8x1xf32> to vector<8x32xf32>
    %173 = arith.subf %158, %172 : vector<8x32xf32>
    %cst_63 = arith.constant 9.99999997E-7 : f32
    %174 = vector.broadcast %cst_63 : f32 to vector<8x1xf32>
    %175 = arith.addf %171, %174 : vector<8x1xf32>
    %176 = math.rsqrt %175 : vector<8x1xf32>
    %177 = vector.broadcast %176 : vector<8x1xf32> to vector<8x32xf32>
    %178 = arith.mulf %173, %177 : vector<8x32xf32>
    %179 = vector.broadcast %159 : vector<1x32xf32> to vector<8x32xf32>
    %180 = arith.mulf %178, %179 : vector<8x32xf32>
    %181 = vector.broadcast %160 : vector<1x32xf32> to vector<8x32xf32>
    %182 = arith.addf %180, %181 : vector<8x32xf32>
    %183 = arith.truncf %182 : vector<8x32xf32> to vector<8x32xbf16>
    %c0_64 = arith.constant 0 : index
    %c0_65 = arith.constant 0 : index
    %c0_66 = arith.constant 0 : index
    %184 = vector.load %arg9[%c0_64, %c0_65, %c0_66] : memref<2x32x64xbf16, #tpu.memory_space<vmem>>, vector<1x32x64xbf16>
    %185 = vector.shape_cast %184 : vector<1x32x64xbf16> to vector<32x64xbf16>
    %cst_67 = arith.constant dense<0.000000e+00> : vector<8x64xf32>
    %186 = tpu.matmul %183, %185, %cst_67 {dimension_numbers = #tpu.dot_dimension_numbers<[1], [0], [0], [1], [0, 0, 1, 1], [], []>} : vector<8x32xbf16>, vector<32x64xbf16>, vector<8x64xf32> -> vector<8x64xf32>
    %c0_68 = arith.constant 0 : index
    %c0_69 = arith.constant 0 : index
    %c0_70 = arith.constant 0 : index
    %187 = vector.load %arg10[%c0_68, %c0_69, %c0_70] : memref<2x1x64xf32, #tpu.memory_space<vmem>>, vector<1x1x64xf32>
    %188 = vector.shape_cast %187 : vector<1x1x64xf32> to vector<1x64xf32>
    %189 = vector.broadcast %188 : vector<1x64xf32> to vector<8x64xf32>
    %190 = arith.addf %186, %189 : vector<8x64xf32>
    %cst_71 = arith.constant 0.000000e+00 : f32
    %191 = vector.broadcast %cst_71 : f32 to vector<8x64xf32>
    %192 = arith.maximumf %190, %191 : vector<8x64xf32>
    %193 = arith.truncf %192 : vector<8x64xf32> to vector<8x64xbf16>
    %c0_72 = arith.constant 0 : index
    %c0_73 = arith.constant 0 : index
    %c0_74 = arith.constant 0 : index
    %194 = vector.load %arg11[%c0_72, %c0_73, %c0_74] : memref<2x64x32xbf16, #tpu.memory_space<vmem>>, vector<1x64x32xbf16>
    %195 = vector.shape_cast %194 : vector<1x64x32xbf16> to vector<64x32xbf16>
    %cst_75 = arith.constant dense<0.000000e+00> : vector<8x32xf32>
    %196 = tpu.matmul %193, %195, %cst_75 {dimension_numbers = #tpu.dot_dimension_numbers<[1], [0], [0], [1], [0, 0, 1, 1], [], []>} : vector<8x64xbf16>, vector<64x32xbf16>, vector<8x32xf32> -> vector<8x32xf32>
    %c0_76 = arith.constant 0 : index
    %c0_77 = arith.constant 0 : index
    %c0_78 = arith.constant 0 : index
    %197 = vector.load %arg12[%c0_76, %c0_77, %c0_78] : memref<2x1x32xf32, #tpu.memory_space<vmem>>, vector<1x1x32xf32>
    %198 = vector.shape_cast %197 : vector<1x1x32xf32> to vector<1x32xf32>
    %199 = vector.broadcast %198 : vector<1x32xf32> to vector<8x32xf32>
    %200 = arith.addf %196, %199 : vector<8x32xf32>
    %c0_79 = arith.constant 0 : index
    %c1 = arith.constant 1 : index
    %c0_80 = arith.constant 0 : index
    %c0_81 = arith.constant 0 : index
    %201 = vector.load %arg5[%c0_79, %c1, %c0_80, %c0_81] : memref<2x2x32x96xbf16, #tpu.memory_space<vmem>>, vector<1x1x32x96xbf16>
    %202 = vector.shape_cast %201 : vector<1x1x32x96xbf16> to vector<32x96xbf16>
    %c0_82 = arith.constant 0 : index
    %c1_83 = arith.constant 1 : index
    %c0_84 = arith.constant 0 : index
    %c0_85 = arith.constant 0 : index
    %203 = vector.load %arg6[%c0_82, %c1_83, %c0_84, %c0_85] : memref<2x2x32x64xbf16, #tpu.memory_space<vmem>>, vector<1x1x32x64xbf16>
    %204 = vector.shape_cast %203 : vector<1x1x32x64xbf16> to vector<32x64xbf16>
    %c0_86 = arith.constant 0 : index
    %c1_87 = arith.constant 1 : index
    %c0_88 = arith.constant 0 : index
    %c0_89 = arith.constant 0 : index
    %205 = vector.load %arg7[%c0_86, %c1_87, %c0_88, %c0_89] : memref<2x2x32x32xbf16, #tpu.memory_space<vmem>>, vector<1x1x32x32xbf16>
    %206 = vector.shape_cast %205 : vector<1x1x32x32xbf16> to vector<32x32xbf16>
    %c0_90 = arith.constant 0 : index
    %c1_91 = arith.constant 1 : index
    %c0_92 = arith.constant 0 : index
    %c0_93 = arith.constant 0 : index
    %207 = vector.load %arg8[%c0_90, %c1_91, %c0_92, %c0_93] : memref<2x2x1x96xf32, #tpu.memory_space<vmem>>, vector<1x1x1x96xf32>
    %208 = vector.shape_cast %207 : vector<1x1x1x96xf32> to vector<1x96xf32>
    %209 = arith.truncf %200 : vector<8x32xf32> to vector<8x32xbf16>
    %cst_94 = arith.constant dense<0.000000e+00> : vector<8x96xf32>
    %210 = tpu.matmul %209, %202, %cst_94 {dimension_numbers = #tpu.dot_dimension_numbers<[1], [0], [0], [1], [0, 0, 1, 1], [], []>} : vector<8x32xbf16>, vector<32x96xbf16>, vector<8x96xf32> -> vector<8x96xf32>
    %211 = vector.broadcast %208 : vector<1x96xf32> to vector<8x96xf32>
    %212 = arith.addf %210, %211 : vector<8x96xf32>
    %213 = arith.truncf %158 : vector<8x32xf32> to vector<8x32xbf16>
    %cst_95 = arith.constant dense<0.000000e+00> : vector<8x64xf32>
    %214 = tpu.matmul %213, %204, %cst_95 {dimension_numbers = #tpu.dot_dimension_numbers<[1], [0], [0], [1], [0, 0, 1, 1], [], []>} : vector<8x32xbf16>, vector<32x64xbf16>, vector<8x64xf32> -> vector<8x64xf32>
    %215 = vector.extract_strided_slice %212 {offsets = [0, 0], sizes = [8, 32], strides = [1, 1]} : vector<8x96xf32> to vector<8x32xf32>
    %216 = vector.extract_strided_slice %214 {offsets = [0, 0], sizes = [8, 32], strides = [1, 1]} : vector<8x64xf32> to vector<8x32xf32>
    %217 = arith.addf %215, %216 : vector<8x32xf32>
    %218 = arith.negf %217 : vector<8x32xf32>
    %219 = math.exp %218 : vector<8x32xf32>
    %cst_96 = arith.constant 1.000000e+00 : f32
    %220 = vector.broadcast %cst_96 : f32 to vector<8x32xf32>
    %221 = arith.addf %220, %219 : vector<8x32xf32>
    %222 = arith.divf %220, %221 : vector<8x32xf32>
    %223 = vector.extract_strided_slice %212 {offsets = [0, 32], sizes = [8, 32], strides = [1, 1]} : vector<8x96xf32> to vector<8x32xf32>
    %224 = vector.extract_strided_slice %214 {offsets = [0, 32], sizes = [8, 32], strides = [1, 1]} : vector<8x64xf32> to vector<8x32xf32>
    %225 = arith.addf %223, %224 : vector<8x32xf32>
    %226 = arith.negf %225 : vector<8x32xf32>
    %227 = math.exp %226 : vector<8x32xf32>
    %cst_97 = arith.constant 1.000000e+00 : f32
    %228 = vector.broadcast %cst_97 : f32 to vector<8x32xf32>
    %229 = arith.addf %228, %227 : vector<8x32xf32>
    %230 = arith.divf %228, %229 : vector<8x32xf32>
    %231 = vector.extract_strided_slice %212 {offsets = [0, 64], sizes = [8, 32], strides = [1, 1]} : vector<8x96xf32> to vector<8x32xf32>
    %232 = arith.mulf %222, %158 : vector<8x32xf32>
    %233 = arith.truncf %232 : vector<8x32xf32> to vector<8x32xbf16>
    %cst_98 = arith.constant dense<0.000000e+00> : vector<8x32xf32>
    %234 = tpu.matmul %233, %206, %cst_98 {dimension_numbers = #tpu.dot_dimension_numbers<[1], [0], [0], [1], [0, 0, 1, 1], [], []>} : vector<8x32xbf16>, vector<32x32xbf16>, vector<8x32xf32> -> vector<8x32xf32>
    %235 = arith.addf %231, %234 : vector<8x32xf32>
    %236 = math.tanh %235 : vector<8x32xf32>
    %cst_99 = arith.constant 1.000000e+00 : f32
    %237 = vector.broadcast %cst_99 : f32 to vector<8x32xf32>
    %238 = arith.subf %237, %230 : vector<8x32xf32>
    %239 = arith.mulf %238, %158 : vector<8x32xf32>
    %240 = arith.mulf %230, %236 : vector<8x32xf32>
    %241 = arith.addf %239, %240 : vector<8x32xf32>
    %c1_100 = arith.constant 1 : index
    %c0_101 = arith.constant 0 : index
    %c0_102 = arith.constant 0 : index
    %242 = vector.load %arg2[%c1_100, %c0_101, %c0_102] : memref<2x4x32xf32, #tpu.memory_space<vmem>>, vector<1x4x32xf32>
    %243 = vector.shape_cast %242 : vector<1x4x32xf32> to vector<4x32xf32>
    %244 = vector.extract_strided_slice %243 {offsets = [0, 0], sizes = [1, 32], strides = [1, 1]} : vector<4x32xf32> to vector<1x32xf32>
    %245 = vector.extract_strided_slice %243 {offsets = [1, 0], sizes = [1, 32], strides = [1, 1]} : vector<4x32xf32> to vector<1x32xf32>
    %cst_103 = arith.constant dense<0.000000e+00> : vector<8xf32>
    %246 = vector.multi_reduction <add>, %241, %cst_103 [1] : vector<8x32xf32> to vector<8xf32>
    %247 = vector.shape_cast %246 : vector<8xf32> to vector<8x1xf32>
    %cst_104 = arith.constant 3.200000e+01 : f32
    %248 = vector.broadcast %cst_104 : f32 to vector<8x1xf32>
    %249 = arith.divf %247, %248 : vector<8x1xf32>
    %250 = vector.broadcast %249 : vector<8x1xf32> to vector<8x32xf32>
    %251 = arith.subf %241, %250 : vector<8x32xf32>
    %252 = arith.mulf %251, %251 : vector<8x32xf32>
    %cst_105 = arith.constant dense<0.000000e+00> : vector<8xf32>
    %253 = vector.multi_reduction <add>, %252, %cst_105 [1] : vector<8x32xf32> to vector<8xf32>
    %254 = vector.shape_cast %253 : vector<8xf32> to vector<8x1xf32>
    %cst_106 = arith.constant 3.200000e+01 : f32
    %255 = vector.broadcast %cst_106 : f32 to vector<8x1xf32>
    %256 = arith.divf %254, %255 : vector<8x1xf32>
    %257 = vector.broadcast %249 : vector<8x1xf32> to vector<8x32xf32>
    %258 = arith.subf %241, %257 : vector<8x32xf32>
    %cst_107 = arith.constant 9.99999997E-7 : f32
    %259 = vector.broadcast %cst_107 : f32 to vector<8x1xf32>
    %260 = arith.addf %256, %259 : vector<8x1xf32>
    %261 = math.rsqrt %260 : vector<8x1xf32>
    %262 = vector.broadcast %261 : vector<8x1xf32> to vector<8x32xf32>
    %263 = arith.mulf %258, %262 : vector<8x32xf32>
    %264 = vector.broadcast %244 : vector<1x32xf32> to vector<8x32xf32>
    %265 = arith.mulf %263, %264 : vector<8x32xf32>
    %266 = vector.broadcast %245 : vector<1x32xf32> to vector<8x32xf32>
    %267 = arith.addf %265, %266 : vector<8x32xf32>
    %268 = arith.truncf %267 : vector<8x32xf32> to vector<8x32xbf16>
    %c1_108 = arith.constant 1 : index
    %c0_109 = arith.constant 0 : index
    %c0_110 = arith.constant 0 : index
    %269 = vector.load %arg3[%c1_108, %c0_109, %c0_110] : memref<2x32x96xbf16, #tpu.memory_space<vmem>>, vector<1x32x96xbf16>
    %270 = vector.shape_cast %269 : vector<1x32x96xbf16> to vector<32x96xbf16>
    %cst_111 = arith.constant dense<0.000000e+00> : vector<8x96xf32>
    %271 = tpu.matmul %268, %270, %cst_111 {dimension_numbers = #tpu.dot_dimension_numbers<[1], [0], [0], [1], [0, 0, 1, 1], [], []>} : vector<8x32xbf16>, vector<32x96xbf16>, vector<8x96xf32> -> vector<8x96xf32>
    %272 = vector.extract_strided_slice %271 {offsets = [0, 0], sizes = [8, 8], strides = [1, 1]} : vector<8x96xf32> to vector<8x8xf32>
    %273 = arith.truncf %272 : vector<8x8xf32> to vector<8x8xbf16>
    %274 = vector.extract_strided_slice %271 {offsets = [0, 32], sizes = [8, 8], strides = [1, 1]} : vector<8x96xf32> to vector<8x8xf32>
    %275 = arith.truncf %274 : vector<8x8xf32> to vector<8x8xbf16>
    %276 = vector.extract_strided_slice %271 {offsets = [0, 64], sizes = [8, 8], strides = [1, 1]} : vector<8x96xf32> to vector<8x8xf32>
    %277 = arith.truncf %276 : vector<8x8xf32> to vector<8x8xbf16>
    %cst_112 = arith.constant dense<0.000000e+00> : vector<8x8xf32>
    %278 = tpu.matmul %273, %275, %cst_112 {dimension_numbers = #tpu.dot_dimension_numbers<[1], [1], [0], [0], [0, 0, 1, 0], [], []>} : vector<8x8xbf16>, vector<8x8xbf16>, vector<8x8xf32> -> vector<8x8xf32>
    %cst_113 = arith.constant dense<0xFF800000> : vector<8xf32>
    %279 = vector.multi_reduction <maximumf>, %278, %cst_113 [1] : vector<8x8xf32> to vector<8xf32>
    %280 = vector.shape_cast %279 : vector<8xf32> to vector<8x1xf32>
    %281 = vector.broadcast %280 : vector<8x1xf32> to vector<8x8xf32>
    %282 = arith.subf %278, %281 : vector<8x8xf32>
    %283 = math.exp %282 : vector<8x8xf32>
    %cst_114 = arith.constant dense<0.000000e+00> : vector<8xf32>
    %284 = vector.multi_reduction <add>, %283, %cst_114 [1] : vector<8x8xf32> to vector<8xf32>
    %285 = vector.shape_cast %284 : vector<8xf32> to vector<8x1xf32>
    %286 = tpu.reciprocal %285 {approx = true} : vector<8x1xf32> -> vector<8x1xf32>
    %287 = vector.broadcast %286 : vector<8x1xf32> to vector<8x8xf32>
    %288 = arith.mulf %283, %287 : vector<8x8xf32>
    %289 = arith.truncf %288 : vector<8x8xf32> to vector<8x8xbf16>
    %cst_115 = arith.constant dense<0.000000e+00> : vector<8x8xf32>
    %290 = tpu.matmul %289, %277, %cst_115 {dimension_numbers = #tpu.dot_dimension_numbers<[1], [0], [0], [1], [0, 0, 1, 1], [], []>} : vector<8x8xbf16>, vector<8x8xbf16>, vector<8x8xf32> -> vector<8x8xf32>
    %291 = vector.extract_strided_slice %271 {offsets = [0, 8], sizes = [8, 8], strides = [1, 1]} : vector<8x96xf32> to vector<8x8xf32>
    %292 = arith.truncf %291 : vector<8x8xf32> to vector<8x8xbf16>
    %293 = vector.extract_strided_slice %271 {offsets = [0, 40], sizes = [8, 8], strides = [1, 1]} : vector<8x96xf32> to vector<8x8xf32>
    %294 = arith.truncf %293 : vector<8x8xf32> to vector<8x8xbf16>
    %295 = vector.extract_strided_slice %271 {offsets = [0, 72], sizes = [8, 8], strides = [1, 1]} : vector<8x96xf32> to vector<8x8xf32>
    %296 = arith.truncf %295 : vector<8x8xf32> to vector<8x8xbf16>
    %cst_116 = arith.constant dense<0.000000e+00> : vector<8x8xf32>
    %297 = tpu.matmul %292, %294, %cst_116 {dimension_numbers = #tpu.dot_dimension_numbers<[1], [1], [0], [0], [0, 0, 1, 0], [], []>} : vector<8x8xbf16>, vector<8x8xbf16>, vector<8x8xf32> -> vector<8x8xf32>
    %cst_117 = arith.constant dense<0xFF800000> : vector<8xf32>
    %298 = vector.multi_reduction <maximumf>, %297, %cst_117 [1] : vector<8x8xf32> to vector<8xf32>
    %299 = vector.shape_cast %298 : vector<8xf32> to vector<8x1xf32>
    %300 = vector.broadcast %299 : vector<8x1xf32> to vector<8x8xf32>
    %301 = arith.subf %297, %300 : vector<8x8xf32>
    %302 = math.exp %301 : vector<8x8xf32>
    %cst_118 = arith.constant dense<0.000000e+00> : vector<8xf32>
    %303 = vector.multi_reduction <add>, %302, %cst_118 [1] : vector<8x8xf32> to vector<8xf32>
    %304 = vector.shape_cast %303 : vector<8xf32> to vector<8x1xf32>
    %305 = tpu.reciprocal %304 {approx = true} : vector<8x1xf32> -> vector<8x1xf32>
    %306 = vector.broadcast %305 : vector<8x1xf32> to vector<8x8xf32>
    %307 = arith.mulf %302, %306 : vector<8x8xf32>
    %308 = arith.truncf %307 : vector<8x8xf32> to vector<8x8xbf16>
    %cst_119 = arith.constant dense<0.000000e+00> : vector<8x8xf32>
    %309 = tpu.matmul %308, %296, %cst_119 {dimension_numbers = #tpu.dot_dimension_numbers<[1], [0], [0], [1], [0, 0, 1, 1], [], []>} : vector<8x8xbf16>, vector<8x8xbf16>, vector<8x8xf32> -> vector<8x8xf32>
    %310 = vector.extract_strided_slice %271 {offsets = [0, 16], sizes = [8, 8], strides = [1, 1]} : vector<8x96xf32> to vector<8x8xf32>
    %311 = arith.truncf %310 : vector<8x8xf32> to vector<8x8xbf16>
    %312 = vector.extract_strided_slice %271 {offsets = [0, 48], sizes = [8, 8], strides = [1, 1]} : vector<8x96xf32> to vector<8x8xf32>
    %313 = arith.truncf %312 : vector<8x8xf32> to vector<8x8xbf16>
    %314 = vector.extract_strided_slice %271 {offsets = [0, 80], sizes = [8, 8], strides = [1, 1]} : vector<8x96xf32> to vector<8x8xf32>
    %315 = arith.truncf %314 : vector<8x8xf32> to vector<8x8xbf16>
    %cst_120 = arith.constant dense<0.000000e+00> : vector<8x8xf32>
    %316 = tpu.matmul %311, %313, %cst_120 {dimension_numbers = #tpu.dot_dimension_numbers<[1], [1], [0], [0], [0, 0, 1, 0], [], []>} : vector<8x8xbf16>, vector<8x8xbf16>, vector<8x8xf32> -> vector<8x8xf32>
    %cst_121 = arith.constant dense<0xFF800000> : vector<8xf32>
    %317 = vector.multi_reduction <maximumf>, %316, %cst_121 [1] : vector<8x8xf32> to vector<8xf32>
    %318 = vector.shape_cast %317 : vector<8xf32> to vector<8x1xf32>
    %319 = vector.broadcast %318 : vector<8x1xf32> to vector<8x8xf32>
    %320 = arith.subf %316, %319 : vector<8x8xf32>
    %321 = math.exp %320 : vector<8x8xf32>
    %cst_122 = arith.constant dense<0.000000e+00> : vector<8xf32>
    %322 = vector.multi_reduction <add>, %321, %cst_122 [1] : vector<8x8xf32> to vector<8xf32>
    %323 = vector.shape_cast %322 : vector<8xf32> to vector<8x1xf32>
    %324 = tpu.reciprocal %323 {approx = true} : vector<8x1xf32> -> vector<8x1xf32>
    %325 = vector.broadcast %324 : vector<8x1xf32> to vector<8x8xf32>
    %326 = arith.mulf %321, %325 : vector<8x8xf32>
    %327 = arith.truncf %326 : vector<8x8xf32> to vector<8x8xbf16>
    %cst_123 = arith.constant dense<0.000000e+00> : vector<8x8xf32>
    %328 = tpu.matmul %327, %315, %cst_123 {dimension_numbers = #tpu.dot_dimension_numbers<[1], [0], [0], [1], [0, 0, 1, 1], [], []>} : vector<8x8xbf16>, vector<8x8xbf16>, vector<8x8xf32> -> vector<8x8xf32>
    %329 = vector.extract_strided_slice %271 {offsets = [0, 24], sizes = [8, 8], strides = [1, 1]} : vector<8x96xf32> to vector<8x8xf32>
    %330 = arith.truncf %329 : vector<8x8xf32> to vector<8x8xbf16>
    %331 = vector.extract_strided_slice %271 {offsets = [0, 56], sizes = [8, 8], strides = [1, 1]} : vector<8x96xf32> to vector<8x8xf32>
    %332 = arith.truncf %331 : vector<8x8xf32> to vector<8x8xbf16>
    %333 = vector.extract_strided_slice %271 {offsets = [0, 88], sizes = [8, 8], strides = [1, 1]} : vector<8x96xf32> to vector<8x8xf32>
    %334 = arith.truncf %333 : vector<8x8xf32> to vector<8x8xbf16>
    %cst_124 = arith.constant dense<0.000000e+00> : vector<8x8xf32>
    %335 = tpu.matmul %330, %332, %cst_124 {dimension_numbers = #tpu.dot_dimension_numbers<[1], [1], [0], [0], [0, 0, 1, 0], [], []>} : vector<8x8xbf16>, vector<8x8xbf16>, vector<8x8xf32> -> vector<8x8xf32>
    %cst_125 = arith.constant dense<0xFF800000> : vector<8xf32>
    %336 = vector.multi_reduction <maximumf>, %335, %cst_125 [1] : vector<8x8xf32> to vector<8xf32>
    %337 = vector.shape_cast %336 : vector<8xf32> to vector<8x1xf32>
    %338 = vector.broadcast %337 : vector<8x1xf32> to vector<8x8xf32>
    %339 = arith.subf %335, %338 : vector<8x8xf32>
    %340 = math.exp %339 : vector<8x8xf32>
    %cst_126 = arith.constant dense<0.000000e+00> : vector<8xf32>
    %341 = vector.multi_reduction <add>, %340, %cst_126 [1] : vector<8x8xf32> to vector<8xf32>
    %342 = vector.shape_cast %341 : vector<8xf32> to vector<8x1xf32>
    %343 = tpu.reciprocal %342 {approx = true} : vector<8x1xf32> -> vector<8x1xf32>
    %344 = vector.broadcast %343 : vector<8x1xf32> to vector<8x8xf32>
    %345 = arith.mulf %340, %344 : vector<8x8xf32>
    %346 = arith.truncf %345 : vector<8x8xf32> to vector<8x8xbf16>
    %cst_127 = arith.constant dense<0.000000e+00> : vector<8x8xf32>
    %347 = tpu.matmul %346, %334, %cst_127 {dimension_numbers = #tpu.dot_dimension_numbers<[1], [0], [0], [1], [0, 0, 1, 1], [], []>} : vector<8x8xbf16>, vector<8x8xbf16>, vector<8x8xf32> -> vector<8x8xf32>
    %348 = tpu.concatenate %288, %307, %326, %345 in 1 : vector<8x8xf32>, vector<8x8xf32>, vector<8x8xf32>, vector<8x8xf32> -> vector<8x32xf32>
    %c1_128 = arith.constant 1 : index
    %c0_129 = arith.constant 0 : index
    %c0_130 = arith.constant 0 : index
    %349 = vector.load %arg14[%c1_128, %c0_129, %c0_130] : memref<2x8x32xf32, #tpu.memory_space<vmem>>, vector<1x8x32xf32>
    %350 = vector.shape_cast %349 : vector<1x8x32xf32> to vector<8x32xf32>
    %351 = vector.shape_cast %348 : vector<8x32xf32> to vector<1x8x32xf32>
    tpu.vector_store %arg14[%c1_128, %c0_129, %c0_130], %351 {strides = array<i32>} : memref<2x8x32xf32, #tpu.memory_space<vmem>>, vector<1x8x32xf32>,
    %352 = tpu.concatenate %290, %309, %328, %347 in 1 : vector<8x8xf32>, vector<8x8xf32>, vector<8x8xf32>, vector<8x8xf32> -> vector<8x32xf32>
    %353 = arith.truncf %352 : vector<8x32xf32> to vector<8x32xbf16>
    %c1_131 = arith.constant 1 : index
    %c0_132 = arith.constant 0 : index
    %c0_133 = arith.constant 0 : index
    %354 = vector.load %arg4[%c1_131, %c0_132, %c0_133] : memref<2x32x32xbf16, #tpu.memory_space<vmem>>, vector<1x32x32xbf16>
    %355 = vector.shape_cast %354 : vector<1x32x32xbf16> to vector<32x32xbf16>
    %cst_134 = arith.constant dense<0.000000e+00> : vector<8x32xf32>
    %356 = tpu.matmul %353, %355, %cst_134 {dimension_numbers = #tpu.dot_dimension_numbers<[1], [0], [0], [1], [0, 0, 1, 1], [], []>} : vector<8x32xbf16>, vector<32x32xbf16>, vector<8x32xf32> -> vector<8x32xf32>
    %c1_135 = arith.constant 1 : index
    %c0_136 = arith.constant 0 : index
    %c0_137 = arith.constant 0 : index
    %c0_138 = arith.constant 0 : index
    %357 = vector.load %arg5[%c1_135, %c0_136, %c0_137, %c0_138] : memref<2x2x32x96xbf16, #tpu.memory_space<vmem>>, vector<1x1x32x96xbf16>
    %358 = vector.shape_cast %357 : vector<1x1x32x96xbf16> to vector<32x96xbf16>
    %c1_139 = arith.constant 1 : index
    %c0_140 = arith.constant 0 : index
    %c0_141 = arith.constant 0 : index
    %c0_142 = arith.constant 0 : index
    %359 = vector.load %arg6[%c1_139, %c0_140, %c0_141, %c0_142] : memref<2x2x32x64xbf16, #tpu.memory_space<vmem>>, vector<1x1x32x64xbf16>
    %360 = vector.shape_cast %359 : vector<1x1x32x64xbf16> to vector<32x64xbf16>
    %c1_143 = arith.constant 1 : index
    %c0_144 = arith.constant 0 : index
    %c0_145 = arith.constant 0 : index
    %c0_146 = arith.constant 0 : index
    %361 = vector.load %arg7[%c1_143, %c0_144, %c0_145, %c0_146] : memref<2x2x32x32xbf16, #tpu.memory_space<vmem>>, vector<1x1x32x32xbf16>
    %362 = vector.shape_cast %361 : vector<1x1x32x32xbf16> to vector<32x32xbf16>
    %c1_147 = arith.constant 1 : index
    %c0_148 = arith.constant 0 : index
    %c0_149 = arith.constant 0 : index
    %c0_150 = arith.constant 0 : index
    %363 = vector.load %arg8[%c1_147, %c0_148, %c0_149, %c0_150] : memref<2x2x1x96xf32, #tpu.memory_space<vmem>>, vector<1x1x1x96xf32>
    %364 = vector.shape_cast %363 : vector<1x1x1x96xf32> to vector<1x96xf32>
    %365 = arith.truncf %356 : vector<8x32xf32> to vector<8x32xbf16>
    %cst_151 = arith.constant dense<0.000000e+00> : vector<8x96xf32>
    %366 = tpu.matmul %365, %358, %cst_151 {dimension_numbers = #tpu.dot_dimension_numbers<[1], [0], [0], [1], [0, 0, 1, 1], [], []>} : vector<8x32xbf16>, vector<32x96xbf16>, vector<8x96xf32> -> vector<8x96xf32>
    %367 = vector.broadcast %364 : vector<1x96xf32> to vector<8x96xf32>
    %368 = arith.addf %366, %367 : vector<8x96xf32>
    %369 = arith.truncf %241 : vector<8x32xf32> to vector<8x32xbf16>
    %cst_152 = arith.constant dense<0.000000e+00> : vector<8x64xf32>
    %370 = tpu.matmul %369, %360, %cst_152 {dimension_numbers = #tpu.dot_dimension_numbers<[1], [0], [0], [1], [0, 0, 1, 1], [], []>} : vector<8x32xbf16>, vector<32x64xbf16>, vector<8x64xf32> -> vector<8x64xf32>
    %371 = vector.extract_strided_slice %368 {offsets = [0, 0], sizes = [8, 32], strides = [1, 1]} : vector<8x96xf32> to vector<8x32xf32>
    %372 = vector.extract_strided_slice %370 {offsets = [0, 0], sizes = [8, 32], strides = [1, 1]} : vector<8x64xf32> to vector<8x32xf32>
    %373 = arith.addf %371, %372 : vector<8x32xf32>
    %374 = arith.negf %373 : vector<8x32xf32>
    %375 = math.exp %374 : vector<8x32xf32>
    %cst_153 = arith.constant 1.000000e+00 : f32
    %376 = vector.broadcast %cst_153 : f32 to vector<8x32xf32>
    %377 = arith.addf %376, %375 : vector<8x32xf32>
    %378 = arith.divf %376, %377 : vector<8x32xf32>
    %379 = vector.extract_strided_slice %368 {offsets = [0, 32], sizes = [8, 32], strides = [1, 1]} : vector<8x96xf32> to vector<8x32xf32>
    %380 = vector.extract_strided_slice %370 {offsets = [0, 32], sizes = [8, 32], strides = [1, 1]} : vector<8x64xf32> to vector<8x32xf32>
    %381 = arith.addf %379, %380 : vector<8x32xf32>
    %382 = arith.negf %381 : vector<8x32xf32>
    %383 = math.exp %382 : vector<8x32xf32>
    %cst_154 = arith.constant 1.000000e+00 : f32
    %384 = vector.broadcast %cst_154 : f32 to vector<8x32xf32>
    %385 = arith.addf %384, %383 : vector<8x32xf32>
    %386 = arith.divf %384, %385 : vector<8x32xf32>
    %387 = vector.extract_strided_slice %368 {offsets = [0, 64], sizes = [8, 32], strides = [1, 1]} : vector<8x96xf32> to vector<8x32xf32>
    %388 = arith.mulf %378, %241 : vector<8x32xf32>
    %389 = arith.truncf %388 : vector<8x32xf32> to vector<8x32xbf16>
    %cst_155 = arith.constant dense<0.000000e+00> : vector<8x32xf32>
    %390 = tpu.matmul %389, %362, %cst_155 {dimension_numbers = #tpu.dot_dimension_numbers<[1], [0], [0], [1], [0, 0, 1, 1], [], []>} : vector<8x32xbf16>, vector<32x32xbf16>, vector<8x32xf32> -> vector<8x32xf32>
    %391 = arith.addf %387, %390 : vector<8x32xf32>
    %392 = math.tanh %391 : vector<8x32xf32>
    %cst_156 = arith.constant 1.000000e+00 : f32
    %393 = vector.broadcast %cst_156 : f32 to vector<8x32xf32>
    %394 = arith.subf %393, %386 : vector<8x32xf32>
    %395 = arith.mulf %394, %241 : vector<8x32xf32>
    %396 = arith.mulf %386, %392 : vector<8x32xf32>
    %397 = arith.addf %395, %396 : vector<8x32xf32>
    %398 = vector.extract_strided_slice %243 {offsets = [2, 0], sizes = [1, 32], strides = [1, 1]} : vector<4x32xf32> to vector<1x32xf32>
    %399 = vector.extract_strided_slice %243 {offsets = [3, 0], sizes = [1, 32], strides = [1, 1]} : vector<4x32xf32> to vector<1x32xf32>
    %cst_157 = arith.constant dense<0.000000e+00> : vector<8xf32>
    %400 = vector.multi_reduction <add>, %397, %cst_157 [1] : vector<8x32xf32> to vector<8xf32>
    %401 = vector.shape_cast %400 : vector<8xf32> to vector<8x1xf32>
    %cst_158 = arith.constant 3.200000e+01 : f32
    %402 = vector.broadcast %cst_158 : f32 to vector<8x1xf32>
    %403 = arith.divf %401, %402 : vector<8x1xf32>
    %404 = vector.broadcast %403 : vector<8x1xf32> to vector<8x32xf32>
    %405 = arith.subf %397, %404 : vector<8x32xf32>
    %406 = arith.mulf %405, %405 : vector<8x32xf32>
    %cst_159 = arith.constant dense<0.000000e+00> : vector<8xf32>
    %407 = vector.multi_reduction <add>, %406, %cst_159 [1] : vector<8x32xf32> to vector<8xf32>
    %408 = vector.shape_cast %407 : vector<8xf32> to vector<8x1xf32>
    %cst_160 = arith.constant 3.200000e+01 : f32
    %409 = vector.broadcast %cst_160 : f32 to vector<8x1xf32>
    %410 = arith.divf %408, %409 : vector<8x1xf32>
    %411 = vector.broadcast %403 : vector<8x1xf32> to vector<8x32xf32>
    %412 = arith.subf %397, %411 : vector<8x32xf32>
    %cst_161 = arith.constant 9.99999997E-7 : f32
    %413 = vector.broadcast %cst_161 : f32 to vector<8x1xf32>
    %414 = arith.addf %410, %413 : vector<8x1xf32>
    %415 = math.rsqrt %414 : vector<8x1xf32>
    %416 = vector.broadcast %415 : vector<8x1xf32> to vector<8x32xf32>
    %417 = arith.mulf %412, %416 : vector<8x32xf32>
    %418 = vector.broadcast %398 : vector<1x32xf32> to vector<8x32xf32>
    %419 = arith.mulf %417, %418 : vector<8x32xf32>
    %420 = vector.broadcast %399 : vector<1x32xf32> to vector<8x32xf32>
    %421 = arith.addf %419, %420 : vector<8x32xf32>
    %422 = arith.truncf %421 : vector<8x32xf32> to vector<8x32xbf16>
    %c1_162 = arith.constant 1 : index
    %c0_163 = arith.constant 0 : index
    %c0_164 = arith.constant 0 : index
    %423 = vector.load %arg9[%c1_162, %c0_163, %c0_164] : memref<2x32x64xbf16, #tpu.memory_space<vmem>>, vector<1x32x64xbf16>
    %424 = vector.shape_cast %423 : vector<1x32x64xbf16> to vector<32x64xbf16>
    %cst_165 = arith.constant dense<0.000000e+00> : vector<8x64xf32>
    %425 = tpu.matmul %422, %424, %cst_165 {dimension_numbers = #tpu.dot_dimension_numbers<[1], [0], [0], [1], [0, 0, 1, 1], [], []>} : vector<8x32xbf16>, vector<32x64xbf16>, vector<8x64xf32> -> vector<8x64xf32>
    %c1_166 = arith.constant 1 : index
    %c0_167 = arith.constant 0 : index
    %c0_168 = arith.constant 0 : index
    %426 = vector.load %arg10[%c1_166, %c0_167, %c0_168] : memref<2x1x64xf32, #tpu.memory_space<vmem>>, vector<1x1x64xf32>
    %427 = vector.shape_cast %426 : vector<1x1x64xf32> to vector<1x64xf32>
    %428 = vector.broadcast %427 : vector<1x64xf32> to vector<8x64xf32>
    %429 = arith.addf %425, %428 : vector<8x64xf32>
    %cst_169 = arith.constant 0.000000e+00 : f32
    %430 = vector.broadcast %cst_169 : f32 to vector<8x64xf32>
    %431 = arith.maximumf %429, %430 : vector<8x64xf32>
    %432 = arith.truncf %431 : vector<8x64xf32> to vector<8x64xbf16>
    %c1_170 = arith.constant 1 : index
    %c0_171 = arith.constant 0 : index
    %c0_172 = arith.constant 0 : index
    %433 = vector.load %arg11[%c1_170, %c0_171, %c0_172] : memref<2x64x32xbf16, #tpu.memory_space<vmem>>, vector<1x64x32xbf16>
    %434 = vector.shape_cast %433 : vector<1x64x32xbf16> to vector<64x32xbf16>
    %cst_173 = arith.constant dense<0.000000e+00> : vector<8x32xf32>
    %435 = tpu.matmul %432, %434, %cst_173 {dimension_numbers = #tpu.dot_dimension_numbers<[1], [0], [0], [1], [0, 0, 1, 1], [], []>} : vector<8x64xbf16>, vector<64x32xbf16>, vector<8x32xf32> -> vector<8x32xf32>
    %c1_174 = arith.constant 1 : index
    %c0_175 = arith.constant 0 : index
    %c0_176 = arith.constant 0 : index
    %436 = vector.load %arg12[%c1_174, %c0_175, %c0_176] : memref<2x1x32xf32, #tpu.memory_space<vmem>>, vector<1x1x32xf32>
    %437 = vector.shape_cast %436 : vector<1x1x32xf32> to vector<1x32xf32>
    %438 = vector.broadcast %437 : vector<1x32xf32> to vector<8x32xf32>
    %439 = arith.addf %435, %438 : vector<8x32xf32>
    %c1_177 = arith.constant 1 : index
    %c1_178 = arith.constant 1 : index
    %c0_179 = arith.constant 0 : index
    %c0_180 = arith.constant 0 : index
    %440 = vector.load %arg5[%c1_177, %c1_178, %c0_179, %c0_180] : memref<2x2x32x96xbf16, #tpu.memory_space<vmem>>, vector<1x1x32x96xbf16>
    %441 = vector.shape_cast %440 : vector<1x1x32x96xbf16> to vector<32x96xbf16>
    %c1_181 = arith.constant 1 : index
    %c1_182 = arith.constant 1 : index
    %c0_183 = arith.constant 0 : index
    %c0_184 = arith.constant 0 : index
    %442 = vector.load %arg6[%c1_181, %c1_182, %c0_183, %c0_184] : memref<2x2x32x64xbf16, #tpu.memory_space<vmem>>, vector<1x1x32x64xbf16>
    %443 = vector.shape_cast %442 : vector<1x1x32x64xbf16> to vector<32x64xbf16>
    %c1_185 = arith.constant 1 : index
    %c1_186 = arith.constant 1 : index
    %c0_187 = arith.constant 0 : index
    %c0_188 = arith.constant 0 : index
    %444 = vector.load %arg7[%c1_185, %c1_186, %c0_187, %c0_188] : memref<2x2x32x32xbf16, #tpu.memory_space<vmem>>, vector<1x1x32x32xbf16>
    %445 = vector.shape_cast %444 : vector<1x1x32x32xbf16> to vector<32x32xbf16>
    %c1_189 = arith.constant 1 : index
    %c1_190 = arith.constant 1 : index
    %c0_191 = arith.constant 0 : index
    %c0_192 = arith.constant 0 : index
    %446 = vector.load %arg8[%c1_189, %c1_190, %c0_191, %c0_192] : memref<2x2x1x96xf32, #tpu.memory_space<vmem>>, vector<1x1x1x96xf32>
    %447 = vector.shape_cast %446 : vector<1x1x1x96xf32> to vector<1x96xf32>
    %448 = arith.truncf %439 : vector<8x32xf32> to vector<8x32xbf16>
    %cst_193 = arith.constant dense<0.000000e+00> : vector<8x96xf32>
    %449 = tpu.matmul %448, %441, %cst_193 {dimension_numbers = #tpu.dot_dimension_numbers<[1], [0], [0], [1], [0, 0, 1, 1], [], []>} : vector<8x32xbf16>, vector<32x96xbf16>, vector<8x96xf32> -> vector<8x96xf32>
    %450 = vector.broadcast %447 : vector<1x96xf32> to vector<8x96xf32>
    %451 = arith.addf %449, %450 : vector<8x96xf32>
    %452 = arith.truncf %397 : vector<8x32xf32> to vector<8x32xbf16>
    %cst_194 = arith.constant dense<0.000000e+00> : vector<8x64xf32>
    %453 = tpu.matmul %452, %443, %cst_194 {dimension_numbers = #tpu.dot_dimension_numbers<[1], [0], [0], [1], [0, 0, 1, 1], [], []>} : vector<8x32xbf16>, vector<32x64xbf16>, vector<8x64xf32> -> vector<8x64xf32>
    %454 = vector.extract_strided_slice %451 {offsets = [0, 0], sizes = [8, 32], strides = [1, 1]} : vector<8x96xf32> to vector<8x32xf32>
    %455 = vector.extract_strided_slice %453 {offsets = [0, 0], sizes = [8, 32], strides = [1, 1]} : vector<8x64xf32> to vector<8x32xf32>
    %456 = arith.addf %454, %455 : vector<8x32xf32>
    %457 = arith.negf %456 : vector<8x32xf32>
    %458 = math.exp %457 : vector<8x32xf32>
    %cst_195 = arith.constant 1.000000e+00 : f32
    %459 = vector.broadcast %cst_195 : f32 to vector<8x32xf32>
    %460 = arith.addf %459, %458 : vector<8x32xf32>
    %461 = arith.divf %459, %460 : vector<8x32xf32>
    %462 = vector.extract_strided_slice %451 {offsets = [0, 32], sizes = [8, 32], strides = [1, 1]} : vector<8x96xf32> to vector<8x32xf32>
    %463 = vector.extract_strided_slice %453 {offsets = [0, 32], sizes = [8, 32], strides = [1, 1]} : vector<8x64xf32> to vector<8x32xf32>
    %464 = arith.addf %462, %463 : vector<8x32xf32>
    %465 = arith.negf %464 : vector<8x32xf32>
    %466 = math.exp %465 : vector<8x32xf32>
    %cst_196 = arith.constant 1.000000e+00 : f32
    %467 = vector.broadcast %cst_196 : f32 to vector<8x32xf32>
    %468 = arith.addf %467, %466 : vector<8x32xf32>
    %469 = arith.divf %467, %468 : vector<8x32xf32>
    %470 = vector.extract_strided_slice %451 {offsets = [0, 64], sizes = [8, 32], strides = [1, 1]} : vector<8x96xf32> to vector<8x32xf32>
    %471 = arith.mulf %461, %397 : vector<8x32xf32>
    %472 = arith.truncf %471 : vector<8x32xf32> to vector<8x32xbf16>
    %cst_197 = arith.constant dense<0.000000e+00> : vector<8x32xf32>
    %473 = tpu.matmul %472, %445, %cst_197 {dimension_numbers = #tpu.dot_dimension_numbers<[1], [0], [0], [1], [0, 0, 1, 1], [], []>} : vector<8x32xbf16>, vector<32x32xbf16>, vector<8x32xf32> -> vector<8x32xf32>
    %474 = arith.addf %470, %473 : vector<8x32xf32>
    %475 = math.tanh %474 : vector<8x32xf32>
    %cst_198 = arith.constant 1.000000e+00 : f32
    %476 = vector.broadcast %cst_198 : f32 to vector<8x32xf32>
    %477 = arith.subf %476, %469 : vector<8x32xf32>
    %478 = arith.mulf %477, %397 : vector<8x32xf32>
    %479 = arith.mulf %469, %475 : vector<8x32xf32>
    %480 = arith.addf %478, %479 : vector<8x32xf32>
    %c0_199 = arith.constant 0 : index
    %c0_200 = arith.constant 0 : index
    %481 = vector.load %arg13[%c0_199, %c0_200] : memref<8x32xf32, #tpu.memory_space<vmem>>, vector<8x32xf32>
    tpu.vector_store %arg13[%c0_199, %c0_200], %480 {strides = array<i32>} : memref<8x32xf32, #tpu.memory_space<vmem>>, vector<8x32xf32>,
    return
  }
}

</mosaic_0001>

<llo_original>
// kernel: fwd.1
$region0: #{fwd.1}
  #allocation0 [shape = 'u32[]', space=smem, size = 0x4, offset = 0x4, fixed_abs, tag = 'smem constant byte address 0x4 - core index']
  #allocation1 [shape = 'u32[144,128]{1,0:T(1,128)}', space=vmem, size = 0x12000, scoped, tag = 'internal scratch']
  %s0 = inlined_call_operand.hbm [shape: f32[8,32], index: 0, kind: input, shape index: {}]
  %s1 = inlined_call_operand.hbm [shape: f32[8,32], index: 1, kind: input, shape index: {}]
  %s2 = inlined_call_operand.hbm [shape: f32[2,4,32], index: 2, kind: input, shape index: {}]
  %s3 = inlined_call_operand.vmem [shape: bf16[2,32,96], index: 3, kind: input, shape index: {}]
  %s4 = inlined_call_operand.hbm [shape: bf16[2,32,32], index: 4, kind: input, shape index: {}]
  %s5 = inlined_call_operand.vmem [shape: bf16[2,2,32,96], index: 5, kind: input, shape index: {}]
  %s6 = inlined_call_operand.hbm [shape: bf16[2,2,32,64], index: 6, kind: input, shape index: {}]
  %s7 = inlined_call_operand.hbm [shape: bf16[2,2,32,32], index: 7, kind: input, shape index: {}]
  %s8 = inlined_call_operand.vmem [shape: f32[2,2,1,96], index: 8, kind: input, shape index: {}]
  %s9 = inlined_call_operand.hbm [shape: bf16[2,32,64], index: 9, kind: input, shape index: {}]
  %s10 = inlined_call_operand.hbm [shape: f32[2,1,64], index: 10, kind: input, shape index: {}]
  %s11 = inlined_call_operand.vmem [shape: bf16[2,64,32], index: 11, kind: input, shape index: {}]
  %s12 = inlined_call_operand.hbm [shape: f32[2,1,32], index: 12, kind: input, shape index: {}]
  %s13 = inlined_call_operand.hbm [shape: f32[8,32], index: 13, kind: output, shape index: {0}]
  %s14 = inlined_call_operand.hbm [shape: f32[2,8,32], index: 14, kind: output, shape index: {1}]
  %15 = xla_tuple %s13, %s14
  %s16 = sld [smem:[#allocation0]]
  $region106: #{fwd.1} parent=0
    _
  %s18 = ssub.s32 1, %s16
  %s19 = scalar_select 0, %s18, %s16
  $region1: #{fwd.1} parent=0
    #allocation2 [shape = 'u8[4096]{0}', space=vmem, size = 0x1000, scoped, tag = 'input window, operand 0, single buffered']
    #allocation3 [shape = 's32[1]{0}', space=sflag, size = 0x4, scoped, tag = 'scoped memory for fwd.1']
    #allocation4 [shape = 's32[1]{0}', space=sflag, size = 0x4, scoped, tag = 'scoped memory for fwd.1']
    #allocation5 [shape = 'u8[4096]{0}', space=vmem, size = 0x1000, scoped, tag = 'input window, operand 1, single buffered']
    #allocation6 [shape = 's32[1]{0}', space=sflag, size = 0x4, scoped, tag = 'scoped memory for fwd.1']
    #allocation7 [shape = 'u8[4096]{0}', space=vmem, size = 0x1000, scoped, tag = 'input window, operand 2, single buffered']
    #allocation8 [shape = 'u8[16384]{0}', space=vmem, size = 0x4000, scoped, tag = 'input window, operand 4, single buffered']
    #allocation9 [shape = 's32[1]{0}', space=sflag, size = 0x4, scoped, tag = 'scoped memory for fwd.1']
    #allocation10 [shape = 'u8[32768]{0}', space=vmem, size = 0x8000, scoped, tag = 'input window, operand 6, single buffered']
    #allocation11 [shape = 'u8[32768]{0}', space=vmem, size = 0x8000, scoped, tag = 'input window, operand 7, single buffered']
    #allocation12 [shape = 's32[1]{0}', space=sflag, size = 0x4, scoped, tag = 'scoped memory for fwd.1']
    #allocation13 [shape = 'u8[16384]{0}', space=vmem, size = 0x4000, scoped, tag = 'input window, operand 9, single buffered']
    #allocation14 [shape = 'u8[1024]{0}', space=vmem, size = 0x400, scoped, tag = 'input window, operand 10, single buffered']
    #allocation15 [shape = 's32[1]{0}', space=sflag, size = 0x4, scoped, tag = 'scoped memory for fwd.1']
    #allocation16 [shape = 'u8[1024]{0}', space=vmem, size = 0x400, scoped, tag = 'input window, operand 12, single buffered']
    #allocation17 [shape = 'u8[4096]{0}', space=vmem, size = 0x1000, scoped, tag = 'output window, operand 0, single buffered']
    #allocation18 [shape = 'u8[8192]{0}', space=vmem, size = 0x2000, scoped, tag = 'output window, operand 1, single buffered']
    #allocation19 [shape = 's32[1]{0}', space=sflag, size = 0x4, scoped, tag = 'scoped memory for fwd.1']
    %20 = vsyncpa [#allocation3], 0
    %21 = vsyncpa [#allocation6], 0
    %22 = vsyncpa [#allocation9], 0
    %23 = vsyncpa [#allocation12], 0
    %24 = vsyncpa [#allocation15], 0
    %25 = vsyncpa [#allocation4], 0
    %26 = vsyncpa [#allocation19], 0
    // Predicated region
    $region2: #{fwd.1} parent=1 // pred_check
      _
    $region3: #{fwd.1} parent=1 // pred_check_branch
      %28 = sbr.rel (0) target = $region5
    $region4: #{fwd.1} parent=1 // pred_region
      %s30 = ssub.s32 128, 128
      %31 = vsyncadd [#allocation3], %s30
      %s33 = sshll.u32 [#allocation2], 4
      %s34 = int_to_ptr.vmem [resolvable:$true] %s33
      %36 = dma.hbm_to_vmem [thread:$0]  %s0, 128, %s34, [#allocation3]
    $region5: #{fwd.1} parent=1 // pred_fallthru
      _
    // Predicated region
    $region6: #{fwd.1} parent=1 // pred_check
      _
    $region7: #{fwd.1} parent=1 // pred_check_branch
      %38 = sbr.rel (0) target = $region9
    $region8: #{fwd.1} parent=1 // pred_region
      %s40 = ssub.s32 128, 128
      %41 = vsyncadd [#allocation6], %s40
      %s43 = sshll.u32 [#allocation5], 4
      %s44 = int_to_ptr.vmem [resolvable:$true] %s43
      %46 = dma.hbm_to_vmem [thread:$0]  %s1, 128, %s44, [#allocation6]
    $region9: #{fwd.1} parent=1 // pred_fallthru
      _
    // Predicated region
    $region10: #{fwd.1} parent=1 // pred_check
      _
    $region11: #{fwd.1} parent=1 // pred_check_branch
      %48 = sbr.rel (0) target = $region13
    $region12: #{fwd.1} parent=1 // pred_region
      %s50 = ssub.s32 128, 128
      %51 = vsyncadd [#allocation6], %s50
      %s52 = sshll.u32 [#allocation7], 4
      %s53 = int_to_ptr.vmem [resolvable:$true] %s52
      %58 = dma.hbm_to_vmem [thread:$0]  %s2, 128, %s53, [#allocation6], 64, 64, 4
    $region13: #{fwd.1} parent=1 // pred_fallthru
      _
    // Predicated region
    $region14: #{fwd.1} parent=1 // pred_check
      _
    $region15: #{fwd.1} parent=1 // pred_check_branch
      %60 = sbr.rel (0) target = $region17
    $region16: #{fwd.1} parent=1 // pred_region
      _
    $region17: #{fwd.1} parent=1 // pred_fallthru
      _
    // Predicated region
    $region18: #{fwd.1} parent=1 // pred_check
      _
    $region19: #{fwd.1} parent=1 // pred_check_branch
      %62 = sbr.rel (0) target = $region21
    $region20: #{fwd.1} parent=1 // pred_region
      %s64 = ssub.s32 512, 512
      %65 = vsyncadd [#allocation9], %s64
      %s66 = sshll.u32 [#allocation8], 4
      %s67 = int_to_ptr.vmem [resolvable:$true] %s66
      %72 = dma.hbm_to_vmem [thread:$0]  %s4, 512, %s67, [#allocation9], 64, 64, 4
    $region21: #{fwd.1} parent=1 // pred_fallthru
      _
    // Predicated region
    $region22: #{fwd.1} parent=1 // pred_check
      _
    $region23: #{fwd.1} parent=1 // pred_check_branch
      %74 = sbr.rel (0) target = $region25
    $region24: #{fwd.1} parent=1 // pred_region
      _
    $region25: #{fwd.1} parent=1 // pred_fallthru
      _
    // Predicated region
    $region26: #{fwd.1} parent=1 // pred_check
      _
    $region27: #{fwd.1} parent=1 // pred_check_branch
      %76 = sbr.rel (0) target = $region29
    $region28: #{fwd.1} parent=1 // pred_region
      %s78 = ssub.s32 1024, 1024
      %79 = vsyncadd [#allocation9], %s78
      %s80 = sshll.u32 [#allocation10], 4
      %s81 = int_to_ptr.vmem [resolvable:$true] %s80
      %86 = dma.hbm_to_vmem [thread:$0]  %s6, 1024, %s81, [#allocation9], 64, 64, 4
    $region29: #{fwd.1} parent=1 // pred_fallthru
      _
    // Predicated region
    $region30: #{fwd.1} parent=1 // pred_check
      _
    $region31: #{fwd.1} parent=1 // pred_check_branch
      %88 = sbr.rel (0) target = $region33
    $region32: #{fwd.1} parent=1 // pred_region
      %s90 = ssub.s32 1024, 1024
      %91 = vsyncadd [#allocation12], %s90
      %s92 = sshll.u32 [#allocation11], 4
      %s93 = int_to_ptr.vmem [resolvable:$true] %s92
      %98 = dma.hbm_to_vmem [thread:$0]  %s7, 1024, %s93, [#allocation12], 64, 64, 4
    $region33: #{fwd.1} parent=1 // pred_fallthru
      _
    // Predicated region
    $region34: #{fwd.1} parent=1 // pred_check
      _
    $region35: #{fwd.1} parent=1 // pred_check_branch
      %100 = sbr.rel (0) target = $region37
    $region36: #{fwd.1} parent=1 // pred_region
      _
    $region37: #{fwd.1} parent=1 // pred_fallthru
      _
    // Predicated region
    $region38: #{fwd.1} parent=1 // pred_check
      _
    $region39: #{fwd.1} parent=1 // pred_check_branch
      %102 = sbr.rel (0) target = $region41
    $region40: #{fwd.1} parent=1 // pred_region
      %s104 = ssub.s32 512, 512
      %105 = vsyncadd [#allocation12], %s104
      %s106 = sshll.u32 [#allocation13], 4
      %s107 = int_to_ptr.vmem [resolvable:$true] %s106
      %112 = dma.hbm_to_vmem [thread:$0]  %s9, 512, %s107, [#allocation12], 64, 64, 4
    $region41: #{fwd.1} parent=1 // pred_fallthru
      _
    // Predicated region
    $region42: #{fwd.1} parent=1 // pred_check
      _
    $region43: #{fwd.1} parent=1 // pred_check_branch
      %114 = sbr.rel (0) target = $region45
    $region44: #{fwd.1} parent=1 // pred_region
      %s116 = ssub.s32 32, 32
      %117 = vsyncadd [#allocation15], %s116
      %s118 = sshll.u32 [#allocation14], 4
      %s119 = int_to_ptr.vmem [resolvable:$true] %s118
      %124 = dma.hbm_to_vmem [thread:$0]  %s10, 32, %s119, [#allocation15], 16, 16, 1
    $region45: #{fwd.1} parent=1 // pred_fallthru
      _
    // Predicated region
    $region46: #{fwd.1} parent=1 // pred_check
      _
    $region47: #{fwd.1} parent=1 // pred_check_branch
      %126 = sbr.rel (0) target = $region49
    $region48: #{fwd.1} parent=1 // pred_region
      _
    $region49: #{fwd.1} parent=1 // pred_fallthru
      _
    // Predicated region
    $region50: #{fwd.1} parent=1 // pred_check
      _
    $region51: #{fwd.1} parent=1 // pred_check_branch
      %128 = sbr.rel (0) target = $region53
    $region52: #{fwd.1} parent=1 // pred_region
      %s130 = ssub.s32 32, 32
      %131 = vsyncadd [#allocation15], %s130
      %s132 = sshll.u32 [#allocation16], 4
      %s133 = int_to_ptr.vmem [resolvable:$true] %s132
      %138 = dma.hbm_to_vmem [thread:$0]  %s12, 32, %s133, [#allocation15], 16, 16, 1
    $region53: #{fwd.1} parent=1 // pred_fallthru
      _
    // Predicated region
    $region54: #{fwd.1} parent=1 // pred_check
      _
    $region55: #{fwd.1} parent=1 // pred_check_branch
      %140 = sbr.rel (0) target = $region57
    $region56: #{fwd.1} parent=1 // pred_region
      %141 = dma.done [#allocation3], 128
    $region57: #{fwd.1} parent=1 // pred_fallthru
      _
    // Predicated region
    $region58: #{fwd.1} parent=1 // pred_check
      _
    $region59: #{fwd.1} parent=1 // pred_check_branch
      %143 = sbr.rel (0) target = $region61
    $region60: #{fwd.1} parent=1 // pred_region
      %144 = dma.done [#allocation6], 128
    $region61: #{fwd.1} parent=1 // pred_fallthru
      _
    // Predicated region
    $region62: #{fwd.1} parent=1 // pred_check
      _
    $region63: #{fwd.1} parent=1 // pred_check_branch
      %146 = sbr.rel (0) target = $region65
    $region64: #{fwd.1} parent=1 // pred_region
      %147 = dma.done [#allocation6], 128
    $region65: #{fwd.1} parent=1 // pred_fallthru
      _
    // Predicated region
    $region66: #{fwd.1} parent=1 // pred_check
      _
    $region67: #{fwd.1} parent=1 // pred_check_branch
      %149 = sbr.rel (0) target = $region69
    $region68: #{fwd.1} parent=1 // pred_region
      %150 = dma.done [#allocation9], 512
    $region69: #{fwd.1} parent=1 // pred_fallthru
      _
    // Predicated region
    $region70: #{fwd.1} parent=1 // pred_check
      _
    $region71: #{fwd.1} parent=1 // pred_check_branch
      %152 = sbr.rel (0) target = $region73
    $region72: #{fwd.1} parent=1 // pred_region
      %153 = dma.done [#allocation9], 1024
    $region73: #{fwd.1} parent=1 // pred_fallthru
      _
    // Predicated region
    $region74: #{fwd.1} parent=1 // pred_check
      _
    $region75: #{fwd.1} parent=1 // pred_check_branch
      %155 = sbr.rel (0) target = $region77
    $region76: #{fwd.1} parent=1 // pred_region
      %156 = dma.done [#allocation12], 1024
    $region77: #{fwd.1} parent=1 // pred_fallthru
      _
    // Predicated region
    $region78: #{fwd.1} parent=1 // pred_check
      _
    $region79: #{fwd.1} parent=1 // pred_check_branch
      %158 = sbr.rel (0) target = $region81
    $region80: #{fwd.1} parent=1 // pred_region
      %159 = dma.done [#allocation12], 512
    $region81: #{fwd.1} parent=1 // pred_fallthru
      _
    // Predicated region
    $region82: #{fwd.1} parent=1 // pred_check
      _
    $region83: #{fwd.1} parent=1 // pred_check_branch
      %161 = sbr.rel (0) target = $region85
    $region84: #{fwd.1} parent=1 // pred_region
      %162 = dma.done [#allocation15], 32
    $region85: #{fwd.1} parent=1 // pred_fallthru
      _
    // Predicated region
    $region86: #{fwd.1} parent=1 // pred_check
      _
    $region87: #{fwd.1} parent=1 // pred_check_branch
      %164 = sbr.rel (0) target = $region89
    $region88: #{fwd.1} parent=1 // pred_region
      %165 = dma.done [#allocation15], 32
    $region89: #{fwd.1} parent=1 // pred_fallthru
      _
    %v167 = vld [vmem:[#allocation2] sm:$0xff]
    %v168 = vld [vmem:[#allocation5] sm:$0xff]
    %v169 = vadd.f32 %v167, %v168
    %v170 = vld [vmem:[#allocation7] sm:$0xf]
    %vm171 = vcmask 261120
    %v172 = vsel %vm171, %v169, 0.0
    %173 = vadd.xlane.f32.xlu0 %v172
    %v174 = vpop.xlane.xlu0 %173
    %v175 = vrcp.pop 32.0
    %v176 = vmul.f32 %v174, %v175
    %v177 = vsub.f32 %v169, %v176
    %v178 = vmul.f32 %v177, %v177
    %v179 = vsel %vm171, %v178, 0.0
    %180 = vadd.xlane.f32.xlu0 %v179
    %v181 = vpop.xlane.xlu0 %180
    %v182 = vmul.f32 %v181, %v175
    %v183 = vadd.f32 %v182, 1e-06
    %v184 = vrsqrt.pop %v183
    %v185 = vmul.f32 %v177, %v184
    %v186 = vlaneseq
    %v187 = vshrl.u32 %v186, 7
    %v188 = vsub.s32 0, %v187
    %v189 = vrot.slane %v170, %v188
    %v190 = vmul.f32 %v185, %v189
    %v191 = vlaneseq
    %v192 = vshrl.u32 %v191, 7
    %v193 = vsub.s32 1, %v192
    %v194 = vrot.slane %v170, %v193
    %v195 = vadd.f32 %v190, %v194
    %v196 = vpack.c.bf16 %v195, %v195
    %v197 = vld [vmem:[%s3] sm:$0xf]
    %v198 = vld [vmem:[%s3 + $0x4] sm:$0xf]
    %v199 = vld [vmem:[%s3 + $0x8] sm:$0xf]
    %v200 = vld [vmem:[%s3 + $0xc] sm:$0xf]
    %v205 = vunpack.c.l.b16 %v197
    %v206 = vunpack.c.l.b16 %v198
    %v207 = vunpack.c.l.b16 %v199
    %v208 = vunpack.c.l.b16 %v200
    %v209 = vpack.c.b16 %v206, %v205
    %v210 = vpack.c.b16 %v208, %v207
    %v214 = vsel %vm171, %v196, 0
    %216 = vmatprep.subr.bf16.mxu0 0
    %217 = vmatpush1.bf16.msra.mxu0 %v209
    %218 = vmatprep.subr.bf16.mxu0 0
    %219 = vmatpush1.bf16.msra.mxu0 %v210
    %220 = vmatprep.subr.bf16.mxu0 0
    %221 = vmatpush1.bf16.msra.mxu0 0
    %222 = vmatprep.subr.bf16.mxu0 0
    %223 = vmatpush1.bf16.msra.mxu0 0
    %224 = vmatprep.subr.bf16.mxu0 0
    %225 = vmatpush1.bf16.msra.mxu0 0
    %226 = vmatprep.subr.bf16.mxu0 0
    %227 = vmatpush1.bf16.msra.mxu0 0
    %228 = vmatprep.subr.bf16.mxu0 0
    %229 = vmatpush1.bf16.msra.mxu0 0
    %230 = vmatprep.subr.bf16.mxu0 0
    %231 = vmatpush1.bf16.msra.mxu0 0
    %232 = vmatprep.subr.bf16.mxu0 0
    %233 = vmatpush1.bf16.msra.mxu0 0
    %234 = vmatprep.subr.bf16.mxu0 0
    %235 = vmatpush1.bf16.msra.mxu0 0
    %236 = vmatprep.subr.bf16.mxu0 0
    %237 = vmatpush1.bf16.msra.mxu0 0
    %238 = vmatprep.subr.bf16.mxu0 0
    %239 = vmatpush1.bf16.msra.mxu0 0
    %240 = vmatprep.subr.bf16.mxu0 0
    %241 = vmatpush1.bf16.msra.mxu0 0
    %242 = vmatprep.subr.bf16.mxu0 0
    %243 = vmatpush1.bf16.msra.mxu0 0
    %244 = vmatprep.subr.bf16.mxu0 0
    %245 = vmatpush1.bf16.msra.mxu0 0
    %246 = vmatprep.subr.bf16.mxu0 0
    %247 = vmatpush1.bf16.msra.mxu0 0
    %248 = vmatprep.mubr.bf16.mxu0 0
    %249 = vmatmul.mubr.bf16.gmra.mrb[0].mxu0 %v214
    %v250 = vpop.f32.mrb[0].mxu0
    %v251 = vadd.f32 0.0, %v250
    %v252 = vpop.f32.mrb[0].mxu0
    %v253 = vpop.f32.mrb[0].mxu0
    %v254 = vpop.f32.mrb[0].mxu0
    %255 = vdwg.mxu0
    %v256 = vpack.c.bf16 %v251, %v251
    %258 = vrot.lane.b32.xlu0 %v256, 96
    %v259 = vpop.permute.xlu0 %258
    %vm260 = vcmask 64512
    %v262 = vsel %vm260, %v256, 0
    %v265 = vsel %vm260, %v259, 0
    %267 = vmatprep.subr.bf16.mxu0 0
    %268 = vmatpush1.bf16.xpose.msra.mxu0 %v265
    %269 = vmatprep.subr.bf16.mxu0 0
    %270 = vmatpush1.bf16.xpose.msra.mxu0 0
    %271 = vmatprep.subr.bf16.mxu0 0
    %272 = vmatpush1.bf16.xpose.msra.mxu0 0
    %273 = vmatprep.subr.bf16.mxu0 0
    %274 = vmatpush1.bf16.xpose.msra.mxu0 0
    %275 = vmatprep.subr.bf16.mxu0 0
    %276 = vmatpush1.bf16.xpose.msra.mxu0 0
    %277 = vmatprep.subr.bf16.mxu0 0
    %278 = vmatpush1.bf16.xpose.msra.mxu0 0
    %279 = vmatprep.subr.bf16.mxu0 0
    %280 = vmatpush1.bf16.xpose.msra.mxu0 0
    %281 = vmatprep.subr.bf16.mxu0 0
    %282 = vmatpush1.bf16.xpose.msra.mxu0 0
    %283 = vmatprep.subr.bf16.mxu0 0
    %284 = vmatpush1.bf16.xpose.msra.mxu0 0
    %285 = vmatprep.subr.bf16.mxu0 0
    %286 = vmatpush1.bf16.xpose.msra.mxu0 0
    %287 = vmatprep.subr.bf16.mxu0 0
    %288 = vmatpush1.bf16.xpose.msra.mxu0 0
    %289 = vmatprep.subr.bf16.mxu0 0
    %290 = vmatpush1.bf16.xpose.msra.mxu0 0
    %291 = vmatprep.subr.bf16.mxu0 0
    %292 = vmatpush1.bf16.xpose.msra.mxu0 0
    %293 = vmatprep.subr.bf16.mxu0 0
    %294 = vmatpush1.bf16.xpose.msra.mxu0 0
    %295 = vmatprep.subr.bf16.mxu0 0
    %296 = vmatpush1.bf16.xpose.msra.mxu0 0
    %297 = vmatprep.subr.bf16.mxu0 0
    %298 = vmatpush1.bf16.xpose.msra.mxu0 0
    %299 = vmatprep.mubr.bf16.mxu0 0
    %300 = vmatmul.mubr.bf16.gmra.mrb[0].mxu0 %v262
    %v301 = vpop.f32.mrb[0].mxu0
    %v302 = vadd.f32 0.0, %v301
    %v303 = vpop.f32.mrb[0].mxu0
    %v304 = vpop.f32.mrb[0].mxu0
    %v305 = vpop.f32.mrb[0].mxu0
    %306 = vdwg.mxu0
    %v307 = vsel %vm260, %v302, -inf
    %308 = vmax.xlane.f32.xlu0 %v307
    %v309 = vpop.xlane.xlu0 %308
    %v310 = vsub.f32 %v302, %v309
    %v311 = vmul.f32 %v310, 1.442695
    %v312 = vpow.pop %v311
    %v313 = vsel %vm260, %v312, 0.0
    %314 = vadd.xlane.f32.xlu0 %v313
    %v315 = vpop.xlane.xlu0 %314
    %v316 = vrcp.pop %v315
    %v317 = vmul.f32 %v312, %v316
    %v318 = vpack.c.bf16 %v317, %v317
    %319 = vrot.lane.b32.xlu0 %v256, 64
    %v320 = vpop.permute.xlu0 %319
    %v322 = vsel %vm260, %v318, 0
    %vm324 = vcmask 1043456
    %v326 = vsel %vm324, %v320, 0
    %328 = vmatprep.subr.bf16.mxu0 0
    %329 = vmatpush1.bf16.msra.mxu0 %v326
    %330 = vmatprep.subr.bf16.mxu0 0
    %331 = vmatpush1.bf16.msra.mxu0 0
    %332 = vmatprep.subr.bf16.mxu0 0
    %333 = vmatpush1.bf16.msra.mxu0 0
    %334 = vmatprep.subr.bf16.mxu0 0
    %335 = vmatpush1.bf16.msra.mxu0 0
    %336 = vmatprep.subr.bf16.mxu0 0
    %337 = vmatpush1.bf16.msra.mxu0 0
    %338 = vmatprep.subr.bf16.mxu0 0
    %339 = vmatpush1.bf16.msra.mxu0 0
    %340 = vmatprep.subr.bf16.mxu0 0
    %341 = vmatpush1.bf16.msra.mxu0 0
    %342 = vmatprep.subr.bf16.mxu0 0
    %343 = vmatpush1.bf16.msra.mxu0 0
    %344 = vmatprep.subr.bf16.mxu0 0
    %345 = vmatpush1.bf16.msra.mxu0 0
    %346 = vmatprep.subr.bf16.mxu0 0
    %347 = vmatpush1.bf16.msra.mxu0 0
    %348 = vmatprep.subr.bf16.mxu0 0
    %349 = vmatpush1.bf16.msra.mxu0 0
    %350 = vmatprep.subr.bf16.mxu0 0
    %351 = vmatpush1.bf16.msra.mxu0 0
    %352 = vmatprep.subr.bf16.mxu0 0
    %353 = vmatpush1.bf16.msra.mxu0 0
    %354 = vmatprep.subr.bf16.mxu0 0
    %355 = vmatpush1.bf16.msra.mxu0 0
    %356 = vmatprep.subr.bf16.mxu0 0
    %357 = vmatpush1.bf16.msra.mxu0 0
    %358 = vmatprep.subr.bf16.mxu0 0
    %359 = vmatpush1.bf16.msra.mxu0 0
    %360 = vmatprep.mubr.bf16.mxu0 0
    %361 = vmatmul.mubr.bf16.gmra.mrb[0].mxu0 %v322
    %v362 = vpop.f32.mrb[0].mxu0
    %v363 = vadd.f32 0.0, %v362
    %v364 = vpop.f32.mrb[0].mxu0
    %v365 = vpop.f32.mrb[0].mxu0
    %v366 = vpop.f32.mrb[0].mxu0
    %367 = vdwg.mxu0
    %368 = vrot.lane.b32.xlu0 %v256, 120
    %v369 = vpop.permute.xlu0 %368
    %370 = vrot.lane.b32.xlu0 %v256, 88
    %v371 = vpop.permute.xlu0 %370
    %v373 = vsel %vm260, %v369, 0
    %v376 = vsel %vm260, %v371, 0
    %378 = vmatprep.subr.bf16.mxu0 0
    %379 = vmatpush1.bf16.xpose.msra.mxu0 %v376
    %380 = vmatprep.subr.bf16.mxu0 0
    %381 = vmatpush1.bf16.xpose.msra.mxu0 0
    %382 = vmatprep.subr.bf16.mxu0 0
    %383 = vmatpush1.bf16.xpose.msra.mxu0 0
    %384 = vmatprep.subr.bf16.mxu0 0
    %385 = vmatpush1.bf16.xpose.msra.mxu0 0
    %386 = vmatprep.subr.bf16.mxu0 0
    %387 = vmatpush1.bf16.xpose.msra.mxu0 0
    %388 = vmatprep.subr.bf16.mxu0 0
    %389 = vmatpush1.bf16.xpose.msra.mxu0 0
    %390 = vmatprep.subr.bf16.mxu0 0
    %391 = vmatpush1.bf16.xpose.msra.mxu0 0
    %392 = vmatprep.subr.bf16.mxu0 0
    %393 = vmatpush1.bf16.xpose.msra.mxu0 0
    %394 = vmatprep.subr.bf16.mxu0 0
    %395 = vmatpush1.bf16.xpose.msra.mxu0 0
    %396 = vmatprep.subr.bf16.mxu0 0
    %397 = vmatpush1.bf16.xpose.msra.mxu0 0
    %398 = vmatprep.subr.bf16.mxu0 0
    %399 = vmatpush1.bf16.xpose.msra.mxu0 0
    %400 = vmatprep.subr.bf16.mxu0 0
    %401 = vmatpush1.bf16.xpose.msra.mxu0 0
    %402 = vmatprep.subr.bf16.mxu0 0
    %403 = vmatpush1.bf16.xpose.msra.mxu0 0
    %404 = vmatprep.subr.bf16.mxu0 0
    %405 = vmatpush1.bf16.xpose.msra.mxu0 0
    %406 = vmatprep.subr.bf16.mxu0 0
    %407 = vmatpush1.bf16.xpose.msra.mxu0 0
    %408 = vmatprep.subr.bf16.mxu0 0
    %409 = vmatpush1.bf16.xpose.msra.mxu0 0
    %410 = vmatprep.mubr.bf16.mxu0 0
    %411 = vmatmul.mubr.bf16.gmra.mrb[0].mxu0 %v373
    %v412 = vpop.f32.mrb[0].mxu0
    %v413 = vadd.f32 0.0, %v412
    %v414 = vpop.f32.mrb[0].mxu0
    %v415 = vpop.f32.mrb[0].mxu0
    %v416 = vpop.f32.mrb[0].mxu0
    %417 = vdwg.mxu0
    %v418 = vsel %vm260, %v413, -inf
    %419 = vmax.xlane.f32.xlu0 %v418
    %v420 = vpop.xlane.xlu0 %419
    %v421 = vsub.f32 %v413, %v420
    %v422 = vmul.f32 %v421, 1.442695
    %v423 = vpow.pop %v422
    %v424 = vsel %vm260, %v423, 0.0
    %425 = vadd.xlane.f32.xlu0 %v424
    %v426 = vpop.xlane.xlu0 %425
    %v427 = vrcp.pop %v426
    %v428 = vmul.f32 %v423, %v427
    %v429 = vpack.c.bf16 %v428, %v428
    %430 = vrot.lane.b32.xlu0 %v256, 56
    %v431 = vpop.permute.xlu0 %430
    %v433 = vsel %vm260, %v429, 0
    %v436 = vsel %vm324, %v431, 0
    %438 = vmatprep.subr.bf16.mxu0 0
    %439 = vmatpush1.bf16.msra.mxu0 %v436
    %440 = vmatprep.subr.bf16.mxu0 0
    %441 = vmatpush1.bf16.msra.mxu0 0
    %442 = vmatprep.subr.bf16.mxu0 0
    %443 = vmatpush1.bf16.msra.mxu0 0
    %444 = vmatprep.subr.bf16.mxu0 0
    %445 = vmatpush1.bf16.msra.mxu0 0
    %446 = vmatprep.subr.bf16.mxu0 0
    %447 = vmatpush1.bf16.msra.mxu0 0
    %448 = vmatprep.subr.bf16.mxu0 0
    %449 = vmatpush1.bf16.msra.mxu0 0
    %450 = vmatprep.subr.bf16.mxu0 0
    %451 = vmatpush1.bf16.msra.mxu0 0
    %452 = vmatprep.subr.bf16.mxu0 0
    %453 = vmatpush1.bf16.msra.mxu0 0
    %454 = vmatprep.subr.bf16.mxu0 0
    %455 = vmatpush1.bf16.msra.mxu0 0
    %456 = vmatprep.subr.bf16.mxu0 0
    %457 = vmatpush1.bf16.msra.mxu0 0
    %458 = vmatprep.subr.bf16.mxu0 0
    %459 = vmatpush1.bf16.msra.mxu0 0
    %460 = vmatprep.subr.bf16.mxu0 0
    %461 = vmatpush1.bf16.msra.mxu0 0
    %462 = vmatprep.subr.bf16.mxu0 0
    %463 = vmatpush1.bf16.msra.mxu0 0
    %464 = vmatprep.subr.bf16.mxu0 0
    %465 = vmatpush1.bf16.msra.mxu0 0
    %466 = vmatprep.subr.bf16.mxu0 0
    %467 = vmatpush1.bf16.msra.mxu0 0
    %468 = vmatprep.subr.bf16.mxu0 0
    %469 = vmatpush1.bf16.msra.mxu0 0
    %470 = vmatprep.mubr.bf16.mxu0 0
    %471 = vmatmul.mubr.bf16.gmra.mrb[0].mxu0 %v433
    %v472 = vpop.f32.mrb[0].mxu0
    %v473 = vadd.f32 0.0, %v472
    %v474 = vpop.f32.mrb[0].mxu0
    %v475 = vpop.f32.mrb[0].mxu0
    %v476 = vpop.f32.mrb[0].mxu0
    %477 = vdwg.mxu0
    %478 = vrot.lane.b32.xlu0 %v256, 112
    %v479 = vpop.permute.xlu0 %478
    %480 = vrot.lane.b32.xlu0 %v256, 80
    %v481 = vpop.permute.xlu0 %480
    %v483 = vsel %vm260, %v479, 0
    %v486 = vsel %vm260, %v481, 0
    %488 = vmatprep.subr.bf16.mxu0 0
    %489 = vmatpush1.bf16.xpose.msra.mxu0 %v486
    %490 = vmatprep.subr.bf16.mxu0 0
    %491 = vmatpush1.bf16.xpose.msra.mxu0 0
    %492 = vmatprep.subr.bf16.mxu0 0
    %493 = vmatpush1.bf16.xpose.msra.mxu0 0
    %494 = vmatprep.subr.bf16.mxu0 0
    %495 = vmatpush1.bf16.xpose.msra.mxu0 0
    %496 = vmatprep.subr.bf16.mxu0 0
    %497 = vmatpush1.bf16.xpose.msra.mxu0 0
    %498 = vmatprep.subr.bf16.mxu0 0
    %499 = vmatpush1.bf16.xpose.msra.mxu0 0
    %500 = vmatprep.subr.bf16.mxu0 0
    %501 = vmatpush1.bf16.xpose.msra.mxu0 0
    %502 = vmatprep.subr.bf16.mxu0 0
    %503 = vmatpush1.bf16.xpose.msra.mxu0 0
    %504 = vmatprep.subr.bf16.mxu0 0
    %505 = vmatpush1.bf16.xpose.msra.mxu0 0
    %506 = vmatprep.subr.bf16.mxu0 0
    %507 = vmatpush1.bf16.xpose.msra.mxu0 0
    %508 = vmatprep.subr.bf16.mxu0 0
    %509 = vmatpush1.bf16.xpose.msra.mxu0 0
    %510 = vmatprep.subr.bf16.mxu0 0
    %511 = vmatpush1.bf16.xpose.msra.mxu0 0
    %512 = vmatprep.subr.bf16.mxu0 0
    %513 = vmatpush1.bf16.xpose.msra.mxu0 0
    %514 = vmatprep.subr.bf16.mxu0 0
    %515 = vmatpush1.bf16.xpose.msra.mxu0 0
    %516 = vmatprep.subr.bf16.mxu0 0
    %517 = vmatpush1.bf16.xpose.msra.mxu0 0
    %518 = vmatprep.subr.bf16.mxu0 0
    %519 = vmatpush1.bf16.xpose.msra.mxu0 0
    %520 = vmatprep.mubr.bf16.mxu0 0
    %521 = vmatmul.mubr.bf16.gmra.mrb[0].mxu0 %v483
    %v522 = vpop.f32.mrb[0].mxu0
    %v523 = vadd.f32 0.0, %v522
    %v524 = vpop.f32.mrb[0].mxu0
    %v525 = vpop.f32.mrb[0].mxu0
    %v526 = vpop.f32.mrb[0].mxu0
    %527 = vdwg.mxu0
    %v528 = vsel %vm260, %v523, -inf
    %529 = vmax.xlane.f32.xlu0 %v528
    %v530 = vpop.xlane.xlu0 %529
    %v531 = vsub.f32 %v523, %v530
    %v532 = vmul.f32 %v531, 1.442695
    %v533 = vpow.pop %v532
    %v534 = vsel %vm260, %v533, 0.0
    %535 = vadd.xlane.f32.xlu0 %v534
    %v536 = vpop.xlane.xlu0 %535
    %v537 = vrcp.pop %v536
    %v538 = vmul.f32 %v533, %v537
    %v539 = vpack.c.bf16 %v538, %v538
    %540 = vrot.lane.b32.xlu0 %v256, 48
    %v541 = vpop.permute.xlu0 %540
    %v543 = vsel %vm260, %v539, 0
    %v546 = vsel %vm324, %v541, 0
    %548 = vmatprep.subr.bf16.mxu0 0
    %549 = vmatpush1.bf16.msra.mxu0 %v546
    %550 = vmatprep.subr.bf16.mxu0 0
    %551 = vmatpush1.bf16.msra.mxu0 0
    %552 = vmatprep.subr.bf16.mxu0 0
    %553 = vmatpush1.bf16.msra.mxu0 0
    %554 = vmatprep.subr.bf16.mxu0 0
    %555 = vmatpush1.bf16.msra.mxu0 0
    %556 = vmatprep.subr.bf16.mxu0 0
    %557 = vmatpush1.bf16.msra.mxu0 0
    %558 = vmatprep.subr.bf16.mxu0 0
    %559 = vmatpush1.bf16.msra.mxu0 0
    %560 = vmatprep.subr.bf16.mxu0 0
    %561 = vmatpush1.bf16.msra.mxu0 0
    %562 = vmatprep.subr.bf16.mxu0 0
    %563 = vmatpush1.bf16.msra.mxu0 0
    %564 = vmatprep.subr.bf16.mxu0 0
    %565 = vmatpush1.bf16.msra.mxu0 0
    %566 = vmatprep.subr.bf16.mxu0 0
    %567 = vmatpush1.bf16.msra.mxu0 0
    %568 = vmatprep.subr.bf16.mxu0 0
    %569 = vmatpush1.bf16.msra.mxu0 0
    %570 = vmatprep.subr.bf16.mxu0 0
    %571 = vmatpush1.bf16.msra.mxu0 0
    %572 = vmatprep.subr.bf16.mxu0 0
    %573 = vmatpush1.bf16.msra.mxu0 0
    %574 = vmatprep.subr.bf16.mxu0 0
    %575 = vmatpush1.bf16.msra.mxu0 0
    %576 = vmatprep.subr.bf16.mxu0 0
    %577 = vmatpush1.bf16.msra.mxu0 0
    %578 = vmatprep.subr.bf16.mxu0 0
    %579 = vmatpush1.bf16.msra.mxu0 0
    %580 = vmatprep.mubr.bf16.mxu0 0
    %581 = vmatmul.mubr.bf16.gmra.mrb[0].mxu0 %v543
    %v582 = vpop.f32.mrb[0].mxu0
    %v583 = vadd.f32 0.0, %v582
    %v584 = vpop.f32.mrb[0].mxu0
    %v585 = vpop.f32.mrb[0].mxu0
    %v586 = vpop.f32.mrb[0].mxu0
    %587 = vdwg.mxu0
    %588 = vrot.lane.b32.xlu0 %v256, 104
    %v589 = vpop.permute.xlu0 %588
    %590 = vrot.lane.b32.xlu0 %v256, 72
    %v591 = vpop.permute.xlu0 %590
    %v593 = vsel %vm260, %v589, 0
    %v596 = vsel %vm260, %v591, 0
    %598 = vmatprep.subr.bf16.mxu0 0
    %599 = vmatpush1.bf16.xpose.msra.mxu0 %v596
    %600 = vmatprep.subr.bf16.mxu0 0
    %601 = vmatpush1.bf16.xpose.msra.mxu0 0
    %602 = vmatprep.subr.bf16.mxu0 0
    %603 = vmatpush1.bf16.xpose.msra.mxu0 0
    %604 = vmatprep.subr.bf16.mxu0 0
    %605 = vmatpush1.bf16.xpose.msra.mxu0 0
    %606 = vmatprep.subr.bf16.mxu0 0
    %607 = vmatpush1.bf16.xpose.msra.mxu0 0
    %608 = vmatprep.subr.bf16.mxu0 0
    %609 = vmatpush1.bf16.xpose.msra.mxu0 0
    %610 = vmatprep.subr.bf16.mxu0 0
    %611 = vmatpush1.bf16.xpose.msra.mxu0 0
    %612 = vmatprep.subr.bf16.mxu0 0
    %613 = vmatpush1.bf16.xpose.msra.mxu0 0
    %614 = vmatprep.subr.bf16.mxu0 0
    %615 = vmatpush1.bf16.xpose.msra.mxu0 0
    %616 = vmatprep.subr.bf16.mxu0 0
    %617 = vmatpush1.bf16.xpose.msra.mxu0 0
    %618 = vmatprep.subr.bf16.mxu0 0
    %619 = vmatpush1.bf16.xpose.msra.mxu0 0
    %620 = vmatprep.subr.bf16.mxu0 0
    %621 = vmatpush1.bf16.xpose.msra.mxu0 0
    %622 = vmatprep.subr.bf16.mxu0 0
    %623 = vmatpush1.bf16.xpose.msra.mxu0 0
    %624 = vmatprep.subr.bf16.mxu0 0
    %625 = vmatpush1.bf16.xpose.msra.mxu0 0
    %626 = vmatprep.subr.bf16.mxu0 0
    %627 = vmatpush1.bf16.xpose.msra.mxu0 0
    %628 = vmatprep.subr.bf16.mxu0 0
    %629 = vmatpush1.bf16.xpose.msra.mxu0 0
    %630 = vmatprep.mubr.bf16.mxu0 0
    %631 = vmatmul.mubr.bf16.gmra.mrb[0].mxu0 %v593
    %v632 = vpop.f32.mrb[0].mxu0
    %v633 = vadd.f32 0.0, %v632
    %v634 = vpop.f32.mrb[0].mxu0
    %v635 = vpop.f32.mrb[0].mxu0
    %v636 = vpop.f32.mrb[0].mxu0
    %637 = vdwg.mxu0
    %v638 = vsel %vm260, %v633, -inf
    %639 = vmax.xlane.f32.xlu0 %v638
    %v640 = vpop.xlane.xlu0 %639
    %v641 = vsub.f32 %v633, %v640
    %v642 = vmul.f32 %v641, 1.442695
    %v643 = vpow.pop %v642
    %v644 = vsel %vm260, %v643, 0.0
    %645 = vadd.xlane.f32.xlu0 %v644
    %v646 = vpop.xlane.xlu0 %645
    %v647 = vrcp.pop %v646
    %v648 = vmul.f32 %v643, %v647
    %v649 = vpack.c.bf16 %v648, %v648
    %650 = vrot.lane.b32.xlu0 %v256, 40
    %v651 = vpop.permute.xlu0 %650
    %v653 = vsel %vm260, %v649, 0
    %v656 = vsel %vm324, %v651, 0
    %658 = vmatprep.subr.bf16.mxu0 0
    %659 = vmatpush1.bf16.msra.mxu0 %v656
    %660 = vmatprep.subr.bf16.mxu0 0
    %661 = vmatpush1.bf16.msra.mxu0 0
    %662 = vmatprep.subr.bf16.mxu0 0
    %663 = vmatpush1.bf16.msra.mxu0 0
    %664 = vmatprep.subr.bf16.mxu0 0
    %665 = vmatpush1.bf16.msra.mxu0 0
    %666 = vmatprep.subr.bf16.mxu0 0
    %667 = vmatpush1.bf16.msra.mxu0 0
    %668 = vmatprep.subr.bf16.mxu0 0
    %669 = vmatpush1.bf16.msra.mxu0 0
    %670 = vmatprep.subr.bf16.mxu0 0
    %671 = vmatpush1.bf16.msra.mxu0 0
    %672 = vmatprep.subr.bf16.mxu0 0
    %673 = vmatpush1.bf16.msra.mxu0 0
    %674 = vmatprep.subr.bf16.mxu0 0
    %675 = vmatpush1.bf16.msra.mxu0 0
    %676 = vmatprep.subr.bf16.mxu0 0
    %677 = vmatpush1.bf16.msra.mxu0 0
    %678 = vmatprep.subr.bf16.mxu0 0
    %679 = vmatpush1.bf16.msra.mxu0 0
    %680 = vmatprep.subr.bf16.mxu0 0
    %681 = vmatpush1.bf16.msra.mxu0 0
    %682 = vmatprep.subr.bf16.mxu0 0
    %683 = vmatpush1.bf16.msra.mxu0 0
    %684 = vmatprep.subr.bf16.mxu0 0
    %685 = vmatpush1.bf16.msra.mxu0 0
    %686 = vmatprep.subr.bf16.mxu0 0
    %687 = vmatpush1.bf16.msra.mxu0 0
    %688 = vmatprep.subr.bf16.mxu0 0
    %689 = vmatpush1.bf16.msra.mxu0 0
    %690 = vmatprep.mubr.bf16.mxu0 0
    %691 = vmatmul.mubr.bf16.gmra.mrb[0].mxu0 %v653
    %v692 = vpop.f32.mrb[0].mxu0
    %v693 = vadd.f32 0.0, %v692
    %v694 = vpop.f32.mrb[0].mxu0
    %v695 = vpop.f32.mrb[0].mxu0
    %v696 = vpop.f32.mrb[0].mxu0
    %697 = vdwg.mxu0
    %699 = vrot.lane.b32.xlu0 %v428, 8
    %v700 = vpop.permute.xlu0 %699
    %703 = vrot.lane.b32.xlu0 %v538, 16
    %v704 = vpop.permute.xlu0 %703
    %707 = vrot.lane.b32.xlu0 %v648, 24
    %v708 = vpop.permute.xlu0 %707
    %v710 = vsel %vm260, %v317, %v700
    %vm711 = vcmask 130048
    %v712 = vsel %vm711, %v710, %v704
    %vm713 = vcmask 195584
    %v714 = vsel %vm713, %v712, %v708
    %715 = vst.msk [vmem:[#allocation18] sm:$0xff] %vm171, %v714
    %717 = vrot.lane.b32.xlu0 %v473, 8
    %v718 = vpop.permute.xlu0 %717
    %721 = vrot.lane.b32.xlu0 %v583, 16
    %v722 = vpop.permute.xlu0 %721
    %725 = vrot.lane.b32.xlu0 %v693, 24
    %v726 = vpop.permute.xlu0 %725
    %v728 = vsel %vm260, %v363, %v718
    %v729 = vsel %vm711, %v728, %v722
    %v730 = vsel %vm713, %v729, %v726
    %v731 = vpack.c.bf16 %v730, %v730
    %v732 = vld [vmem:[#allocation8] sm:$0xf]
    %v733 = vld [vmem:[#allocation8 + $0x4] sm:$0xf]
    %v734 = vld [vmem:[#allocation8 + $0x8] sm:$0xf]
    %v735 = vld [vmem:[#allocation8 + $0xc] sm:$0xf]
    %v740 = vunpack.c.l.b16 %v732
    %v741 = vunpack.c.l.b16 %v733
    %v742 = vunpack.c.l.b16 %v734
    %v743 = vunpack.c.l.b16 %v735
    %v744 = vpack.c.b16 %v741, %v740
    %v745 = vpack.c.b16 %v743, %v742
    %v749 = vsel %vm171, %v731, 0
    %751 = vmatprep.subr.bf16.mxu0 0
    %752 = vmatpush1.bf16.msra.mxu0 %v744
    %753 = vmatprep.subr.bf16.mxu0 0
    %754 = vmatpush1.bf16.msra.mxu0 %v745
    %755 = vmatprep.subr.bf16.mxu0 0
    %756 = vmatpush1.bf16.msra.mxu0 0
    %757 = vmatprep.subr.bf16.mxu0 0
    %758 = vmatpush1.bf16.msra.mxu0 0
    %759 = vmatprep.subr.bf16.mxu0 0
    %760 = vmatpush1.bf16.msra.mxu0 0
    %761 = vmatprep.subr.bf16.mxu0 0
    %762 = vmatpush1.bf16.msra.mxu0 0
    %763 = vmatprep.subr.bf16.mxu0 0
    %764 = vmatpush1.bf16.msra.mxu0 0
    %765 = vmatprep.subr.bf16.mxu0 0
    %766 = vmatpush1.bf16.msra.mxu0 0
    %767 = vmatprep.subr.bf16.mxu0 0
    %768 = vmatpush1.bf16.msra.mxu0 0
    %769 = vmatprep.subr.bf16.mxu0 0
    %770 = vmatpush1.bf16.msra.mxu0 0
    %771 = vmatprep.subr.bf16.mxu0 0
    %772 = vmatpush1.bf16.msra.mxu0 0
    %773 = vmatprep.subr.bf16.mxu0 0
    %774 = vmatpush1.bf16.msra.mxu0 0
    %775 = vmatprep.subr.bf16.mxu0 0
    %776 = vmatpush1.bf16.msra.mxu0 0
    %777 = vmatprep.subr.bf16.mxu0 0
    %778 = vmatpush1.bf16.msra.mxu0 0
    %779 = vmatprep.subr.bf16.mxu0 0
    %780 = vmatpush1.bf16.msra.mxu0 0
    %781 = vmatprep.subr.bf16.mxu0 0
    %782 = vmatpush1.bf16.msra.mxu0 0
    %783 = vmatprep.mubr.bf16.mxu0 0
    %784 = vmatmul.mubr.bf16.gmra.mrb[0].mxu0 %v749
    %v785 = vpop.f32.mrb[0].mxu0
    %v786 = vadd.f32 0.0, %v785
    %v787 = vpop.f32.mrb[0].mxu0
    %v788 = vpop.f32.mrb[0].mxu0
    %v789 = vpop.f32.mrb[0].mxu0
    %790 = vdwg.mxu0
    %v791 = vld [vmem:[%s5] sm:$0xf]
    %v792 = vld [vmem:[%s5 + $0x4] sm:$0xf]
    %v793 = vld [vmem:[%s5 + $0x8] sm:$0xf]
    %v794 = vld [vmem:[%s5 + $0xc] sm:$0xf]
    %v795 = vld [vmem:[#allocation10] sm:$0xf]
    %v796 = vld [vmem:[#allocation10 + $0x4] sm:$0xf]
    %v797 = vld [vmem:[#allocation10 + $0x8] sm:$0xf]
    %v798 = vld [vmem:[#allocation10 + $0xc] sm:$0xf]
    %v799 = vld [vmem:[#allocation11] sm:$0xf]
    %v800 = vld [vmem:[#allocation11 + $0x4] sm:$0xf]
    %v801 = vld [vmem:[#allocation11 + $0x8] sm:$0xf]
    %v802 = vld [vmem:[#allocation11 + $0xc] sm:$0xf]
    %v803 = vld [vmem:[%s8] sm:$0x1]
    %v804 = vpack.c.bf16 %v786, %v786
    %v806 = vlaneseq
    %v807 = vshrl.u32 %v806, 7
    %v808 = vsub.s32 0, %v807
    %v809 = vrot.slane %v803, %v808
    %v815 = vunpack.c.l.b16 %v791
    %v816 = vunpack.c.l.b16 %v792
    %v817 = vunpack.c.l.b16 %v793
    %v818 = vunpack.c.l.b16 %v794
    %v819 = vpack.c.b16 %v816, %v815
    %v820 = vpack.c.b16 %v818, %v817
    %v824 = vsel %vm171, %v804, 0
    %826 = vmatprep.subr.bf16.mxu0 0
    %827 = vmatpush1.bf16.msra.mxu0 %v819
    %828 = vmatprep.subr.bf16.mxu0 0
    %829 = vmatpush1.bf16.msra.mxu0 %v820
    %830 = vmatprep.subr.bf16.mxu0 0
    %831 = vmatpush1.bf16.msra.mxu0 0
    %832 = vmatprep.subr.bf16.mxu0 0
    %833 = vmatpush1.bf16.msra.mxu0 0
    %834 = vmatprep.subr.bf16.mxu0 0
    %835 = vmatpush1.bf16.msra.mxu0 0
    %836 = vmatprep.subr.bf16.mxu0 0
    %837 = vmatpush1.bf16.msra.mxu0 0
    %838 = vmatprep.subr.bf16.mxu0 0
    %839 = vmatpush1.bf16.msra.mxu0 0
    %840 = vmatprep.subr.bf16.mxu0 0
    %841 = vmatpush1.bf16.msra.mxu0 0
    %842 = vmatprep.subr.bf16.mxu0 0
    %843 = vmatpush1.bf16.msra.mxu0 0
    %844 = vmatprep.subr.bf16.mxu0 0
    %845 = vmatpush1.bf16.msra.mxu0 0
    %846 = vmatprep.subr.bf16.mxu0 0
    %847 = vmatpush1.bf16.msra.mxu0 0
    %848 = vmatprep.subr.bf16.mxu0 0
    %849 = vmatpush1.bf16.msra.mxu0 0
    %850 = vmatprep.subr.bf16.mxu0 0
    %851 = vmatpush1.bf16.msra.mxu0 0
    %852 = vmatprep.subr.bf16.mxu0 0
    %853 = vmatpush1.bf16.msra.mxu0 0
    %854 = vmatprep.subr.bf16.mxu0 0
    %855 = vmatpush1.bf16.msra.mxu0 0
    %856 = vmatprep.subr.bf16.mxu0 0
    %857 = vmatpush1.bf16.msra.mxu0 0
    %858 = vmatprep.mubr.bf16.mxu0 0
    %859 = vmatmul.mubr.bf16.gmra.mrb[0].mxu0 %v824
    %v860 = vpop.f32.mrb[0].mxu0
    %v861 = vadd.f32 %v809, %v860
    %v862 = vpop.f32.mrb[0].mxu0
    %v863 = vpop.f32.mrb[0].mxu0
    %v864 = vpop.f32.mrb[0].mxu0
    %865 = vdwg.mxu0
    %v866 = vpack.c.bf16 %v169, %v169
    %v871 = vunpack.c.l.b16 %v795
    %v872 = vunpack.c.l.b16 %v796
    %v873 = vunpack.c.l.b16 %v797
    %v874 = vunpack.c.l.b16 %v798
    %v875 = vpack.c.b16 %v872, %v871
    %v876 = vpack.c.b16 %v874, %v873
    %v880 = vsel %vm171, %v866, 0
    %882 = vmatprep.subr.bf16.mxu0 0
    %883 = vmatpush1.bf16.msra.mxu0 %v875
    %884 = vmatprep.subr.bf16.mxu0 0
    %885 = vmatpush1.bf16.msra.mxu0 %v876
    %886 = vmatprep.subr.bf16.mxu0 0
    %887 = vmatpush1.bf16.msra.mxu0 0
    %888 = vmatprep.subr.bf16.mxu0 0
    %889 = vmatpush1.bf16.msra.mxu0 0
    %890 = vmatprep.subr.bf16.mxu0 0
    %891 = vmatpush1.bf16.msra.mxu0 0
    %892 = vmatprep.subr.bf16.mxu0 0
    %893 = vmatpush1.bf16.msra.mxu0 0
    %894 = vmatprep.subr.bf16.mxu0 0
    %895 = vmatpush1.bf16.msra.mxu0 0
    %896 = vmatprep.subr.bf16.mxu0 0
    %897 = vmatpush1.bf16.msra.mxu0 0
    %898 = vmatprep.subr.bf16.mxu0 0
    %899 = vmatpush1.bf16.msra.mxu0 0
    %900 = vmatprep.subr.bf16.mxu0 0
    %901 = vmatpush1.bf16.msra.mxu0 0
    %902 = vmatprep.subr.bf16.mxu0 0
    %903 = vmatpush1.bf16.msra.mxu0 0
    %904 = vmatprep.subr.bf16.mxu0 0
    %905 = vmatpush1.bf16.msra.mxu0 0
    %906 = vmatprep.subr.bf16.mxu0 0
    %907 = vmatpush1.bf16.msra.mxu0 0
    %908 = vmatprep.subr.bf16.mxu0 0
    %909 = vmatpush1.bf16.msra.mxu0 0
    %910 = vmatprep.subr.bf16.mxu0 0
    %911 = vmatpush1.bf16.msra.mxu0 0
    %912 = vmatprep.subr.bf16.mxu0 0
    %913 = vmatpush1.bf16.msra.mxu0 0
    %914 = vmatprep.mubr.bf16.mxu0 0
    %915 = vmatmul.mubr.bf16.gmra.mrb[0].mxu0 %v880
    %v916 = vpop.f32.mrb[0].mxu0
    %v917 = vadd.f32 0.0, %v916
    %v918 = vpop.f32.mrb[0].mxu0
    %v919 = vpop.f32.mrb[0].mxu0
    %v920 = vpop.f32.mrb[0].mxu0
    %921 = vdwg.mxu0
    %v922 = vadd.f32 %v861, %v917
    %v923 = vxor.u32 %v922, 2147483648
    %v924 = vmul.f32 %v923, 1.442695
    %v925 = vpow.pop %v924
    %v926 = vadd.f32 %v925, 1.0
    %v927 = vrcp.pop %v926
    %v928 = vmul.f32 1.0, %v927
    %v929 = vmul.f32 %v928, %v169
    %v930 = vpack.c.bf16 %v929, %v929
    %v935 = vunpack.c.l.b16 %v799
    %v936 = vunpack.c.l.b16 %v800
    %v937 = vunpack.c.l.b16 %v801
    %v938 = vunpack.c.l.b16 %v802
    %v939 = vpack.c.b16 %v936, %v935
    %v940 = vpack.c.b16 %v938, %v937
    %v944 = vsel %vm171, %v930, 0
    %946 = vmatprep.subr.bf16.mxu0 0
    %947 = vmatpush1.bf16.msra.mxu0 %v939
    %948 = vmatprep.subr.bf16.mxu0 0
    %949 = vmatpush1.bf16.msra.mxu0 %v940
    %950 = vmatprep.subr.bf16.mxu0 0
    %951 = vmatpush1.bf16.msra.mxu0 0
    %952 = vmatprep.subr.bf16.mxu0 0
    %953 = vmatpush1.bf16.msra.mxu0 0
    %954 = vmatprep.subr.bf16.mxu0 0
    %955 = vmatpush1.bf16.msra.mxu0 0
    %956 = vmatprep.subr.bf16.mxu0 0
    %957 = vmatpush1.bf16.msra.mxu0 0
    %958 = vmatprep.subr.bf16.mxu0 0
    %959 = vmatpush1.bf16.msra.mxu0 0
    %960 = vmatprep.subr.bf16.mxu0 0
    %961 = vmatpush1.bf16.msra.mxu0 0
    %962 = vmatprep.subr.bf16.mxu0 0
    %963 = vmatpush1.bf16.msra.mxu0 0
    %964 = vmatprep.subr.bf16.mxu0 0
    %965 = vmatpush1.bf16.msra.mxu0 0
    %966 = vmatprep.subr.bf16.mxu0 0
    %967 = vmatpush1.bf16.msra.mxu0 0
    %968 = vmatprep.subr.bf16.mxu0 0
    %969 = vmatpush1.bf16.msra.mxu0 0
    %970 = vmatprep.subr.bf16.mxu0 0
    %971 = vmatpush1.bf16.msra.mxu0 0
    %972 = vmatprep.subr.bf16.mxu0 0
    %973 = vmatpush1.bf16.msra.mxu0 0
    %974 = vmatprep.subr.bf16.mxu0 0
    %975 = vmatpush1.bf16.msra.mxu0 0
    %976 = vmatprep.subr.bf16.mxu0 0
    %977 = vmatpush1.bf16.msra.mxu0 0
    %978 = vmatprep.mubr.bf16.mxu0 0
    %979 = vmatmul.mubr.bf16.gmra.mrb[0].mxu0 %v944
    %v980 = vpop.f32.mrb[0].mxu0
    %v981 = vadd.f32 0.0, %v980
    %v982 = vpop.f32.mrb[0].mxu0
    %v983 = vpop.f32.mrb[0].mxu0
    %v984 = vpop.f32.mrb[0].mxu0
    %985 = vdwg.mxu0
    %987 = vrot.lane.b32.xlu0 %v981, 64
    %v988 = vpop.permute.xlu0 %987
    %v990 = vadd.f32 %v861, %v988
    %v991 = vtanh.pop %v990
    %v992 = vsub.f32 1.0, %v928
    %994 = vrot.lane.b32.xlu0 %v169, 32
    %v995 = vpop.permute.xlu0 %994
    %v997 = vmul.f32 %v992, %v995
    %999 = vrot.lane.b32.xlu0 %v991, 96
    %v1000 = vpop.permute.xlu0 %999
    %v1002 = vmul.f32 %v928, %v1000
    %v1003 = vadd.f32 %v997, %v1002
    %1005 = vrot.lane.b32.xlu0 %v1003, 96
    %v1006 = vpop.permute.xlu0 %1005
    %v1008 = vsel %vm171, %v1006, 0.0
    %1009 = vadd.xlane.f32.xlu0 %v1008
    %v1010 = vpop.xlane.xlu0 %1009
    %v1011 = vmul.f32 %v1010, %v175
    %v1012 = vsub.f32 %v1003, %v1011
    %v1013 = vmul.f32 %v1012, %v1012
    %1015 = vrot.lane.b32.xlu0 %v1013, 96
    %v1016 = vpop.permute.xlu0 %1015
    %v1018 = vsel %vm171, %v1016, 0.0
    %1019 = vadd.xlane.f32.xlu0 %v1018
    %v1020 = vpop.xlane.xlu0 %1019
    %v1021 = vmul.f32 %v1020, %v175
    %v1022 = vadd.f32 %v1021, 1e-06
    %v1023 = vrsqrt.pop %v1022
    %v1024 = vmul.f32 %v1012, %v1023
    %v1025 = vlaneseq
    %v1026 = vshrl.u32 %v1025, 7
    %v1027 = vsub.s32 2, %v1026
    %v1028 = vrot.slane %v170, %v1027
    %1030 = vrot.lane.b32.xlu0 %v1028, 32
    %v1031 = vpop.permute.xlu0 %1030
    %v1033 = vmul.f32 %v1024, %v1031
    %v1034 = vlaneseq
    %v1035 = vshrl.u32 %v1034, 7
    %v1036 = vsub.s32 3, %v1035
    %v1037 = vrot.slane %v170, %v1036
    %1039 = vrot.lane.b32.xlu0 %v1037, 32
    %v1040 = vpop.permute.xlu0 %1039
    %v1042 = vadd.f32 %v1033, %v1040
    %v1043 = vpack.c.bf16 %v1042, %v1042
    %v1044 = vld [vmem:[#allocation13] sm:$0xf]
    %v1045 = vld [vmem:[#allocation13 + $0x4] sm:$0xf]
    %v1046 = vld [vmem:[#allocation13 + $0x8] sm:$0xf]
    %v1047 = vld [vmem:[#allocation13 + $0xc] sm:$0xf]
    %v1048 = vld [vmem:[#allocation14] sm:$0x1]
    %v1050 = vlaneseq
    %v1051 = vshrl.u32 %v1050, 7
    %v1052 = vsub.s32 0, %v1051
    %v1053 = vrot.slane %v1048, %v1052
    %1056 = vrot.lane.b32.xlu0 %v1043, 96
    %v1057 = vpop.permute.xlu0 %1056
    %v1062 = vunpack.c.l.b16 %v1044
    %v1063 = vunpack.c.l.b16 %v1045
    %v1064 = vunpack.c.l.b16 %v1046
    %v1065 = vunpack.c.l.b16 %v1047
    %v1066 = vpack.c.b16 %v1063, %v1062
    %v1067 = vpack.c.b16 %v1065, %v1064
    %v1071 = vsel %vm171, %v1057, 0
    %1073 = vmatprep.subr.bf16.mxu0 0
    %1074 = vmatpush1.bf16.msra.mxu0 %v1066
    %1075 = vmatprep.subr.bf16.mxu0 0
    %1076 = vmatpush1.bf16.msra.mxu0 %v1067
    %1077 = vmatprep.subr.bf16.mxu0 0
    %1078 = vmatpush1.bf16.msra.mxu0 0
    %1079 = vmatprep.subr.bf16.mxu0 0
    %1080 = vmatpush1.bf16.msra.mxu0 0
    %1081 = vmatprep.subr.bf16.mxu0 0
    %1082 = vmatpush1.bf16.msra.mxu0 0
    %1083 = vmatprep.subr.bf16.mxu0 0
    %1084 = vmatpush1.bf16.msra.mxu0 0
    %1085 = vmatprep.subr.bf16.mxu0 0
    %1086 = vmatpush1.bf16.msra.mxu0 0
    %1087 = vmatprep.subr.bf16.mxu0 0
    %1088 = vmatpush1.bf16.msra.mxu0 0
    %1089 = vmatprep.subr.bf16.mxu0 0
    %1090 = vmatpush1.bf16.msra.mxu0 0
    %1091 = vmatprep.subr.bf16.mxu0 0
    %1092 = vmatpush1.bf16.msra.mxu0 0
    %1093 = vmatprep.subr.bf16.mxu0 0
    %1094 = vmatpush1.bf16.msra.mxu0 0
    %1095 = vmatprep.subr.bf16.mxu0 0
    %1096 = vmatpush1.bf16.msra.mxu0 0
    %1097 = vmatprep.subr.bf16.mxu0 0
    %1098 = vmatpush1.bf16.msra.mxu0 0
    %1099 = vmatprep.subr.bf16.mxu0 0
    %1100 = vmatpush1.bf16.msra.mxu0 0
    %1101 = vmatprep.subr.bf16.mxu0 0
    %1102 = vmatpush1.bf16.msra.mxu0 0
    %1103 = vmatprep.subr.bf16.mxu0 0
    %1104 = vmatpush1.bf16.msra.mxu0 0
    %1105 = vmatprep.mubr.bf16.mxu0 0
    %1106 = vmatmul.mubr.bf16.gmra.mrb[0].mxu0 %v1071
    %v1107 = vpop.f32.mrb[0].mxu0
    %v1108 = vadd.f32 %v1053, %v1107
    %v1109 = vpop.f32.mrb[0].mxu0
    %v1110 = vpop.f32.mrb[0].mxu0
    %v1111 = vpop.f32.mrb[0].mxu0
    %1112 = vdwg.mxu0
    %v1113 = vmax.f32 %v1108, 0.0
    %v1114 = vpack.c.bf16 %v1113, %v1113
    %v1115 = vld [vmem:[%s11] sm:$0xf]
    %v1116 = vld [vmem:[%s11 + $0x4] sm:$0xf]
    %v1117 = vld [vmem:[%s11 + $0x8] sm:$0xf]
    %v1118 = vld [vmem:[%s11 + $0xc] sm:$0xf]
    %v1119 = vld [vmem:[%s11 + $0x10] sm:$0xf]
    %v1120 = vld [vmem:[%s11 + $0x14] sm:$0xf]
    %v1121 = vld [vmem:[%s11 + $0x18] sm:$0xf]
    %v1122 = vld [vmem:[%s11 + $0x1c] sm:$0xf]
    %v1123 = vld [vmem:[#allocation16] sm:$0x1]
    %v1125 = vlaneseq
    %v1126 = vshrl.u32 %v1125, 7
    %v1127 = vsub.s32 0, %v1126
    %v1128 = vrot.slane %v1123, %v1127
    %v1138 = vunpack.c.l.b16 %v1115
    %v1139 = vunpack.c.l.b16 %v1116
    %v1140 = vunpack.c.l.b16 %v1117
    %v1141 = vunpack.c.l.b16 %v1118
    %v1142 = vunpack.c.l.b16 %v1119
    %v1143 = vunpack.c.l.b16 %v1120
    %v1144 = vunpack.c.l.b16 %v1121
    %v1145 = vunpack.c.l.b16 %v1122
    %v1146 = vpack.c.b16 %v1139, %v1138
    %v1147 = vpack.c.b16 %v1141, %v1140
    %v1148 = vpack.c.b16 %v1143, %v1142
    %v1149 = vpack.c.b16 %v1145, %v1144
    %vm1154 = vcmask 523264
    %v1156 = vsel %vm1154, %v1114, 0
    %1158 = vmatprep.subr.bf16.mxu0 0
    %1159 = vmatpush1.bf16.msra.mxu0 %v1146
    %1160 = vmatprep.subr.bf16.mxu0 0
    %1161 = vmatpush1.bf16.msra.mxu0 %v1147
    %1162 = vmatprep.subr.bf16.mxu0 0
    %1163 = vmatpush1.bf16.msra.mxu0 %v1148
    %1164 = vmatprep.subr.bf16.mxu0 0
    %1165 = vmatpush1.bf16.msra.mxu0 %v1149
    %1166 = vmatprep.subr.bf16.mxu0 0
    %1167 = vmatpush1.bf16.msra.mxu0 0
    %1168 = vmatprep.subr.bf16.mxu0 0
    %1169 = vmatpush1.bf16.msra.mxu0 0
    %1170 = vmatprep.subr.bf16.mxu0 0
    %1171 = vmatpush1.bf16.msra.mxu0 0
    %1172 = vmatprep.subr.bf16.mxu0 0
    %1173 = vmatpush1.bf16.msra.mxu0 0
    %1174 = vmatprep.subr.bf16.mxu0 0
    %1175 = vmatpush1.bf16.msra.mxu0 0
    %1176 = vmatprep.subr.bf16.mxu0 0
    %1177 = vmatpush1.bf16.msra.mxu0 0
    %1178 = vmatprep.subr.bf16.mxu0 0
    %1179 = vmatpush1.bf16.msra.mxu0 0
    %1180 = vmatprep.subr.bf16.mxu0 0
    %1181 = vmatpush1.bf16.msra.mxu0 0
    %1182 = vmatprep.subr.bf16.mxu0 0
    %1183 = vmatpush1.bf16.msra.mxu0 0
    %1184 = vmatprep.subr.bf16.mxu0 0
    %1185 = vmatpush1.bf16.msra.mxu0 0
    %1186 = vmatprep.subr.bf16.mxu0 0
    %1187 = vmatpush1.bf16.msra.mxu0 0
    %1188 = vmatprep.subr.bf16.mxu0 0
    %1189 = vmatpush1.bf16.msra.mxu0 0
    %1190 = vmatprep.mubr.bf16.mxu0 0
    %1191 = vmatmul.mubr.bf16.gmra.mrb[0].mxu0 %v1156
    %v1192 = vpop.f32.mrb[0].mxu0
    %v1193 = vadd.f32 %v1128, %v1192
    %v1194 = vpop.f32.mrb[0].mxu0
    %v1195 = vpop.f32.mrb[0].mxu0
    %v1196 = vpop.f32.mrb[0].mxu0
    %1197 = vdwg.mxu0
    %s1198 = scalar_lea.vmem %s5, 16
    %v1199 = vld [vmem:[%s1198] sm:$0xf]
    %v1200 = vld [vmem:[%s1198 + $0x4] sm:$0xf]
    %v1201 = vld [vmem:[%s1198 + $0x8] sm:$0xf]
    %v1202 = vld [vmem:[%s1198 + $0xc] sm:$0xf]
    %s1203 = scalar_lea.vmem [#allocation10], 16
    %v1204 = vld [vmem:[%s1203] sm:$0xf]
    %v1205 = vld [vmem:[%s1203 + $0x4] sm:$0xf]
    %v1206 = vld [vmem:[%s1203 + $0x8] sm:$0xf]
    %v1207 = vld [vmem:[%s1203 + $0xc] sm:$0xf]
    %s1208 = scalar_lea.vmem [#allocation11], 16
    %v1209 = vld [vmem:[%s1208] sm:$0xf]
    %v1210 = vld [vmem:[%s1208 + $0x4] sm:$0xf]
    %v1211 = vld [vmem:[%s1208 + $0x8] sm:$0xf]
    %v1212 = vld [vmem:[%s1208 + $0xc] sm:$0xf]
    %s1213 = scalar_lea.vmem %s8, 1
    %v1214 = vld [vmem:[%s1213] sm:$0x1]
    %v1215 = vpack.c.bf16 %v1193, %v1193
    %v1217 = vlaneseq
    %v1218 = vshrl.u32 %v1217, 7
    %v1219 = vsub.s32 0, %v1218
    %v1220 = vrot.slane %v1214, %v1219
    %v1226 = vunpack.c.l.b16 %v1199
    %v1227 = vunpack.c.l.b16 %v1200
    %v1228 = vunpack.c.l.b16 %v1201
    %v1229 = vunpack.c.l.b16 %v1202
    %v1230 = vpack.c.b16 %v1227, %v1226
    %v1231 = vpack.c.b16 %v1229, %v1228
    %v1235 = vsel %vm171, %v1215, 0
    %1237 = vmatprep.subr.bf16.mxu0 0
    %1238 = vmatpush1.bf16.msra.mxu0 %v1230
    %1239 = vmatprep.subr.bf16.mxu0 0
    %1240 = vmatpush1.bf16.msra.mxu0 %v1231
    %1241 = vmatprep.subr.bf16.mxu0 0
    %1242 = vmatpush1.bf16.msra.mxu0 0
    %1243 = vmatprep.subr.bf16.mxu0 0
    %1244 = vmatpush1.bf16.msra.mxu0 0
    %1245 = vmatprep.subr.bf16.mxu0 0
    %1246 = vmatpush1.bf16.msra.mxu0 0
    %1247 = vmatprep.subr.bf16.mxu0 0
    %1248 = vmatpush1.bf16.msra.mxu0 0
    %1249 = vmatprep.subr.bf16.mxu0 0
    %1250 = vmatpush1.bf16.msra.mxu0 0
    %1251 = vmatprep.subr.bf16.mxu0 0
    %1252 = vmatpush1.bf16.msra.mxu0 0
    %1253 = vmatprep.subr.bf16.mxu0 0
    %1254 = vmatpush1.bf16.msra.mxu0 0
    %1255 = vmatprep.subr.bf16.mxu0 0
    %1256 = vmatpush1.bf16.msra.mxu0 0
    %1257 = vmatprep.subr.bf16.mxu0 0
    %1258 = vmatpush1.bf16.msra.mxu0 0
    %1259 = vmatprep.subr.bf16.mxu0 0
    %1260 = vmatpush1.bf16.msra.mxu0 0
    %1261 = vmatprep.subr.bf16.mxu0 0
    %1262 = vmatpush1.bf16.msra.mxu0 0
    %1263 = vmatprep.subr.bf16.mxu0 0
    %1264 = vmatpush1.bf16.msra.mxu0 0
    %1265 = vmatprep.subr.bf16.mxu0 0
    %1266 = vmatpush1.bf16.msra.mxu0 0
    %1267 = vmatprep.subr.bf16.mxu0 0
    %1268 = vmatpush1.bf16.msra.mxu0 0
    %1269 = vmatprep.mubr.bf16.mxu0 0
    %1270 = vmatmul.mubr.bf16.gmra.mrb[0].mxu0 %v1235
    %v1271 = vpop.f32.mrb[0].mxu0
    %v1272 = vadd.f32 %v1220, %v1271
    %v1273 = vpop.f32.mrb[0].mxu0
    %v1274 = vpop.f32.mrb[0].mxu0
    %v1275 = vpop.f32.mrb[0].mxu0
    %1276 = vdwg.mxu0
    %v1277 = vpack.c.bf16 %v1003, %v1003
    %1279 = vrot.lane.b32.xlu0 %v1277, 96
    %v1280 = vpop.permute.xlu0 %1279
    %v1285 = vunpack.c.l.b16 %v1204
    %v1286 = vunpack.c.l.b16 %v1205
    %v1287 = vunpack.c.l.b16 %v1206
    %v1288 = vunpack.c.l.b16 %v1207
    %v1289 = vpack.c.b16 %v1286, %v1285
    %v1290 = vpack.c.b16 %v1288, %v1287
    %v1294 = vsel %vm171, %v1280, 0
    %1296 = vmatprep.subr.bf16.mxu0 0
    %1297 = vmatpush1.bf16.msra.mxu0 %v1289
    %1298 = vmatprep.subr.bf16.mxu0 0
    %1299 = vmatpush1.bf16.msra.mxu0 %v1290
    %1300 = vmatprep.subr.bf16.mxu0 0
    %1301 = vmatpush1.bf16.msra.mxu0 0
    %1302 = vmatprep.subr.bf16.mxu0 0
    %1303 = vmatpush1.bf16.msra.mxu0 0
    %1304 = vmatprep.subr.bf16.mxu0 0
    %1305 = vmatpush1.bf16.msra.mxu0 0
    %1306 = vmatprep.subr.bf16.mxu0 0
    %1307 = vmatpush1.bf16.msra.mxu0 0
    %1308 = vmatprep.subr.bf16.mxu0 0
    %1309 = vmatpush1.bf16.msra.mxu0 0
    %1310 = vmatprep.subr.bf16.mxu0 0
    %1311 = vmatpush1.bf16.msra.mxu0 0
    %1312 = vmatprep.subr.bf16.mxu0 0
    %1313 = vmatpush1.bf16.msra.mxu0 0
    %1314 = vmatprep.subr.bf16.mxu0 0
    %1315 = vmatpush1.bf16.msra.mxu0 0
    %1316 = vmatprep.subr.bf16.mxu0 0
    %1317 = vmatpush1.bf16.msra.mxu0 0
    %1318 = vmatprep.subr.bf16.mxu0 0
    %1319 = vmatpush1.bf16.msra.mxu0 0
    %1320 = vmatprep.subr.bf16.mxu0 0
    %1321 = vmatpush1.bf16.msra.mxu0 0
    %1322 = vmatprep.subr.bf16.mxu0 0
    %1323 = vmatpush1.bf16.msra.mxu0 0
    %1324 = vmatprep.subr.bf16.mxu0 0
    %1325 = vmatpush1.bf16.msra.mxu0 0
    %1326 = vmatprep.subr.bf16.mxu0 0
    %1327 = vmatpush1.bf16.msra.mxu0 0
    %1328 = vmatprep.mubr.bf16.mxu0 0
    %1329 = vmatmul.mubr.bf16.gmra.mrb[0].mxu0 %v1294
    %v1330 = vpop.f32.mrb[0].mxu0
    %v1331 = vadd.f32 0.0, %v1330
    %v1332 = vpop.f32.mrb[0].mxu0
    %v1333 = vpop.f32.mrb[0].mxu0
    %v1334 = vpop.f32.mrb[0].mxu0
    %1335 = vdwg.mxu0
    %v1336 = vadd.f32 %v1272, %v1331
    %v1337 = vxor.u32 %v1336, 2147483648
    %v1338 = vmul.f32 %v1337, 1.442695
    %v1339 = vpow.pop %v1338
    %v1340 = vadd.f32 %v1339, 1.0
    %v1341 = vrcp.pop %v1340
    %v1342 = vmul.f32 1.0, %v1341
    %v1343 = vmul.f32 %v1342, %v1006
    %v1344 = vpack.c.bf16 %v1343, %v1343
    %v1349 = vunpack.c.l.b16 %v1209
    %v1350 = vunpack.c.l.b16 %v1210
    %v1351 = vunpack.c.l.b16 %v1211
    %v1352 = vunpack.c.l.b16 %v1212
    %v1353 = vpack.c.b16 %v1350, %v1349
    %v1354 = vpack.c.b16 %v1352, %v1351
    %v1358 = vsel %vm171, %v1344, 0
    %1360 = vmatprep.subr.bf16.mxu0 0
    %1361 = vmatpush1.bf16.msra.mxu0 %v1353
    %1362 = vmatprep.subr.bf16.mxu0 0
    %1363 = vmatpush1.bf16.msra.mxu0 %v1354
    %1364 = vmatprep.subr.bf16.mxu0 0
    %1365 = vmatpush1.bf16.msra.mxu0 0
    %1366 = vmatprep.subr.bf16.mxu0 0
    %1367 = vmatpush1.bf16.msra.mxu0 0
    %1368 = vmatprep.subr.bf16.mxu0 0
    %1369 = vmatpush1.bf16.msra.mxu0 0
    %1370 = vmatprep.subr.bf16.mxu0 0
    %1371 = vmatpush1.bf16.msra.mxu0 0
    %1372 = vmatprep.subr.bf16.mxu0 0
    %1373 = vmatpush1.bf16.msra.mxu0 0
    %1374 = vmatprep.subr.bf16.mxu0 0
    %1375 = vmatpush1.bf16.msra.mxu0 0
    %1376 = vmatprep.subr.bf16.mxu0 0
    %1377 = vmatpush1.bf16.msra.mxu0 0
    %1378 = vmatprep.subr.bf16.mxu0 0
    %1379 = vmatpush1.bf16.msra.mxu0 0
    %1380 = vmatprep.subr.bf16.mxu0 0
    %1381 = vmatpush1.bf16.msra.mxu0 0
    %1382 = vmatprep.subr.bf16.mxu0 0
    %1383 = vmatpush1.bf16.msra.mxu0 0
    %1384 = vmatprep.subr.bf16.mxu0 0
    %1385 = vmatpush1.bf16.msra.mxu0 0
    %1386 = vmatprep.subr.bf16.mxu0 0
    %1387 = vmatpush1.bf16.msra.mxu0 0
    %1388 = vmatprep.subr.bf16.mxu0 0
    %1389 = vmatpush1.bf16.msra.mxu0 0
    %1390 = vmatprep.subr.bf16.mxu0 0
    %1391 = vmatpush1.bf16.msra.mxu0 0
    %1392 = vmatprep.mubr.bf16.mxu0 0
    %1393 = vmatmul.mubr.bf16.gmra.mrb[0].mxu0 %v1358
    %v1394 = vpop.f32.mrb[0].mxu0
    %v1395 = vadd.f32 0.0, %v1394
    %v1396 = vpop.f32.mrb[0].mxu0
    %v1397 = vpop.f32.mrb[0].mxu0
    %v1398 = vpop.f32.mrb[0].mxu0
    %1399 = vdwg.mxu0
    %1401 = vrot.lane.b32.xlu0 %v1395, 64
    %v1402 = vpop.permute.xlu0 %1401
    %v1404 = vadd.f32 %v1272, %v1402
    %v1405 = vtanh.pop %v1404
    %v1406 = vsub.f32 1.0, %v1342
    %v1407 = vmul.f32 %v1406, %v1003
    %1409 = vrot.lane.b32.xlu0 %v1405, 96
    %v1410 = vpop.permute.xlu0 %1409
    %v1412 = vmul.f32 %v1342, %v1410
    %v1413 = vadd.f32 %v1407, %v1412
    %s1414 = scalar_lea.vmem [#allocation7], 4
    %v1415 = vld [vmem:[%s1414] sm:$0xf]
    %1417 = vrot.lane.b32.xlu0 %v1413, 96
    %v1418 = vpop.permute.xlu0 %1417
    %v1420 = vsel %vm171, %v1418, 0.0
    %1421 = vadd.xlane.f32.xlu0 %v1420
    %v1422 = vpop.xlane.xlu0 %1421
    %v1423 = vmul.f32 %v1422, %v175
    %v1424 = vsub.f32 %v1413, %v1423
    %v1425 = vmul.f32 %v1424, %v1424
    %1427 = vrot.lane.b32.xlu0 %v1425, 96
    %v1428 = vpop.permute.xlu0 %1427
    %v1430 = vsel %vm171, %v1428, 0.0
    %1431 = vadd.xlane.f32.xlu0 %v1430
    %v1432 = vpop.xlane.xlu0 %1431
    %v1433 = vmul.f32 %v1432, %v175
    %v1434 = vadd.f32 %v1433, 1e-06
    %v1435 = vrsqrt.pop %v1434
    %v1436 = vmul.f32 %v1424, %v1435
    %v1437 = vlaneseq
    %v1438 = vshrl.u32 %v1437, 7
    %v1439 = vsub.s32 0, %v1438
    %v1440 = vrot.slane %v1415, %v1439
    %1442 = vrot.lane.b32.xlu0 %v1440, 32
    %v1443 = vpop.permute.xlu0 %1442
    %v1445 = vmul.f32 %v1436, %v1443
    %v1446 = vlaneseq
    %v1447 = vshrl.u32 %v1446, 7
    %v1448 = vsub.s32 1, %v1447
    %v1449 = vrot.slane %v1415, %v1448
    %1451 = vrot.lane.b32.xlu0 %v1449, 32
    %v1452 = vpop.permute.xlu0 %1451
    %v1454 = vadd.f32 %v1445, %v1452
    %v1455 = vpack.c.bf16 %v1454, %v1454
    %s1456 = scalar_lea.vmem %s3, 16
    %v1457 = vld [vmem:[%s1456] sm:$0xf]
    %v1458 = vld [vmem:[%s1456 + $0x4] sm:$0xf]
    %v1459 = vld [vmem:[%s1456 + $0x8] sm:$0xf]
    %v1460 = vld [vmem:[%s1456 + $0xc] sm:$0xf]
    %1462 = vrot.lane.b32.xlu0 %v1455, 96
    %v1463 = vpop.permute.xlu0 %1462
    %v1468 = vunpack.c.l.b16 %v1457
    %v1469 = vunpack.c.l.b16 %v1458
    %v1470 = vunpack.c.l.b16 %v1459
    %v1471 = vunpack.c.l.b16 %v1460
    %v1472 = vpack.c.b16 %v1469, %v1468
    %v1473 = vpack.c.b16 %v1471, %v1470
    %v1477 = vsel %vm171, %v1463, 0
    %1479 = vmatprep.subr.bf16.mxu0 0
    %1480 = vmatpush1.bf16.msra.mxu0 %v1472
    %1481 = vmatprep.subr.bf16.mxu0 0
    %1482 = vmatpush1.bf16.msra.mxu0 %v1473
    %1483 = vmatprep.subr.bf16.mxu0 0
    %1484 = vmatpush1.bf16.msra.mxu0 0
    %1485 = vmatprep.subr.bf16.mxu0 0
    %1486 = vmatpush1.bf16.msra.mxu0 0
    %1487 = vmatprep.subr.bf16.mxu0 0
    %1488 = vmatpush1.bf16.msra.mxu0 0
    %1489 = vmatprep.subr.bf16.mxu0 0
    %1490 = vmatpush1.bf16.msra.mxu0 0
    %1491 = vmatprep.subr.bf16.mxu0 0
    %1492 = vmatpush1.bf16.msra.mxu0 0
    %1493 = vmatprep.subr.bf16.mxu0 0
    %1494 = vmatpush1.bf16.msra.mxu0 0
    %1495 = vmatprep.subr.bf16.mxu0 0
    %1496 = vmatpush1.bf16.msra.mxu0 0
    %1497 = vmatprep.subr.bf16.mxu0 0
    %1498 = vmatpush1.bf16.msra.mxu0 0
    %1499 = vmatprep.subr.bf16.mxu0 0
    %1500 = vmatpush1.bf16.msra.mxu0 0
    %1501 = vmatprep.subr.bf16.mxu0 0
    %1502 = vmatpush1.bf16.msra.mxu0 0
    %1503 = vmatprep.subr.bf16.mxu0 0
    %1504 = vmatpush1.bf16.msra.mxu0 0
    %1505 = vmatprep.subr.bf16.mxu0 0
    %1506 = vmatpush1.bf16.msra.mxu0 0
    %1507 = vmatprep.subr.bf16.mxu0 0
    %1508 = vmatpush1.bf16.msra.mxu0 0
    %1509 = vmatprep.subr.bf16.mxu0 0
    %1510 = vmatpush1.bf16.msra.mxu0 0
    %1511 = vmatprep.mubr.bf16.mxu0 0
    %1512 = vmatmul.mubr.bf16.gmra.mrb[0].mxu0 %v1477
    %v1513 = vpop.f32.mrb[0].mxu0
    %v1514 = vadd.f32 0.0, %v1513
    %v1515 = vpop.f32.mrb[0].mxu0
    %v1516 = vpop.f32.mrb[0].mxu0
    %v1517 = vpop.f32.mrb[0].mxu0
    %1518 = vdwg.mxu0
    %v1519 = vpack.c.bf16 %v1514, %v1514
    %1521 = vrot.lane.b32.xlu0 %v1519, 96
    %v1522 = vpop.permute.xlu0 %1521
    %v1524 = vsel %vm260, %v1519, 0
    %v1527 = vsel %vm260, %v1522, 0
    %1529 = vmatprep.subr.bf16.mxu0 0
    %1530 = vmatpush1.bf16.xpose.msra.mxu0 %v1527
    %1531 = vmatprep.subr.bf16.mxu0 0
    %1532 = vmatpush1.bf16.xpose.msra.mxu0 0
    %1533 = vmatprep.subr.bf16.mxu0 0
    %1534 = vmatpush1.bf16.xpose.msra.mxu0 0
    %1535 = vmatprep.subr.bf16.mxu0 0
    %1536 = vmatpush1.bf16.xpose.msra.mxu0 0
    %1537 = vmatprep.subr.bf16.mxu0 0
    %1538 = vmatpush1.bf16.xpose.msra.mxu0 0
    %1539 = vmatprep.subr.bf16.mxu0 0
    %1540 = vmatpush1.bf16.xpose.msra.mxu0 0
    %1541 = vmatprep.subr.bf16.mxu0 0
    %1542 = vmatpush1.bf16.xpose.msra.mxu0 0
    %1543 = vmatprep.subr.bf16.mxu0 0
    %1544 = vmatpush1.bf16.xpose.msra.mxu0 0
    %1545 = vmatprep.subr.bf16.mxu0 0
    %1546 = vmatpush1.bf16.xpose.msra.mxu0 0
    %1547 = vmatprep.subr.bf16.mxu0 0
    %1548 = vmatpush1.bf16.xpose.msra.mxu0 0
    %1549 = vmatprep.subr.bf16.mxu0 0
    %1550 = vmatpush1.bf16.xpose.msra.mxu0 0
    %1551 = vmatprep.subr.bf16.mxu0 0
    %1552 = vmatpush1.bf16.xpose.msra.mxu0 0
    %1553 = vmatprep.subr.bf16.mxu0 0
    %1554 = vmatpush1.bf16.xpose.msra.mxu0 0
    %1555 = vmatprep.subr.bf16.mxu0 0
    %1556 = vmatpush1.bf16.xpose.msra.mxu0 0
    %1557 = vmatprep.subr.bf16.mxu0 0
    %1558 = vmatpush1.bf16.xpose.msra.mxu0 0
    %1559 = vmatprep.subr.bf16.mxu0 0
    %1560 = vmatpush1.bf16.xpose.msra.mxu0 0
    %1561 = vmatprep.mubr.bf16.mxu0 0
    %1562 = vmatmul.mubr.bf16.gmra.mrb[0].mxu0 %v1524
    %v1563 = vpop.f32.mrb[0].mxu0
    %v1564 = vadd.f32 0.0, %v1563
    %v1565 = vpop.f32.mrb[0].mxu0
    %v1566 = vpop.f32.mrb[0].mxu0
    %v1567 = vpop.f32.mrb[0].mxu0
    %1568 = vdwg.mxu0
    %v1569 = vsel %vm260, %v1564, -inf
    %1570 = vmax.xlane.f32.xlu0 %v1569
    %v1571 = vpop.xlane.xlu0 %1570
    %v1572 = vsub.f32 %v1564, %v1571
    %v1573 = vmul.f32 %v1572, 1.442695
    %v1574 = vpow.pop %v1573
    %v1575 = vsel %vm260, %v1574, 0.0
    %1576 = vadd.xlane.f32.xlu0 %v1575
    %v1577 = vpop.xlane.xlu0 %1576
    %v1578 = vrcp.pop %v1577
    %v1579 = vmul.f32 %v1574, %v1578
    %v1580 = vpack.c.bf16 %v1579, %v1579
    %1581 = vrot.lane.b32.xlu0 %v1519, 64
    %v1582 = vpop.permute.xlu0 %1581
    %v1584 = vsel %vm260, %v1580, 0
    %v1587 = vsel %vm324, %v1582, 0
    %1589 = vmatprep.subr.bf16.mxu0 0
    %1590 = vmatpush1.bf16.msra.mxu0 %v1587
    %1591 = vmatprep.subr.bf16.mxu0 0
    %1592 = vmatpush1.bf16.msra.mxu0 0
    %1593 = vmatprep.subr.bf16.mxu0 0
    %1594 = vmatpush1.bf16.msra.mxu0 0
    %1595 = vmatprep.subr.bf16.mxu0 0
    %1596 = vmatpush1.bf16.msra.mxu0 0
    %1597 = vmatprep.subr.bf16.mxu0 0
    %1598 = vmatpush1.bf16.msra.mxu0 0
    %1599 = vmatprep.subr.bf16.mxu0 0
    %1600 = vmatpush1.bf16.msra.mxu0 0
    %1601 = vmatprep.subr.bf16.mxu0 0
    %1602 = vmatpush1.bf16.msra.mxu0 0
    %1603 = vmatprep.subr.bf16.mxu0 0
    %1604 = vmatpush1.bf16.msra.mxu0 0
    %1605 = vmatprep.subr.bf16.mxu0 0
    %1606 = vmatpush1.bf16.msra.mxu0 0
    %1607 = vmatprep.subr.bf16.mxu0 0
    %1608 = vmatpush1.bf16.msra.mxu0 0
    %1609 = vmatprep.subr.bf16.mxu0 0
    %1610 = vmatpush1.bf16.msra.mxu0 0
    %1611 = vmatprep.subr.bf16.mxu0 0
    %1612 = vmatpush1.bf16.msra.mxu0 0
    %1613 = vmatprep.subr.bf16.mxu0 0
    %1614 = vmatpush1.bf16.msra.mxu0 0
    %1615 = vmatprep.subr.bf16.mxu0 0
    %1616 = vmatpush1.bf16.msra.mxu0 0
    %1617 = vmatprep.subr.bf16.mxu0 0
    %1618 = vmatpush1.bf16.msra.mxu0 0
    %1619 = vmatprep.subr.bf16.mxu0 0
    %1620 = vmatpush1.bf16.msra.mxu0 0
    %1621 = vmatprep.mubr.bf16.mxu0 0
    %1622 = vmatmul.mubr.bf16.gmra.mrb[0].mxu0 %v1584
    %v1623 = vpop.f32.mrb[0].mxu0
    %v1624 = vadd.f32 0.0, %v1623
    %v1625 = vpop.f32.mrb[0].mxu0
    %v1626 = vpop.f32.mrb[0].mxu0
    %v1627 = vpop.f32.mrb[0].mxu0
    %1628 = vdwg.mxu0
    %1629 = vrot.lane.b32.xlu0 %v1519, 120
    %v1630 = vpop.permute.xlu0 %1629
    %1631 = vrot.lane.b32.xlu0 %v1519, 88
    %v1632 = vpop.permute.xlu0 %1631
    %v1634 = vsel %vm260, %v1630, 0
    %v1637 = vsel %vm260, %v1632, 0
    %1639 = vmatprep.subr.bf16.mxu0 0
    %1640 = vmatpush1.bf16.xpose.msra.mxu0 %v1637
    %1641 = vmatprep.subr.bf16.mxu0 0
    %1642 = vmatpush1.bf16.xpose.msra.mxu0 0
    %1643 = vmatprep.subr.bf16.mxu0 0
    %1644 = vmatpush1.bf16.xpose.msra.mxu0 0
    %1645 = vmatprep.subr.bf16.mxu0 0
    %1646 = vmatpush1.bf16.xpose.msra.mxu0 0
    %1647 = vmatprep.subr.bf16.mxu0 0
    %1648 = vmatpush1.bf16.xpose.msra.mxu0 0
    %1649 = vmatprep.subr.bf16.mxu0 0
    %1650 = vmatpush1.bf16.xpose.msra.mxu0 0
    %1651 = vmatprep.subr.bf16.mxu0 0
    %1652 = vmatpush1.bf16.xpose.msra.mxu0 0
    %1653 = vmatprep.subr.bf16.mxu0 0
    %1654 = vmatpush1.bf16.xpose.msra.mxu0 0
    %1655 = vmatprep.subr.bf16.mxu0 0
    %1656 = vmatpush1.bf16.xpose.msra.mxu0 0
    %1657 = vmatprep.subr.bf16.mxu0 0
    %1658 = vmatpush1.bf16.xpose.msra.mxu0 0
    %1659 = vmatprep.subr.bf16.mxu0 0
    %1660 = vmatpush1.bf16.xpose.msra.mxu0 0
    %1661 = vmatprep.subr.bf16.mxu0 0
    %1662 = vmatpush1.bf16.xpose.msra.mxu0 0
    %1663 = vmatprep.subr.bf16.mxu0 0
    %1664 = vmatpush1.bf16.xpose.msra.mxu0 0
    %1665 = vmatprep.subr.bf16.mxu0 0
    %1666 = vmatpush1.bf16.xpose.msra.mxu0 0
    %1667 = vmatprep.subr.bf16.mxu0 0
    %1668 = vmatpush1.bf16.xpose.msra.mxu0 0
    %1669 = vmatprep.subr.bf16.mxu0 0
    %1670 = vmatpush1.bf16.xpose.msra.mxu0 0
    %1671 = vmatprep.mubr.bf16.mxu0 0
    %1672 = vmatmul.mubr.bf16.gmra.mrb[0].mxu0 %v1634
    %v1673 = vpop.f32.mrb[0].mxu0
    %v1674 = vadd.f32 0.0, %v1673
    %v1675 = vpop.f32.mrb[0].mxu0
    %v1676 = vpop.f32.mrb[0].mxu0
    %v1677 = vpop.f32.mrb[0].mxu0
    %1678 = vdwg.mxu0
    %v1679 = vsel %vm260, %v1674, -inf
    %1680 = vmax.xlane.f32.xlu0 %v1679
    %v1681 = vpop.xlane.xlu0 %1680
    %v1682 = vsub.f32 %v1674, %v1681
    %v1683 = vmul.f32 %v1682, 1.442695
    %v1684 = vpow.pop %v1683
    %v1685 = vsel %vm260, %v1684, 0.0
    %1686 = vadd.xlane.f32.xlu0 %v1685
    %v1687 = vpop.xlane.xlu0 %1686
    %v1688 = vrcp.pop %v1687
    %v1689 = vmul.f32 %v1684, %v1688
    %v1690 = vpack.c.bf16 %v1689, %v1689
    %1691 = vrot.lane.b32.xlu0 %v1519, 56
    %v1692 = vpop.permute.xlu0 %1691
    %v1694 = vsel %vm260, %v1690, 0
    %v1697 = vsel %vm324, %v1692, 0
    %1699 = vmatprep.subr.bf16.mxu0 0
    %1700 = vmatpush1.bf16.msra.mxu0 %v1697
    %1701 = vmatprep.subr.bf16.mxu0 0
    %1702 = vmatpush1.bf16.msra.mxu0 0
    %1703 = vmatprep.subr.bf16.mxu0 0
    %1704 = vmatpush1.bf16.msra.mxu0 0
    %1705 = vmatprep.subr.bf16.mxu0 0
    %1706 = vmatpush1.bf16.msra.mxu0 0
    %1707 = vmatprep.subr.bf16.mxu0 0
    %1708 = vmatpush1.bf16.msra.mxu0 0
    %1709 = vmatprep.subr.bf16.mxu0 0
    %1710 = vmatpush1.bf16.msra.mxu0 0
    %1711 = vmatprep.subr.bf16.mxu0 0
    %1712 = vmatpush1.bf16.msra.mxu0 0
    %1713 = vmatprep.subr.bf16.mxu0 0
    %1714 = vmatpush1.bf16.msra.mxu0 0
    %1715 = vmatprep.subr.bf16.mxu0 0
    %1716 = vmatpush1.bf16.msra.mxu0 0
    %1717 = vmatprep.subr.bf16.mxu0 0
    %1718 = vmatpush1.bf16.msra.mxu0 0
    %1719 = vmatprep.subr.bf16.mxu0 0
    %1720 = vmatpush1.bf16.msra.mxu0 0
    %1721 = vmatprep.subr.bf16.mxu0 0
    %1722 = vmatpush1.bf16.msra.mxu0 0
    %1723 = vmatprep.subr.bf16.mxu0 0
    %1724 = vmatpush1.bf16.msra.mxu0 0
    %1725 = vmatprep.subr.bf16.mxu0 0
    %1726 = vmatpush1.bf16.msra.mxu0 0
    %1727 = vmatprep.subr.bf16.mxu0 0
    %1728 = vmatpush1.bf16.msra.mxu0 0
    %1729 = vmatprep.subr.bf16.mxu0 0
    %1730 = vmatpush1.bf16.msra.mxu0 0
    %1731 = vmatprep.mubr.bf16.mxu0 0
    %1732 = vmatmul.mubr.bf16.gmra.mrb[0].mxu0 %v1694
    %v1733 = vpop.f32.mrb[0].mxu0
    %v1734 = vadd.f32 0.0, %v1733
    %v1735 = vpop.f32.mrb[0].mxu0
    %v1736 = vpop.f32.mrb[0].mxu0
    %v1737 = vpop.f32.mrb[0].mxu0
    %1738 = vdwg.mxu0
    %1739 = vrot.lane.b32.xlu0 %v1519, 112
    %v1740 = vpop.permute.xlu0 %1739
    %1741 = vrot.lane.b32.xlu0 %v1519, 80
    %v1742 = vpop.permute.xlu0 %1741
    %v1744 = vsel %vm260, %v1740, 0
    %v1747 = vsel %vm260, %v1742, 0
    %1749 = vmatprep.subr.bf16.mxu0 0
    %1750 = vmatpush1.bf16.xpose.msra.mxu0 %v1747
    %1751 = vmatprep.subr.bf16.mxu0 0
    %1752 = vmatpush1.bf16.xpose.msra.mxu0 0
    %1753 = vmatprep.subr.bf16.mxu0 0
    %1754 = vmatpush1.bf16.xpose.msra.mxu0 0
    %1755 = vmatprep.subr.bf16.mxu0 0
    %1756 = vmatpush1.bf16.xpose.msra.mxu0 0
    %1757 = vmatprep.subr.bf16.mxu0 0
    %1758 = vmatpush1.bf16.xpose.msra.mxu0 0
    %1759 = vmatprep.subr.bf16.mxu0 0
    %1760 = vmatpush1.bf16.xpose.msra.mxu0 0
    %1761 = vmatprep.subr.bf16.mxu0 0
    %1762 = vmatpush1.bf16.xpose.msra.mxu0 0
    %1763 = vmatprep.subr.bf16.mxu0 0
    %1764 = vmatpush1.bf16.xpose.msra.mxu0 0
    %1765 = vmatprep.subr.bf16.mxu0 0
    %1766 = vmatpush1.bf16.xpose.msra.mxu0 0
    %1767 = vmatprep.subr.bf16.mxu0 0
    %1768 = vmatpush1.bf16.xpose.msra.mxu0 0
    %1769 = vmatprep.subr.bf16.mxu0 0
    %1770 = vmatpush1.bf16.xpose.msra.mxu0 0
    %1771 = vmatprep.subr.bf16.mxu0 0
    %1772 = vmatpush1.bf16.xpose.msra.mxu0 0
    %1773 = vmatprep.subr.bf16.mxu0 0
    %1774 = vmatpush1.bf16.xpose.msra.mxu0 0
    %1775 = vmatprep.subr.bf16.mxu0 0
    %1776 = vmatpush1.bf16.xpose.msra.mxu0 0
    %1777 = vmatprep.subr.bf16.mxu0 0
    %1778 = vmatpush1.bf16.xpose.msra.mxu0 0
    %1779 = vmatprep.subr.bf16.mxu0 0
    %1780 = vmatpush1.bf16.xpose.msra.mxu0 0
    %1781 = vmatprep.mubr.bf16.mxu0 0
    %1782 = vmatmul.mubr.bf16.gmra.mrb[0].mxu0 %v1744
    %v1783 = vpop.f32.mrb[0].mxu0
    %v1784 = vadd.f32 0.0, %v1783
    %v1785 = vpop.f32.mrb[0].mxu0
    %v1786 = vpop.f32.mrb[0].mxu0
    %v1787 = vpop.f32.mrb[0].mxu0
    %1788 = vdwg.mxu0
    %v1789 = vsel %vm260, %v1784, -inf
    %1790 = vmax.xlane.f32.xlu0 %v1789
    %v1791 = vpop.xlane.xlu0 %1790
    %v1792 = vsub.f32 %v1784, %v1791
    %v1793 = vmul.f32 %v1792, 1.442695
    %v1794 = vpow.pop %v1793
    %v1795 = vsel %vm260, %v1794, 0.0
    %1796 = vadd.xlane.f32.xlu0 %v1795
    %v1797 = vpop.xlane.xlu0 %1796
    %v1798 = vrcp.pop %v1797
    %v1799 = vmul.f32 %v1794, %v1798
    %v1800 = vpack.c.bf16 %v1799, %v1799
    %1801 = vrot.lane.b32.xlu0 %v1519, 48
    %v1802 = vpop.permute.xlu0 %1801
    %v1804 = vsel %vm260, %v1800, 0
    %v1807 = vsel %vm324, %v1802, 0
    %1809 = vmatprep.subr.bf16.mxu0 0
    %1810 = vmatpush1.bf16.msra.mxu0 %v1807
    %1811 = vmatprep.subr.bf16.mxu0 0
    %1812 = vmatpush1.bf16.msra.mxu0 0
    %1813 = vmatprep.subr.bf16.mxu0 0
    %1814 = vmatpush1.bf16.msra.mxu0 0
    %1815 = vmatprep.subr.bf16.mxu0 0
    %1816 = vmatpush1.bf16.msra.mxu0 0
    %1817 = vmatprep.subr.bf16.mxu0 0
    %1818 = vmatpush1.bf16.msra.mxu0 0
    %1819 = vmatprep.subr.bf16.mxu0 0
    %1820 = vmatpush1.bf16.msra.mxu0 0
    %1821 = vmatprep.subr.bf16.mxu0 0
    %1822 = vmatpush1.bf16.msra.mxu0 0
    %1823 = vmatprep.subr.bf16.mxu0 0
    %1824 = vmatpush1.bf16.msra.mxu0 0
    %1825 = vmatprep.subr.bf16.mxu0 0
    %1826 = vmatpush1.bf16.msra.mxu0 0
    %1827 = vmatprep.subr.bf16.mxu0 0
    %1828 = vmatpush1.bf16.msra.mxu0 0
    %1829 = vmatprep.subr.bf16.mxu0 0
    %1830 = vmatpush1.bf16.msra.mxu0 0
    %1831 = vmatprep.subr.bf16.mxu0 0
    %1832 = vmatpush1.bf16.msra.mxu0 0
    %1833 = vmatprep.subr.bf16.mxu0 0
    %1834 = vmatpush1.bf16.msra.mxu0 0
    %1835 = vmatprep.subr.bf16.mxu0 0
    %1836 = vmatpush1.bf16.msra.mxu0 0
    %1837 = vmatprep.subr.bf16.mxu0 0
    %1838 = vmatpush1.bf16.msra.mxu0 0
    %1839 = vmatprep.subr.bf16.mxu0 0
    %1840 = vmatpush1.bf16.msra.mxu0 0
    %1841 = vmatprep.mubr.bf16.mxu0 0
    %1842 = vmatmul.mubr.bf16.gmra.mrb[0].mxu0 %v1804
    %v1843 = vpop.f32.mrb[0].mxu0
    %v1844 = vadd.f32 0.0, %v1843
    %v1845 = vpop.f32.mrb[0].mxu0
    %v1846 = vpop.f32.mrb[0].mxu0
    %v1847 = vpop.f32.mrb[0].mxu0
    %1848 = vdwg.mxu0
    %1849 = vrot.lane.b32.xlu0 %v1519, 104
    %v1850 = vpop.permute.xlu0 %1849
    %1851 = vrot.lane.b32.xlu0 %v1519, 72
    %v1852 = vpop.permute.xlu0 %1851
    %v1854 = vsel %vm260, %v1850, 0
    %v1857 = vsel %vm260, %v1852, 0
    %1859 = vmatprep.subr.bf16.mxu0 0
    %1860 = vmatpush1.bf16.xpose.msra.mxu0 %v1857
    %1861 = vmatprep.subr.bf16.mxu0 0
    %1862 = vmatpush1.bf16.xpose.msra.mxu0 0
    %1863 = vmatprep.subr.bf16.mxu0 0
    %1864 = vmatpush1.bf16.xpose.msra.mxu0 0
    %1865 = vmatprep.subr.bf16.mxu0 0
    %1866 = vmatpush1.bf16.xpose.msra.mxu0 0
    %1867 = vmatprep.subr.bf16.mxu0 0
    %1868 = vmatpush1.bf16.xpose.msra.mxu0 0
    %1869 = vmatprep.subr.bf16.mxu0 0
    %1870 = vmatpush1.bf16.xpose.msra.mxu0 0
    %1871 = vmatprep.subr.bf16.mxu0 0
    %1872 = vmatpush1.bf16.xpose.msra.mxu0 0
    %1873 = vmatprep.subr.bf16.mxu0 0
    %1874 = vmatpush1.bf16.xpose.msra.mxu0 0
    %1875 = vmatprep.subr.bf16.mxu0 0
    %1876 = vmatpush1.bf16.xpose.msra.mxu0 0
    %1877 = vmatprep.subr.bf16.mxu0 0
    %1878 = vmatpush1.bf16.xpose.msra.mxu0 0
    %1879 = vmatprep.subr.bf16.mxu0 0
    %1880 = vmatpush1.bf16.xpose.msra.mxu0 0
    %1881 = vmatprep.subr.bf16.mxu0 0
    %1882 = vmatpush1.bf16.xpose.msra.mxu0 0
    %1883 = vmatprep.subr.bf16.mxu0 0
    %1884 = vmatpush1.bf16.xpose.msra.mxu0 0
    %1885 = vmatprep.subr.bf16.mxu0 0
    %1886 = vmatpush1.bf16.xpose.msra.mxu0 0
    %1887 = vmatprep.subr.bf16.mxu0 0
    %1888 = vmatpush1.bf16.xpose.msra.mxu0 0
    %1889 = vmatprep.subr.bf16.mxu0 0
    %1890 = vmatpush1.bf16.xpose.msra.mxu0 0
    %1891 = vmatprep.mubr.bf16.mxu0 0
    %1892 = vmatmul.mubr.bf16.gmra.mrb[0].mxu0 %v1854
    %v1893 = vpop.f32.mrb[0].mxu0
    %v1894 = vadd.f32 0.0, %v1893
    %v1895 = vpop.f32.mrb[0].mxu0
    %v1896 = vpop.f32.mrb[0].mxu0
    %v1897 = vpop.f32.mrb[0].mxu0
    %1898 = vdwg.mxu0
    %v1899 = vsel %vm260, %v1894, -inf
    %1900 = vmax.xlane.f32.xlu0 %v1899
    %v1901 = vpop.xlane.xlu0 %1900
    %v1902 = vsub.f32 %v1894, %v1901
    %v1903 = vmul.f32 %v1902, 1.442695
    %v1904 = vpow.pop %v1903
    %v1905 = vsel %vm260, %v1904, 0.0
    %1906 = vadd.xlane.f32.xlu0 %v1905
    %v1907 = vpop.xlane.xlu0 %1906
    %v1908 = vrcp.pop %v1907
    %v1909 = vmul.f32 %v1904, %v1908
    %v1910 = vpack.c.bf16 %v1909, %v1909
    %1911 = vrot.lane.b32.xlu0 %v1519, 40
    %v1912 = vpop.permute.xlu0 %1911
    %v1914 = vsel %vm260, %v1910, 0
    %v1917 = vsel %vm324, %v1912, 0
    %1919 = vmatprep.subr.bf16.mxu0 0
    %1920 = vmatpush1.bf16.msra.mxu0 %v1917
    %1921 = vmatprep.subr.bf16.mxu0 0
    %1922 = vmatpush1.bf16.msra.mxu0 0
    %1923 = vmatprep.subr.bf16.mxu0 0
    %1924 = vmatpush1.bf16.msra.mxu0 0
    %1925 = vmatprep.subr.bf16.mxu0 0
    %1926 = vmatpush1.bf16.msra.mxu0 0
    %1927 = vmatprep.subr.bf16.mxu0 0
    %1928 = vmatpush1.bf16.msra.mxu0 0
    %1929 = vmatprep.subr.bf16.mxu0 0
    %1930 = vmatpush1.bf16.msra.mxu0 0
    %1931 = vmatprep.subr.bf16.mxu0 0
    %1932 = vmatpush1.bf16.msra.mxu0 0
    %1933 = vmatprep.subr.bf16.mxu0 0
    %1934 = vmatpush1.bf16.msra.mxu0 0
    %1935 = vmatprep.subr.bf16.mxu0 0
    %1936 = vmatpush1.bf16.msra.mxu0 0
    %1937 = vmatprep.subr.bf16.mxu0 0
    %1938 = vmatpush1.bf16.msra.mxu0 0
    %1939 = vmatprep.subr.bf16.mxu0 0
    %1940 = vmatpush1.bf16.msra.mxu0 0
    %1941 = vmatprep.subr.bf16.mxu0 0
    %1942 = vmatpush1.bf16.msra.mxu0 0
    %1943 = vmatprep.subr.bf16.mxu0 0
    %1944 = vmatpush1.bf16.msra.mxu0 0
    %1945 = vmatprep.subr.bf16.mxu0 0
    %1946 = vmatpush1.bf16.msra.mxu0 0
    %1947 = vmatprep.subr.bf16.mxu0 0
    %1948 = vmatpush1.bf16.msra.mxu0 0
    %1949 = vmatprep.subr.bf16.mxu0 0
    %1950 = vmatpush1.bf16.msra.mxu0 0
    %1951 = vmatprep.mubr.bf16.mxu0 0
    %1952 = vmatmul.mubr.bf16.gmra.mrb[0].mxu0 %v1914
    %v1953 = vpop.f32.mrb[0].mxu0
    %v1954 = vadd.f32 0.0, %v1953
    %v1955 = vpop.f32.mrb[0].mxu0
    %v1956 = vpop.f32.mrb[0].mxu0
    %v1957 = vpop.f32.mrb[0].mxu0
    %1958 = vdwg.mxu0
    %1960 = vrot.lane.b32.xlu0 %v1689, 8
    %v1961 = vpop.permute.xlu0 %1960
    %1964 = vrot.lane.b32.xlu0 %v1799, 16
    %v1965 = vpop.permute.xlu0 %1964
    %1968 = vrot.lane.b32.xlu0 %v1909, 24
    %v1969 = vpop.permute.xlu0 %1968
    %v1971 = vsel %vm260, %v1579, %v1961
    %v1972 = vsel %vm711, %v1971, %v1965
    %v1973 = vsel %vm713, %v1972, %v1969
    %s1974 = scalar_lea.vmem [#allocation18], 8
    %1975 = vst.msk [vmem:[%s1974] sm:$0xff] %vm171, %v1973
    %1977 = vrot.lane.b32.xlu0 %v1734, 8
    %v1978 = vpop.permute.xlu0 %1977
    %1981 = vrot.lane.b32.xlu0 %v1844, 16
    %v1982 = vpop.permute.xlu0 %1981
    %1985 = vrot.lane.b32.xlu0 %v1954, 24
    %v1986 = vpop.permute.xlu0 %1985
    %v1988 = vsel %vm260, %v1624, %v1978
    %v1989 = vsel %vm711, %v1988, %v1982
    %v1990 = vsel %vm713, %v1989, %v1986
    %v1991 = vpack.c.bf16 %v1990, %v1990
    %s1992 = scalar_lea.vmem [#allocation8], 16
    %v1993 = vld [vmem:[%s1992] sm:$0xf]
    %v1994 = vld [vmem:[%s1992 + $0x4] sm:$0xf]
    %v1995 = vld [vmem:[%s1992 + $0x8] sm:$0xf]
    %v1996 = vld [vmem:[%s1992 + $0xc] sm:$0xf]
    %v2001 = vunpack.c.l.b16 %v1993
    %v2002 = vunpack.c.l.b16 %v1994
    %v2003 = vunpack.c.l.b16 %v1995
    %v2004 = vunpack.c.l.b16 %v1996
    %v2005 = vpack.c.b16 %v2002, %v2001
    %v2006 = vpack.c.b16 %v2004, %v2003
    %v2010 = vsel %vm171, %v1991, 0
    %2012 = vmatprep.subr.bf16.mxu0 0
    %2013 = vmatpush1.bf16.msra.mxu0 %v2005
    %2014 = vmatprep.subr.bf16.mxu0 0
    %2015 = vmatpush1.bf16.msra.mxu0 %v2006
    %2016 = vmatprep.subr.bf16.mxu0 0
    %2017 = vmatpush1.bf16.msra.mxu0 0
    %2018 = vmatprep.subr.bf16.mxu0 0
    %2019 = vmatpush1.bf16.msra.mxu0 0
    %2020 = vmatprep.subr.bf16.mxu0 0
    %2021 = vmatpush1.bf16.msra.mxu0 0
    %2022 = vmatprep.subr.bf16.mxu0 0
    %2023 = vmatpush1.bf16.msra.mxu0 0
    %2024 = vmatprep.subr.bf16.mxu0 0
    %2025 = vmatpush1.bf16.msra.mxu0 0
    %2026 = vmatprep.subr.bf16.mxu0 0
    %2027 = vmatpush1.bf16.msra.mxu0 0
    %2028 = vmatprep.subr.bf16.mxu0 0
    %2029 = vmatpush1.bf16.msra.mxu0 0
    %2030 = vmatprep.subr.bf16.mxu0 0
    %2031 = vmatpush1.bf16.msra.mxu0 0
    %2032 = vmatprep.subr.bf16.mxu0 0
    %2033 = vmatpush1.bf16.msra.mxu0 0
    %2034 = vmatprep.subr.bf16.mxu0 0
    %2035 = vmatpush1.bf16.msra.mxu0 0
    %2036 = vmatprep.subr.bf16.mxu0 0
    %2037 = vmatpush1.bf16.msra.mxu0 0
    %2038 = vmatprep.subr.bf16.mxu0 0
    %2039 = vmatpush1.bf16.msra.mxu0 0
    %2040 = vmatprep.subr.bf16.mxu0 0
    %2041 = vmatpush1.bf16.msra.mxu0 0
    %2042 = vmatprep.subr.bf16.mxu0 0
    %2043 = vmatpush1.bf16.msra.mxu0 0
    %2044 = vmatprep.mubr.bf16.mxu0 0
    %2045 = vmatmul.mubr.bf16.gmra.mrb[0].mxu0 %v2010
    %v2046 = vpop.f32.mrb[0].mxu0
    %v2047 = vadd.f32 0.0, %v2046
    %v2048 = vpop.f32.mrb[0].mxu0
    %v2049 = vpop.f32.mrb[0].mxu0
    %v2050 = vpop.f32.mrb[0].mxu0
    %2051 = vdwg.mxu0
    %s2052 = scalar_lea.vmem %s5, 32
    %v2053 = vld [vmem:[%s2052] sm:$0xf]
    %v2054 = vld [vmem:[%s2052 + $0x4] sm:$0xf]
    %v2055 = vld [vmem:[%s2052 + $0x8] sm:$0xf]
    %v2056 = vld [vmem:[%s2052 + $0xc] sm:$0xf]
    %s2057 = scalar_lea.vmem [#allocation10], 32
    %v2058 = vld [vmem:[%s2057] sm:$0xf]
    %v2059 = vld [vmem:[%s2057 + $0x4] sm:$0xf]
    %v2060 = vld [vmem:[%s2057 + $0x8] sm:$0xf]
    %v2061 = vld [vmem:[%s2057 + $0xc] sm:$0xf]
    %s2062 = scalar_lea.vmem [#allocation11], 32
    %v2063 = vld [vmem:[%s2062] sm:$0xf]
    %v2064 = vld [vmem:[%s2062 + $0x4] sm:$0xf]
    %v2065 = vld [vmem:[%s2062 + $0x8] sm:$0xf]
    %v2066 = vld [vmem:[%s2062 + $0xc] sm:$0xf]
    %s2067 = scalar_lea.vmem %s8, 2
    %v2068 = vld [vmem:[%s2067] sm:$0x1]
    %v2069 = vpack.c.bf16 %v2047, %v2047
    %v2071 = vlaneseq
    %v2072 = vshrl.u32 %v2071, 7
    %v2073 = vsub.s32 0, %v2072
    %v2074 = vrot.slane %v2068, %v2073
    %v2080 = vunpack.c.l.b16 %v2053
    %v2081 = vunpack.c.l.b16 %v2054
    %v2082 = vunpack.c.l.b16 %v2055
    %v2083 = vunpack.c.l.b16 %v2056
    %v2084 = vpack.c.b16 %v2081, %v2080
    %v2085 = vpack.c.b16 %v2083, %v2082
    %v2089 = vsel %vm171, %v2069, 0
    %2091 = vmatprep.subr.bf16.mxu0 0
    %2092 = vmatpush1.bf16.msra.mxu0 %v2084
    %2093 = vmatprep.subr.bf16.mxu0 0
    %2094 = vmatpush1.bf16.msra.mxu0 %v2085
    %2095 = vmatprep.subr.bf16.mxu0 0
    %2096 = vmatpush1.bf16.msra.mxu0 0
    %2097 = vmatprep.subr.bf16.mxu0 0
    %2098 = vmatpush1.bf16.msra.mxu0 0
    %2099 = vmatprep.subr.bf16.mxu0 0
    %2100 = vmatpush1.bf16.msra.mxu0 0
    %2101 = vmatprep.subr.bf16.mxu0 0
    %2102 = vmatpush1.bf16.msra.mxu0 0
    %2103 = vmatprep.subr.bf16.mxu0 0
    %2104 = vmatpush1.bf16.msra.mxu0 0
    %2105 = vmatprep.subr.bf16.mxu0 0
    %2106 = vmatpush1.bf16.msra.mxu0 0
    %2107 = vmatprep.subr.bf16.mxu0 0
    %2108 = vmatpush1.bf16.msra.mxu0 0
    %2109 = vmatprep.subr.bf16.mxu0 0
    %2110 = vmatpush1.bf16.msra.mxu0 0
    %2111 = vmatprep.subr.bf16.mxu0 0
    %2112 = vmatpush1.bf16.msra.mxu0 0
    %2113 = vmatprep.subr.bf16.mxu0 0
    %2114 = vmatpush1.bf16.msra.mxu0 0
    %2115 = vmatprep.subr.bf16.mxu0 0
    %2116 = vmatpush1.bf16.msra.mxu0 0
    %2117 = vmatprep.subr.bf16.mxu0 0
    %2118 = vmatpush1.bf16.msra.mxu0 0
    %2119 = vmatprep.subr.bf16.mxu0 0
    %2120 = vmatpush1.bf16.msra.mxu0 0
    %2121 = vmatprep.subr.bf16.mxu0 0
    %2122 = vmatpush1.bf16.msra.mxu0 0
    %2123 = vmatprep.mubr.bf16.mxu0 0
    %2124 = vmatmul.mubr.bf16.gmra.mrb[0].mxu0 %v2089
    %v2125 = vpop.f32.mrb[0].mxu0
    %v2126 = vadd.f32 %v2074, %v2125
    %v2127 = vpop.f32.mrb[0].mxu0
    %v2128 = vpop.f32.mrb[0].mxu0
    %v2129 = vpop.f32.mrb[0].mxu0
    %2130 = vdwg.mxu0
    %v2131 = vpack.c.bf16 %v1413, %v1413
    %2133 = vrot.lane.b32.xlu0 %v2131, 96
    %v2134 = vpop.permute.xlu0 %2133
    %v2139 = vunpack.c.l.b16 %v2058
    %v2140 = vunpack.c.l.b16 %v2059
    %v2141 = vunpack.c.l.b16 %v2060
    %v2142 = vunpack.c.l.b16 %v2061
    %v2143 = vpack.c.b16 %v2140, %v2139
    %v2144 = vpack.c.b16 %v2142, %v2141
    %v2148 = vsel %vm171, %v2134, 0
    %2150 = vmatprep.subr.bf16.mxu0 0
    %2151 = vmatpush1.bf16.msra.mxu0 %v2143
    %2152 = vmatprep.subr.bf16.mxu0 0
    %2153 = vmatpush1.bf16.msra.mxu0 %v2144
    %2154 = vmatprep.subr.bf16.mxu0 0
    %2155 = vmatpush1.bf16.msra.mxu0 0
    %2156 = vmatprep.subr.bf16.mxu0 0
    %2157 = vmatpush1.bf16.msra.mxu0 0
    %2158 = vmatprep.subr.bf16.mxu0 0
    %2159 = vmatpush1.bf16.msra.mxu0 0
    %2160 = vmatprep.subr.bf16.mxu0 0
    %2161 = vmatpush1.bf16.msra.mxu0 0
    %2162 = vmatprep.subr.bf16.mxu0 0
    %2163 = vmatpush1.bf16.msra.mxu0 0
    %2164 = vmatprep.subr.bf16.mxu0 0
    %2165 = vmatpush1.bf16.msra.mxu0 0
    %2166 = vmatprep.subr.bf16.mxu0 0
    %2167 = vmatpush1.bf16.msra.mxu0 0
    %2168 = vmatprep.subr.bf16.mxu0 0
    %2169 = vmatpush1.bf16.msra.mxu0 0
    %2170 = vmatprep.subr.bf16.mxu0 0
    %2171 = vmatpush1.bf16.msra.mxu0 0
    %2172 = vmatprep.subr.bf16.mxu0 0
    %2173 = vmatpush1.bf16.msra.mxu0 0
    %2174 = vmatprep.subr.bf16.mxu0 0
    %2175 = vmatpush1.bf16.msra.mxu0 0
    %2176 = vmatprep.subr.bf16.mxu0 0
    %2177 = vmatpush1.bf16.msra.mxu0 0
    %2178 = vmatprep.subr.bf16.mxu0 0
    %2179 = vmatpush1.bf16.msra.mxu0 0
    %2180 = vmatprep.subr.bf16.mxu0 0
    %2181 = vmatpush1.bf16.msra.mxu0 0
    %2182 = vmatprep.mubr.bf16.mxu0 0
    %2183 = vmatmul.mubr.bf16.gmra.mrb[0].mxu0 %v2148
    %v2184 = vpop.f32.mrb[0].mxu0
    %v2185 = vadd.f32 0.0, %v2184
    %v2186 = vpop.f32.mrb[0].mxu0
    %v2187 = vpop.f32.mrb[0].mxu0
    %v2188 = vpop.f32.mrb[0].mxu0
    %2189 = vdwg.mxu0
    %v2190 = vadd.f32 %v2126, %v2185
    %v2191 = vxor.u32 %v2190, 2147483648
    %v2192 = vmul.f32 %v2191, 1.442695
    %v2193 = vpow.pop %v2192
    %v2194 = vadd.f32 %v2193, 1.0
    %v2195 = vrcp.pop %v2194
    %v2196 = vmul.f32 1.0, %v2195
    %v2197 = vmul.f32 %v2196, %v1418
    %v2198 = vpack.c.bf16 %v2197, %v2197
    %v2203 = vunpack.c.l.b16 %v2063
    %v2204 = vunpack.c.l.b16 %v2064
    %v2205 = vunpack.c.l.b16 %v2065
    %v2206 = vunpack.c.l.b16 %v2066
    %v2207 = vpack.c.b16 %v2204, %v2203
    %v2208 = vpack.c.b16 %v2206, %v2205
    %v2212 = vsel %vm171, %v2198, 0
    %2214 = vmatprep.subr.bf16.mxu0 0
    %2215 = vmatpush1.bf16.msra.mxu0 %v2207
    %2216 = vmatprep.subr.bf16.mxu0 0
    %2217 = vmatpush1.bf16.msra.mxu0 %v2208
    %2218 = vmatprep.subr.bf16.mxu0 0
    %2219 = vmatpush1.bf16.msra.mxu0 0
    %2220 = vmatprep.subr.bf16.mxu0 0
    %2221 = vmatpush1.bf16.msra.mxu0 0
    %2222 = vmatprep.subr.bf16.mxu0 0
    %2223 = vmatpush1.bf16.msra.mxu0 0
    %2224 = vmatprep.subr.bf16.mxu0 0
    %2225 = vmatpush1.bf16.msra.mxu0 0
    %2226 = vmatprep.subr.bf16.mxu0 0
    %2227 = vmatpush1.bf16.msra.mxu0 0
    %2228 = vmatprep.subr.bf16.mxu0 0
    %2229 = vmatpush1.bf16.msra.mxu0 0
    %2230 = vmatprep.subr.bf16.mxu0 0
    %2231 = vmatpush1.bf16.msra.mxu0 0
    %2232 = vmatprep.subr.bf16.mxu0 0
    %2233 = vmatpush1.bf16.msra.mxu0 0
    %2234 = vmatprep.subr.bf16.mxu0 0
    %2235 = vmatpush1.bf16.msra.mxu0 0
    %2236 = vmatprep.subr.bf16.mxu0 0
    %2237 = vmatpush1.bf16.msra.mxu0 0
    %2238 = vmatprep.subr.bf16.mxu0 0
    %2239 = vmatpush1.bf16.msra.mxu0 0
    %2240 = vmatprep.subr.bf16.mxu0 0
    %2241 = vmatpush1.bf16.msra.mxu0 0
    %2242 = vmatprep.subr.bf16.mxu0 0
    %2243 = vmatpush1.bf16.msra.mxu0 0
    %2244 = vmatprep.subr.bf16.mxu0 0
    %2245 = vmatpush1.bf16.msra.mxu0 0
    %2246 = vmatprep.mubr.bf16.mxu0 0
    %2247 = vmatmul.mubr.bf16.gmra.mrb[0].mxu0 %v2212
    %v2248 = vpop.f32.mrb[0].mxu0
    %v2249 = vadd.f32 0.0, %v2248
    %v2250 = vpop.f32.mrb[0].mxu0
    %v2251 = vpop.f32.mrb[0].mxu0
    %v2252 = vpop.f32.mrb[0].mxu0
    %2253 = vdwg.mxu0
    %2255 = vrot.lane.b32.xlu0 %v2249, 64
    %v2256 = vpop.permute.xlu0 %2255
    %v2258 = vadd.f32 %v2126, %v2256
    %v2259 = vtanh.pop %v2258
    %v2260 = vsub.f32 1.0, %v2196
    %v2261 = vmul.f32 %v2260, %v1413
    %2263 = vrot.lane.b32.xlu0 %v2259, 96
    %v2264 = vpop.permute.xlu0 %2263
    %v2266 = vmul.f32 %v2196, %v2264
    %v2267 = vadd.f32 %v2261, %v2266
    %2269 = vrot.lane.b32.xlu0 %v2267, 96
    %v2270 = vpop.permute.xlu0 %2269
    %v2272 = vsel %vm171, %v2270, 0.0
    %2273 = vadd.xlane.f32.xlu0 %v2272
    %v2274 = vpop.xlane.xlu0 %2273
    %v2275 = vmul.f32 %v2274, %v175
    %v2276 = vsub.f32 %v2267, %v2275
    %v2277 = vmul.f32 %v2276, %v2276
    %2279 = vrot.lane.b32.xlu0 %v2277, 96
    %v2280 = vpop.permute.xlu0 %2279
    %v2282 = vsel %vm171, %v2280, 0.0
    %2283 = vadd.xlane.f32.xlu0 %v2282
    %v2284 = vpop.xlane.xlu0 %2283
    %v2285 = vmul.f32 %v2284, %v175
    %v2286 = vadd.f32 %v2285, 1e-06
    %v2287 = vrsqrt.pop %v2286
    %v2288 = vmul.f32 %v2276, %v2287
    %v2289 = vlaneseq
    %v2290 = vshrl.u32 %v2289, 7
    %v2291 = vsub.s32 2, %v2290
    %v2292 = vrot.slane %v1415, %v2291
    %2294 = vrot.lane.b32.xlu0 %v2292, 32
    %v2295 = vpop.permute.xlu0 %2294
    %v2297 = vmul.f32 %v2288, %v2295
    %v2298 = vlaneseq
    %v2299 = vshrl.u32 %v2298, 7
    %v2300 = vsub.s32 3, %v2299
    %v2301 = vrot.slane %v1415, %v2300
    %2303 = vrot.lane.b32.xlu0 %v2301, 32
    %v2304 = vpop.permute.xlu0 %2303
    %v2306 = vadd.f32 %v2297, %v2304
    %v2307 = vpack.c.bf16 %v2306, %v2306
    %s2308 = scalar_lea.vmem [#allocation13], 16
    %v2309 = vld [vmem:[%s2308] sm:$0xf]
    %v2310 = vld [vmem:[%s2308 + $0x4] sm:$0xf]
    %v2311 = vld [vmem:[%s2308 + $0x8] sm:$0xf]
    %v2312 = vld [vmem:[%s2308 + $0xc] sm:$0xf]
    %s2313 = scalar_lea.vmem [#allocation14], 1
    %v2314 = vld [vmem:[%s2313] sm:$0x1]
    %v2316 = vlaneseq
    %v2317 = vshrl.u32 %v2316, 7
    %v2318 = vsub.s32 0, %v2317
    %v2319 = vrot.slane %v2314, %v2318
    %2322 = vrot.lane.b32.xlu0 %v2307, 96
    %v2323 = vpop.permute.xlu0 %2322
    %v2328 = vunpack.c.l.b16 %v2309
    %v2329 = vunpack.c.l.b16 %v2310
    %v2330 = vunpack.c.l.b16 %v2311
    %v2331 = vunpack.c.l.b16 %v2312
    %v2332 = vpack.c.b16 %v2329, %v2328
    %v2333 = vpack.c.b16 %v2331, %v2330
    %v2337 = vsel %vm171, %v2323, 0
    %2339 = vmatprep.subr.bf16.mxu0 0
    %2340 = vmatpush1.bf16.msra.mxu0 %v2332
    %2341 = vmatprep.subr.bf16.mxu0 0
    %2342 = vmatpush1.bf16.msra.mxu0 %v2333
    %2343 = vmatprep.subr.bf16.mxu0 0
    %2344 = vmatpush1.bf16.msra.mxu0 0
    %2345 = vmatprep.subr.bf16.mxu0 0
    %2346 = vmatpush1.bf16.msra.mxu0 0
    %2347 = vmatprep.subr.bf16.mxu0 0
    %2348 = vmatpush1.bf16.msra.mxu0 0
    %2349 = vmatprep.subr.bf16.mxu0 0
    %2350 = vmatpush1.bf16.msra.mxu0 0
    %2351 = vmatprep.subr.bf16.mxu0 0
    %2352 = vmatpush1.bf16.msra.mxu0 0
    %2353 = vmatprep.subr.bf16.mxu0 0
    %2354 = vmatpush1.bf16.msra.mxu0 0
    %2355 = vmatprep.subr.bf16.mxu0 0
    %2356 = vmatpush1.bf16.msra.mxu0 0
    %2357 = vmatprep.subr.bf16.mxu0 0
    %2358 = vmatpush1.bf16.msra.mxu0 0
    %2359 = vmatprep.subr.bf16.mxu0 0
    %2360 = vmatpush1.bf16.msra.mxu0 0
    %2361 = vmatprep.subr.bf16.mxu0 0
    %2362 = vmatpush1.bf16.msra.mxu0 0
    %2363 = vmatprep.subr.bf16.mxu0 0
    %2364 = vmatpush1.bf16.msra.mxu0 0
    %2365 = vmatprep.subr.bf16.mxu0 0
    %2366 = vmatpush1.bf16.msra.mxu0 0
    %2367 = vmatprep.subr.bf16.mxu0 0
    %2368 = vmatpush1.bf16.msra.mxu0 0
    %2369 = vmatprep.subr.bf16.mxu0 0
    %2370 = vmatpush1.bf16.msra.mxu0 0
    %2371 = vmatprep.mubr.bf16.mxu0 0
    %2372 = vmatmul.mubr.bf16.gmra.mrb[0].mxu0 %v2337
    %v2373 = vpop.f32.mrb[0].mxu0
    %v2374 = vadd.f32 %v2319, %v2373
    %v2375 = vpop.f32.mrb[0].mxu0
    %v2376 = vpop.f32.mrb[0].mxu0
    %v2377 = vpop.f32.mrb[0].mxu0
    %2378 = vdwg.mxu0
    %v2379 = vmax.f32 %v2374, 0.0
    %v2380 = vpack.c.bf16 %v2379, %v2379
    %s2381 = scalar_lea.vmem %s11, 32
    %v2382 = vld [vmem:[%s2381] sm:$0xf]
    %v2383 = vld [vmem:[%s2381 + $0x4] sm:$0xf]
    %v2384 = vld [vmem:[%s2381 + $0x8] sm:$0xf]
    %v2385 = vld [vmem:[%s2381 + $0xc] sm:$0xf]
    %v2386 = vld [vmem:[%s2381 + $0x10] sm:$0xf]
    %v2387 = vld [vmem:[%s2381 + $0x14] sm:$0xf]
    %v2388 = vld [vmem:[%s2381 + $0x18] sm:$0xf]
    %v2389 = vld [vmem:[%s2381 + $0x1c] sm:$0xf]
    %s2390 = scalar_lea.vmem [#allocation16], 1
    %v2391 = vld [vmem:[%s2390] sm:$0x1]
    %v2393 = vlaneseq
    %v2394 = vshrl.u32 %v2393, 7
    %v2395 = vsub.s32 0, %v2394
    %v2396 = vrot.slane %v2391, %v2395
    %v2406 = vunpack.c.l.b16 %v2382
    %v2407 = vunpack.c.l.b16 %v2383
    %v2408 = vunpack.c.l.b16 %v2384
    %v2409 = vunpack.c.l.b16 %v2385
    %v2410 = vunpack.c.l.b16 %v2386
    %v2411 = vunpack.c.l.b16 %v2387
    %v2412 = vunpack.c.l.b16 %v2388
    %v2413 = vunpack.c.l.b16 %v2389
    %v2414 = vpack.c.b16 %v2407, %v2406
    %v2415 = vpack.c.b16 %v2409, %v2408
    %v2416 = vpack.c.b16 %v2411, %v2410
    %v2417 = vpack.c.b16 %v2413, %v2412
    %v2423 = vsel %vm1154, %v2380, 0
    %2425 = vmatprep.subr.bf16.mxu0 0
    %2426 = vmatpush1.bf16.msra.mxu0 %v2414
    %2427 = vmatprep.subr.bf16.mxu0 0
    %2428 = vmatpush1.bf16.msra.mxu0 %v2415
    %2429 = vmatprep.subr.bf16.mxu0 0
    %2430 = vmatpush1.bf16.msra.mxu0 %v2416
    %2431 = vmatprep.subr.bf16.mxu0 0
    %2432 = vmatpush1.bf16.msra.mxu0 %v2417
    %2433 = vmatprep.subr.bf16.mxu0 0
    %2434 = vmatpush1.bf16.msra.mxu0 0
    %2435 = vmatprep.subr.bf16.mxu0 0
    %2436 = vmatpush1.bf16.msra.mxu0 0
    %2437 = vmatprep.subr.bf16.mxu0 0
    %2438 = vmatpush1.bf16.msra.mxu0 0
    %2439 = vmatprep.subr.bf16.mxu0 0
    %2440 = vmatpush1.bf16.msra.mxu0 0
    %2441 = vmatprep.subr.bf16.mxu0 0
    %2442 = vmatpush1.bf16.msra.mxu0 0
    %2443 = vmatprep.subr.bf16.mxu0 0
    %2444 = vmatpush1.bf16.msra.mxu0 0
    %2445 = vmatprep.subr.bf16.mxu0 0
    %2446 = vmatpush1.bf16.msra.mxu0 0
    %2447 = vmatprep.subr.bf16.mxu0 0
    %2448 = vmatpush1.bf16.msra.mxu0 0
    %2449 = vmatprep.subr.bf16.mxu0 0
    %2450 = vmatpush1.bf16.msra.mxu0 0
    %2451 = vmatprep.subr.bf16.mxu0 0
    %2452 = vmatpush1.bf16.msra.mxu0 0
    %2453 = vmatprep.subr.bf16.mxu0 0
    %2454 = vmatpush1.bf16.msra.mxu0 0
    %2455 = vmatprep.subr.bf16.mxu0 0
    %2456 = vmatpush1.bf16.msra.mxu0 0
    %2457 = vmatprep.mubr.bf16.mxu0 0
    %2458 = vmatmul.mubr.bf16.gmra.mrb[0].mxu0 %v2423
    %v2459 = vpop.f32.mrb[0].mxu0
    %v2460 = vadd.f32 %v2396, %v2459
    %v2461 = vpop.f32.mrb[0].mxu0
    %v2462 = vpop.f32.mrb[0].mxu0
    %v2463 = vpop.f32.mrb[0].mxu0
    %2464 = vdwg.mxu0
    %s2465 = scalar_lea.vmem %s5, 48
    %v2466 = vld [vmem:[%s2465] sm:$0xf]
    %v2467 = vld [vmem:[%s2465 + $0x4] sm:$0xf]
    %v2468 = vld [vmem:[%s2465 + $0x8] sm:$0xf]
    %v2469 = vld [vmem:[%s2465 + $0xc] sm:$0xf]
    %s2470 = scalar_lea.vmem [#allocation10], 48
    %v2471 = vld [vmem:[%s2470] sm:$0xf]
    %v2472 = vld [vmem:[%s2470 + $0x4] sm:$0xf]
    %v2473 = vld [vmem:[%s2470 + $0x8] sm:$0xf]
    %v2474 = vld [vmem:[%s2470 + $0xc] sm:$0xf]
    %s2475 = scalar_lea.vmem [#allocation11], 48
    %v2476 = vld [vmem:[%s2475] sm:$0xf]
    %v2477 = vld [vmem:[%s2475 + $0x4] sm:$0xf]
    %v2478 = vld [vmem:[%s2475 + $0x8] sm:$0xf]
    %v2479 = vld [vmem:[%s2475 + $0xc] sm:$0xf]
    %s2480 = scalar_lea.vmem %s8, 3
    %v2481 = vld [vmem:[%s2480] sm:$0x1]
    %v2482 = vpack.c.bf16 %v2460, %v2460
    %v2484 = vlaneseq
    %v2485 = vshrl.u32 %v2484, 7
    %v2486 = vsub.s32 0, %v2485
    %v2487 = vrot.slane %v2481, %v2486
    %v2493 = vunpack.c.l.b16 %v2466
    %v2494 = vunpack.c.l.b16 %v2467
    %v2495 = vunpack.c.l.b16 %v2468
    %v2496 = vunpack.c.l.b16 %v2469
    %v2497 = vpack.c.b16 %v2494, %v2493
    %v2498 = vpack.c.b16 %v2496, %v2495
    %v2502 = vsel %vm171, %v2482, 0
    %2504 = vmatprep.subr.bf16.mxu0 0
    %2505 = vmatpush1.bf16.msra.mxu0 %v2497
    %2506 = vmatprep.subr.bf16.mxu0 0
    %2507 = vmatpush1.bf16.msra.mxu0 %v2498
    %2508 = vmatprep.subr.bf16.mxu0 0
    %2509 = vmatpush1.bf16.msra.mxu0 0
    %2510 = vmatprep.subr.bf16.mxu0 0
    %2511 = vmatpush1.bf16.msra.mxu0 0
    %2512 = vmatprep.subr.bf16.mxu0 0
    %2513 = vmatpush1.bf16.msra.mxu0 0
    %2514 = vmatprep.subr.bf16.mxu0 0
    %2515 = vmatpush1.bf16.msra.mxu0 0
    %2516 = vmatprep.subr.bf16.mxu0 0
    %2517 = vmatpush1.bf16.msra.mxu0 0
    %2518 = vmatprep.subr.bf16.mxu0 0
    %2519 = vmatpush1.bf16.msra.mxu0 0
    %2520 = vmatprep.subr.bf16.mxu0 0
    %2521 = vmatpush1.bf16.msra.mxu0 0
    %2522 = vmatprep.subr.bf16.mxu0 0
    %2523 = vmatpush1.bf16.msra.mxu0 0
    %2524 = vmatprep.subr.bf16.mxu0 0
    %2525 = vmatpush1.bf16.msra.mxu0 0
    %2526 = vmatprep.subr.bf16.mxu0 0
    %2527 = vmatpush1.bf16.msra.mxu0 0
    %2528 = vmatprep.subr.bf16.mxu0 0
    %2529 = vmatpush1.bf16.msra.mxu0 0
    %2530 = vmatprep.subr.bf16.mxu0 0
    %2531 = vmatpush1.bf16.msra.mxu0 0
    %2532 = vmatprep.subr.bf16.mxu0 0
    %2533 = vmatpush1.bf16.msra.mxu0 0
    %2534 = vmatprep.subr.bf16.mxu0 0
    %2535 = vmatpush1.bf16.msra.mxu0 0
    %2536 = vmatprep.mubr.bf16.mxu0 0
    %2537 = vmatmul.mubr.bf16.gmra.mrb[0].mxu0 %v2502
    %v2538 = vpop.f32.mrb[0].mxu0
    %v2539 = vadd.f32 %v2487, %v2538
    %v2540 = vpop.f32.mrb[0].mxu0
    %v2541 = vpop.f32.mrb[0].mxu0
    %v2542 = vpop.f32.mrb[0].mxu0
    %2543 = vdwg.mxu0
    %v2544 = vpack.c.bf16 %v2267, %v2267
    %2546 = vrot.lane.b32.xlu0 %v2544, 96
    %v2547 = vpop.permute.xlu0 %2546
    %v2552 = vunpack.c.l.b16 %v2471
    %v2553 = vunpack.c.l.b16 %v2472
    %v2554 = vunpack.c.l.b16 %v2473
    %v2555 = vunpack.c.l.b16 %v2474
    %v2556 = vpack.c.b16 %v2553, %v2552
    %v2557 = vpack.c.b16 %v2555, %v2554
    %v2561 = vsel %vm171, %v2547, 0
    %2563 = vmatprep.subr.bf16.mxu0 0
    %2564 = vmatpush1.bf16.msra.mxu0 %v2556
    %2565 = vmatprep.subr.bf16.mxu0 0
    %2566 = vmatpush1.bf16.msra.mxu0 %v2557
    %2567 = vmatprep.subr.bf16.mxu0 0
    %2568 = vmatpush1.bf16.msra.mxu0 0
    %2569 = vmatprep.subr.bf16.mxu0 0
    %2570 = vmatpush1.bf16.msra.mxu0 0
    %2571 = vmatprep.subr.bf16.mxu0 0
    %2572 = vmatpush1.bf16.msra.mxu0 0
    %2573 = vmatprep.subr.bf16.mxu0 0
    %2574 = vmatpush1.bf16.msra.mxu0 0
    %2575 = vmatprep.subr.bf16.mxu0 0
    %2576 = vmatpush1.bf16.msra.mxu0 0
    %2577 = vmatprep.subr.bf16.mxu0 0
    %2578 = vmatpush1.bf16.msra.mxu0 0
    %2579 = vmatprep.subr.bf16.mxu0 0
    %2580 = vmatpush1.bf16.msra.mxu0 0
    %2581 = vmatprep.subr.bf16.mxu0 0
    %2582 = vmatpush1.bf16.msra.mxu0 0
    %2583 = vmatprep.subr.bf16.mxu0 0
    %2584 = vmatpush1.bf16.msra.mxu0 0
    %2585 = vmatprep.subr.bf16.mxu0 0
    %2586 = vmatpush1.bf16.msra.mxu0 0
    %2587 = vmatprep.subr.bf16.mxu0 0
    %2588 = vmatpush1.bf16.msra.mxu0 0
    %2589 = vmatprep.subr.bf16.mxu0 0
    %2590 = vmatpush1.bf16.msra.mxu0 0
    %2591 = vmatprep.subr.bf16.mxu0 0
    %2592 = vmatpush1.bf16.msra.mxu0 0
    %2593 = vmatprep.subr.bf16.mxu0 0
    %2594 = vmatpush1.bf16.msra.mxu0 0
    %2595 = vmatprep.mubr.bf16.mxu0 0
    %2596 = vmatmul.mubr.bf16.gmra.mrb[0].mxu0 %v2561
    %v2597 = vpop.f32.mrb[0].mxu0
    %v2598 = vadd.f32 0.0, %v2597
    %v2599 = vpop.f32.mrb[0].mxu0
    %v2600 = vpop.f32.mrb[0].mxu0
    %v2601 = vpop.f32.mrb[0].mxu0
    %2602 = vdwg.mxu0
    %v2603 = vadd.f32 %v2539, %v2598
    %v2604 = vxor.u32 %v2603, 2147483648
    %v2605 = vmul.f32 %v2604, 1.442695
    %v2606 = vpow.pop %v2605
    %v2607 = vadd.f32 %v2606, 1.0
    %v2608 = vrcp.pop %v2607
    %v2609 = vmul.f32 1.0, %v2608
    %v2610 = vmul.f32 %v2609, %v2270
    %v2611 = vpack.c.bf16 %v2610, %v2610
    %v2616 = vunpack.c.l.b16 %v2476
    %v2617 = vunpack.c.l.b16 %v2477
    %v2618 = vunpack.c.l.b16 %v2478
    %v2619 = vunpack.c.l.b16 %v2479
    %v2620 = vpack.c.b16 %v2617, %v2616
    %v2621 = vpack.c.b16 %v2619, %v2618
    %v2625 = vsel %vm171, %v2611, 0
    %2627 = vmatprep.subr.bf16.mxu0 0
    %2628 = vmatpush1.bf16.msra.mxu0 %v2620
    %2629 = vmatprep.subr.bf16.mxu0 0
    %2630 = vmatpush1.bf16.msra.mxu0 %v2621
    %2631 = vmatprep.subr.bf16.mxu0 0
    %2632 = vmatpush1.bf16.msra.mxu0 0
    %2633 = vmatprep.subr.bf16.mxu0 0
    %2634 = vmatpush1.bf16.msra.mxu0 0
    %2635 = vmatprep.subr.bf16.mxu0 0
    %2636 = vmatpush1.bf16.msra.mxu0 0
    %2637 = vmatprep.subr.bf16.mxu0 0
    %2638 = vmatpush1.bf16.msra.mxu0 0
    %2639 = vmatprep.subr.bf16.mxu0 0
    %2640 = vmatpush1.bf16.msra.mxu0 0
    %2641 = vmatprep.subr.bf16.mxu0 0
    %2642 = vmatpush1.bf16.msra.mxu0 0
    %2643 = vmatprep.subr.bf16.mxu0 0
    %2644 = vmatpush1.bf16.msra.mxu0 0
    %2645 = vmatprep.subr.bf16.mxu0 0
    %2646 = vmatpush1.bf16.msra.mxu0 0
    %2647 = vmatprep.subr.bf16.mxu0 0
    %2648 = vmatpush1.bf16.msra.mxu0 0
    %2649 = vmatprep.subr.bf16.mxu0 0
    %2650 = vmatpush1.bf16.msra.mxu0 0
    %2651 = vmatprep.subr.bf16.mxu0 0
    %2652 = vmatpush1.bf16.msra.mxu0 0
    %2653 = vmatprep.subr.bf16.mxu0 0
    %2654 = vmatpush1.bf16.msra.mxu0 0
    %2655 = vmatprep.subr.bf16.mxu0 0
    %2656 = vmatpush1.bf16.msra.mxu0 0
    %2657 = vmatprep.subr.bf16.mxu0 0
    %2658 = vmatpush1.bf16.msra.mxu0 0
    %2659 = vmatprep.mubr.bf16.mxu0 0
    %2660 = vmatmul.mubr.bf16.gmra.mrb[0].mxu0 %v2625
    %v2661 = vpop.f32.mrb[0].mxu0
    %v2662 = vadd.f32 0.0, %v2661
    %v2663 = vpop.f32.mrb[0].mxu0
    %v2664 = vpop.f32.mrb[0].mxu0
    %v2665 = vpop.f32.mrb[0].mxu0
    %2666 = vdwg.mxu0
    %2668 = vrot.lane.b32.xlu0 %v2662, 64
    %v2669 = vpop.permute.xlu0 %2668
    %v2671 = vadd.f32 %v2539, %v2669
    %v2672 = vtanh.pop %v2671
    %v2673 = vsub.f32 1.0, %v2609
    %v2674 = vmul.f32 %v2673, %v2267
    %2676 = vrot.lane.b32.xlu0 %v2672, 96
    %v2677 = vpop.permute.xlu0 %2676
    %v2679 = vmul.f32 %v2609, %v2677
    %v2680 = vadd.f32 %v2674, %v2679
    %2682 = vrot.lane.b32.xlu0 %v2680, 96
    %v2683 = vpop.permute.xlu0 %2682
    %2685 = vst.msk [vmem:[#allocation17] sm:$0xff] %vm171, %v2683
    // Predicated region
    $region90: #{fwd.1} parent=1 // pred_check
      _
    $region91: #{fwd.1} parent=1 // pred_check_branch
      %2687 = sbr.rel (0) target = $region93
    $region92: #{fwd.1} parent=1 // pred_region
      %s2689 = ssub.s32 128, 128
      %2690 = vsyncadd [#allocation4], %s2689
      %s2692 = sshll.u32 [#allocation17], 4
      %s2693 = int_to_ptr.vmem [resolvable:$true] %s2692
      %2695 = dma.vmem_to_hbm [thread:$0]  %s2693, 128, %s13, [#allocation4]
    $region93: #{fwd.1} parent=1 // pred_fallthru
      _
    // Predicated region
    $region94: #{fwd.1} parent=1 // pred_check
      _
    $region95: #{fwd.1} parent=1 // pred_check_branch
      %2697 = sbr.rel (0) target = $region97
    $region96: #{fwd.1} parent=1 // pred_region
      %s2699 = ssub.s32 256, 256
      %2700 = vsyncadd [#allocation19], %s2699
      %s2701 = sshll.u32 [#allocation18], 4
      %s2702 = int_to_ptr.vmem [resolvable:$true] %s2701
      %2707 = dma.vmem_to_hbm [thread:$0]  %s2702, 256, %s14, [#allocation19], 128, 128, 8
    $region97: #{fwd.1} parent=1 // pred_fallthru
      _
    // Predicated region
    $region98: #{fwd.1} parent=1 // pred_check
      _
    $region99: #{fwd.1} parent=1 // pred_check_branch
      %2709 = sbr.rel (0) target = $region101
    $region100: #{fwd.1} parent=1 // pred_region
      %2710 = dma.done [#allocation4], 128
    $region101: #{fwd.1} parent=1 // pred_fallthru
      _
    // Predicated region
    $region102: #{fwd.1} parent=1 // pred_check
      _
    $region103: #{fwd.1} parent=1 // pred_check_branch
      %2712 = sbr.rel (0) target = $region105
    $region104: #{fwd.1} parent=1 // pred_region
      %2713 = dma.done [#allocation19], 256
    $region105: #{fwd.1} parent=1 // pred_fallthru
      _
    %2714 = vsyncpa [#allocation3], 1
    %2715 = vsyncpa [#allocation6], 1
    %2716 = vsyncpa [#allocation9], 1
    %2717 = vsyncpa [#allocation12], 1
    %2718 = vsyncpa [#allocation15], 1
    %2719 = vsyncpa [#allocation4], 1
    %2720 = vsyncpa [#allocation19], 1

</llo_original>
